<compile_context>
chip_gen: v7x
topology: tpu7x:2x2x1
jax: 0.10.0
libtpu: 0.0.40
codegen_flags: <defaults>
</compile_context>

<pallas_src>
import functools

import jax
import jax.numpy as jnp
from jax.experimental import pallas as pl
from jax.experimental.pallas import tpu as pltpu

FEAT_OUT = 1536                    # inception_v4 feat_outsize
CLASSIFIER_SIZES = (256, 128, 10)  # args.classifier
BN_EPS = 1e-5
LANE = 128


# ----------------------------------------------------------------------------
# Wrapper-side glue
# ----------------------------------------------------------------------------
def _im2col(x_nchw):
    """3x3 / stride 1 / pad 1 patches, [B, P, K] with K index = c*9 + (dy*3+dx)."""
    B, C, H, W = x_nchw.shape
    xp = jnp.pad(x_nchw, ((0, 0), (0, 0), (1, 1), (1, 1)))
    cols = [xp[:, :, dy:dy + H, dx:dx + W] for dy in range(3) for dx in range(3)]
    patches = jnp.stack(cols, axis=2)                          # (B, C, 9, H, W)
    return patches.transpose(0, 3, 4, 1, 2).reshape(B, H * W, C * 9)


def _generation_budget():
    """(vmem_limit_bytes, max bt*ptile rows per grid step) per TPU generation."""
    try:
        kind = jax.devices()[0].device_kind.lower()
    except Exception:
        kind = ""
    if "v7" in kind:                       # 64 MiB VMEM / TensorCore: stay tight
        return 48 * 1024 * 1024, 2048
    if "v5" in kind or "v6" in kind:       # 128 MiB VMEM: bigger tiles, looser limit
        return 100 * 1024 * 1024, 4096
    return 48 * 1024 * 1024, 2048          # unknown -> v7x-safe defaults


def _pick_bt(B, cap=8):
    """Images per grid step; keep the parallel batch axis >= 2 when possible."""
    cap = min(cap, max(1, B // 2))
    for c in range(min(B, cap), 0, -1):
        if B % c == 0:
            return c
    return 1


def _pick_p_tile(P, row_cap, bt):
    """P-tile: multiple of 8, bounded by row_cap//bt and by round_up(P, 8)."""
    budget = max(8, (row_cap // bt) // 8 * 8)
    return min(budget, pl.cdiv(P, 8) * 8)


# ----------------------------------------------------------------------------
# Fused kernel: stem conv (im2col matmul) + bf16 ReLU + MXU pooling reduce over
# the P (spatial) grid axis, then the classifier head in the finalize step.
# ----------------------------------------------------------------------------
def _fused_kernel(patch_ref, ones_ref, w_ref, w1_ref, s1_ref, b1_ref,
                  w2_ref, s2_ref, b2_ref, w3_ref, o_ref, acc_ref,
                  *, bt, ptile, inv_p):
    pidx = pl.program_id(1)

    @pl.when(pidx == 0)
    def _init():
        acc_ref[...] = jnp.zeros_like(acc_ref)

    # Stem conv for all bt images at once: one bf16 MXU matmul, f32 accumulate.
    lhs = patch_ref[...].reshape(bt * ptile, -1)                       # (bt*Pt, K) bf16
    h = jnp.dot(lhs, w_ref[...], preferred_element_type=jnp.float32)   # (bt*Pt, F) f32
    hb = jnp.maximum(h.astype(jnp.bfloat16), 0)                        # ReLU in bf16
    # Global-average-pool partial sums on the (otherwise idle) MXU via a
    # block-diagonal ones matmul -> (bt, F); one full-block accumulator store.
    acc_ref[...] += jnp.dot(ones_ref[...], hb, preferred_element_type=jnp.float32)

    @pl.when(pidx == pl.num_programs(1) - 1)
    def _finalize():
        feats = acc_ref[...] * inv_p                                   # global avg pool
        # feat_dropout: eval-mode identity.
        h1 = jnp.dot(feats.astype(jnp.bfloat16), w1_ref[...],
                     preferred_element_type=jnp.float32)
        h1 = jnp.maximum(h1 * s1_ref[...] + b1_ref[...], 0.0)          # BN + ReLU (dropout=id)
        h2 = jnp.dot(h1.astype(jnp.bfloat16), w2_ref[...],
                     preferred_element_type=jnp.float32)
        h2 = jnp.maximum(h2 * s2_ref[...] + b2_ref[...], 0.0)          # BN + ReLU (dropout=id)
        o_ref[:, 0, :] = jnp.dot(h2.astype(jnp.bfloat16), w3_ref[...],
                                 preferred_element_type=jnp.float32)


def classifier_net_forward(x_nchw, conv_w, cls_params, *, max_rows_per_step=None):
    B, C, H, W = x_nchw.shape
    F = conv_w.shape[0]
    P, K = H * W, C * 9
    w1, s1, b1, w2, s2, b2, w3 = cls_params
    H1, H2, NC = w1.shape[1], w2.shape[1], w3.shape[1]
    NC_PAD = LANE * pl.cdiv(NC, LANE)                          # lane-dense output store

    vmem_limit, row_cap = _generation_budget()
    if max_rows_per_step is not None:
        row_cap = max_rows_per_step
    bt = _pick_bt(B)
    ptile = _pick_p_tile(P, row_cap, bt)
    p_pad = ptile * pl.cdiv(P, ptile)

    # bf16 operands for every MXU matmul (f32 accumulation inside the kernel).
    patches = _im2col(x_nchw).astype(jnp.bfloat16)             # (B, P, K)
    if p_pad != P:
        # Zero patch rows contribute 0 after ReLU; inv_p stays 1/true-P.
        patches = jnp.pad(patches, ((0, 0), (0, p_pad - P), (0, 0)))
    w_flat = conv_w.reshape(F, K).T.astype(jnp.bfloat16)       # (K, F)
    w1b = w1.astype(jnp.bfloat16)
    w2b = w2.astype(jnp.bfloat16)
    w3p = jnp.zeros((H2, NC_PAD), jnp.bfloat16).at[:, :NC].set(w3.astype(jnp.bfloat16))
    # Block-diagonal ones (bt, bt*ptile): pooled[b] = sum over image b's rows.
    ones_bd = jnp.kron(jnp.eye(bt, dtype=jnp.bfloat16),
                       jnp.ones((1, ptile), jnp.bfloat16))

    grid = (B // bt, p_pad // ptile)

    def full(shape):
        return pl.BlockSpec(shape, lambda i, j: (0,) * len(shape))
    # TODO(synk): pipeline_mode=pl.Buffered(1) on the constant head weights would
    #             reclaim ~1 MB of double-buffer VMEM on v7x.

    out = pl.pallas_call(
        functools.partial(_fused_kernel, bt=bt, ptile=ptile, inv_p=1.0 / float(P)),
        out_shape=jax.ShapeDtypeStruct((B, 1, NC_PAD), jnp.float32),
        grid=grid,
        in_specs=[
            pl.BlockSpec((bt, ptile, K), lambda i, j: (i, j, 0)),   # patch tiles
            full((bt, bt * ptile)),                                 # block-diag ones (pool)
            full((K, F)),                                           # stem conv weight
            full((F, H1)), full((1, H1)), full((1, H1)),            # w1, bn1 scale/shift
            full((H1, H2)), full((1, H2)), full((1, H2)),           # w2, bn2 scale/shift
            full((H2, NC_PAD)),                                     # w3 (padded to 128 cols)
        ],
        out_specs=pl.BlockSpec((bt, 1, NC_PAD), lambda i, j: (i, 0, 0)),
        scratch_shapes=[pltpu.VMEM((bt, F), jnp.float32)],          # pooled-feature accumulator
        compiler_params=pltpu.CompilerParams(
            dimension_semantics=("parallel", "arbitrary"),
            vmem_limit_bytes=vmem_limit),
    )(patches, ones_bd, w_flat, w1b, s1, b1, w2b, s2, b2, w3p)

    return out[:, 0, :NC]


# ----------------------------------------------------------------------------
# Parameter construction (deterministic, synthetic)
# ----------------------------------------------------------------------------
def make_params(key, in_ch=3):
    ks = jax.random.split(key, 12)
    sizes = [FEAT_OUT] + list(CLASSIFIER_SIZES)
    conv_w = 0.05 * jax.random.normal(ks[0], (FEAT_OUT, in_ch, 3, 3), jnp.float32)

    def fold_bn(kg, kb, km, kv, c):
        gamma = 1.0 + 0.1 * jax.random.normal(kg, (c,), jnp.float32)
        beta = 0.1 * jax.random.normal(kb, (c,), jnp.float32)
        rmean = 0.1 * jax.random.normal(km, (c,), jnp.float32)
        rvar = 0.5 + jnp.abs(jax.random.normal(kv, (c,), jnp.float32))
        scale = gamma * jax.lax.rsqrt(rvar + BN_EPS)
        shift = beta - rmean * scale
        return scale.reshape(1, c), shift.reshape(1, c)

    w1 = 0.05 * jax.random.normal(ks[1], (sizes[0], sizes[1]), jnp.float32)
    s1, b1 = fold_bn(ks[2], ks[3], ks[4], ks[5], sizes[1])
    w2 = 0.05 * jax.random.normal(ks[6], (sizes[1], sizes[2]), jnp.float32)
    s2, b2 = fold_bn(ks[7], ks[8], ks[9], ks[10], sizes[2])
    w3 = 0.05 * jax.random.normal(ks[11], (sizes[2], sizes[3]), jnp.float32)
    return conv_w, (w1, s1, b1, w2, s2, b2, w3)


# ----------------------------------------------------------------------------
# Pure-JAX reference (bf16 matmuls / f32 accumulate, f32 elementwise)
# ----------------------------------------------------------------------------
def _reference(x_nchw, conv_w, cls_params):
    B, C, H, W = x_nchw.shape
    F = conv_w.shape[0]
    patches = _im2col(x_nchw).astype(jnp.bfloat16)             # (B, P, K)
    w_flat = conv_w.reshape(F, C * 9).T.astype(jnp.bfloat16)   # (K, F)
    h = jax.lax.dot_general(patches, w_flat, (((2,), (0,)), ((), ())),
                            preferred_element_type=jnp.float32)  # (B, P, F)
    h = jnp.maximum(h, 0.0)
    feats = jnp.mean(h, axis=1)                                # (B, F)
    w1, s1, b1, w2, s2, b2, w3 = cls_params
    g = jnp.dot(feats.astype(jnp.bfloat16), w1.astype(jnp.bfloat16),
                preferred_element_type=jnp.float32)
    g = jnp.maximum(g * s1 + b1, 0.0)
    g = jnp.dot(g.astype(jnp.bfloat16), w2.astype(jnp.bfloat16),
                preferred_element_type=jnp.float32)
    g = jnp.maximum(g * s2 + b2, 0.0)
    return jnp.dot(g.astype(jnp.bfloat16), w3.astype(jnp.bfloat16),
                   preferred_element_type=jnp.float32)


if __name__ == "__main__":
    key = jax.random.PRNGKey(0)
    kx, kp = jax.random.split(key)
    B, C, H, W = 2, 3, 16, 16
    x = jax.random.normal(kx, (B, C, H, W), jnp.float32)
    conv_w, cls_params = make_params(kp, in_ch=C)

    ref = _reference(x, conv_w, cls_params)

    # Production path: auto (generation-aware) tiling.
    out = jax.block_until_ready(classifier_net_forward(x, conv_w, cls_params))
    assert out.shape == (B, CLASSIFIER_SIZES[-1]), out.shape
    assert jnp.allclose(out, ref, atol=2e-2, rtol=2e-2), "mismatch vs reference (auto tiling)"

    # Forced small P tile: exercises multi-step accumulation + zero-padded P rows.
    out2 = jax.block_until_ready(
        classifier_net_forward(x, conv_w, cls_params, max_rows_per_step=48))
    assert jnp.allclose(out2, ref, atol=2e-2, rtol=2e-2), "mismatch vs reference (tiled)"

    print("KERNEL_OK")
</pallas_src>

<mosaic_0001>
module attributes {stable_mosaic.version = 11 : i64} {
  func.func @_fused_kernel(%arg0: i32, %arg1: i32, %arg2: memref<1x256x27xbf16, #tpu.memory_space<vmem>>, %arg3: memref<1x256xbf16, #tpu.memory_space<vmem>>, %arg4: memref<27x1536xbf16, #tpu.memory_space<vmem>>, %arg5: memref<1536x256xbf16, #tpu.memory_space<vmem>>, %arg6: memref<1x256xf32, #tpu.memory_space<vmem>>, %arg7: memref<1x256xf32, #tpu.memory_space<vmem>>, %arg8: memref<256x128xbf16, #tpu.memory_space<vmem>>, %arg9: memref<1x128xf32, #tpu.memory_space<vmem>>, %arg10: memref<1x128xf32, #tpu.memory_space<vmem>>, %arg11: memref<128x128xbf16, #tpu.memory_space<vmem>>, %arg12: memref<1x1x128xf32, #tpu.memory_space<vmem>>, %arg13: memref<1x1536xf32, #tpu.memory_space<vmem>>) attributes {dimension_semantics = [#tpu.dimension_semantics<parallel>, #tpu.dimension_semantics<arbitrary>], iteration_bounds = array<i64: 2, 1>, scalar_prefetch = 0 : i64, scratch_operands = 1 : i64, tpu.core_type = #tpu.core_type<tc>, window_params = [{transform_indices = @transform_0, window_bounds = array<i64: 1, 256, 27>}, {pipeline_mode = #tpu.pipeline_mode<synchronous>, transform_indices = @transform_1, window_bounds = array<i64: 1, 256>}, {pipeline_mode = #tpu.pipeline_mode<synchronous>, transform_indices = @transform_2, window_bounds = array<i64: 27, 1536>}, {pipeline_mode = #tpu.pipeline_mode<synchronous>, transform_indices = @transform_3, window_bounds = array<i64: 1536, 256>}, {pipeline_mode = #tpu.pipeline_mode<synchronous>, transform_indices = @transform_4, window_bounds = array<i64: 1, 256>}, {pipeline_mode = #tpu.pipeline_mode<synchronous>, transform_indices = @transform_5, window_bounds = array<i64: 1, 256>}, {pipeline_mode = #tpu.pipeline_mode<synchronous>, transform_indices = @transform_6, window_bounds = array<i64: 256, 128>}, {pipeline_mode = #tpu.pipeline_mode<synchronous>, transform_indices = @transform_7, window_bounds = array<i64: 1, 128>}, {pipeline_mode = #tpu.pipeline_mode<synchronous>, transform_indices = @transform_8, window_bounds = array<i64: 1, 128>}, {pipeline_mode = #tpu.pipeline_mode<synchronous>, transform_indices = @transform_9, window_bounds = array<i64: 128, 128>}, {transform_indices = @transform_10, window_bounds = array<i64: 1, 1, 128>}]} {
    %c0_i32 = arith.constant 0 : i32
    %0 = arith.cmpi eq, %arg1, %c0_i32 : i32
    %1 = arith.extui %0 : i1 to i32
    %c0_i32_0 = arith.constant 0 : i32
    %2 = arith.cmpi ne, %1, %c0_i32_0 : i32
    scf.if %2 {
      %cst_15 = arith.constant 0.000000e+00 : f32
      %18 = vector.broadcast %cst_15 : f32 to vector<1x1536xf32>
      %c0_16 = arith.constant 0 : index
      %c0_17 = arith.constant 0 : index
      %19 = vector.load %arg13[%c0_16, %c0_17] : memref<1x1536xf32, #tpu.memory_space<vmem>>, vector<1x1536xf32>
      tpu.vector_store %arg13[%c0_16, %c0_17], %18 {strides = array<i32>} : memref<1x1536xf32, #tpu.memory_space<vmem>>, vector<1x1536xf32>,
    } else {
    }
    %c0 = arith.constant 0 : index
    %c0_1 = arith.constant 0 : index
    %c0_2 = arith.constant 0 : index
    %3 = vector.load %arg2[%c0, %c0_1, %c0_2] : memref<1x256x27xbf16, #tpu.memory_space<vmem>>, vector<1x256x27xbf16>
    %4 = vector.shape_cast %3 : vector<1x256x27xbf16> to vector<256x27xbf16>
    %c0_3 = arith.constant 0 : index
    %c0_4 = arith.constant 0 : index
    %5 = vector.load %arg4[%c0_3, %c0_4] : memref<27x1536xbf16, #tpu.memory_space<vmem>>, vector<27x1536xbf16>
    %cst = arith.constant dense<0.000000e+00> : vector<256x1536xf32>
    %6 = tpu.matmul %4, %5, %cst {dimension_numbers = #tpu.dot_dimension_numbers<[1], [0], [0], [1], [0, 0, 1, 1], [], []>} : vector<256x27xbf16>, vector<27x1536xbf16>, vector<256x1536xf32> -> vector<256x1536xf32>
    %7 = arith.truncf %6 : vector<256x1536xf32> to vector<256x1536xbf16>
    %cst_5 = arith.constant 0.000000e+00 : bf16
    %8 = vector.broadcast %cst_5 : bf16 to vector<256x1536xbf16>
    %9 = arith.maximumf %7, %8 : vector<256x1536xbf16>
    %c0_6 = arith.constant 0 : index
    %c0_7 = arith.constant 0 : index
    %10 = vector.load %arg13[%c0_6, %c0_7] : memref<1x1536xf32, #tpu.memory_space<vmem>>, vector<1x1536xf32>
    %c0_8 = arith.constant 0 : index
    %c0_9 = arith.constant 0 : index
    %11 = vector.load %arg3[%c0_8, %c0_9] : memref<1x256xbf16, #tpu.memory_space<vmem>>, vector<1x256xbf16>
    %cst_10 = arith.constant dense<0.000000e+00> : vector<1x1536xf32>
    %12 = tpu.matmul %11, %9, %cst_10 {dimension_numbers = #tpu.dot_dimension_numbers<[1], [0], [0], [1], [0, 0, 1, 1], [], []>} : vector<1x256xbf16>, vector<256x1536xbf16>, vector<1x1536xf32> -> vector<1x1536xf32>
    %13 = arith.addf %10, %12 : vector<1x1536xf32>
    %c0_11 = arith.constant 0 : index
    %c0_12 = arith.constant 0 : index
    %14 = vector.load %arg13[%c0_11, %c0_12] : memref<1x1536xf32, #tpu.memory_space<vmem>>, vector<1x1536xf32>
    tpu.vector_store %arg13[%c0_11, %c0_12], %13 {strides = array<i32>} : memref<1x1536xf32, #tpu.memory_space<vmem>>, vector<1x1536xf32>,
    %c0_i32_13 = arith.constant 0 : i32
    %15 = arith.cmpi eq, %arg1, %c0_i32_13 : i32
    %16 = arith.extui %15 : i1 to i32
    %c0_i32_14 = arith.constant 0 : i32
    %17 = arith.cmpi ne, %16, %c0_i32_14 : i32
    scf.if %17 {
      %c0_15 = arith.constant 0 : index
      %c0_16 = arith.constant 0 : index
      %18 = vector.load %arg13[%c0_15, %c0_16] : memref<1x1536xf32, #tpu.memory_space<vmem>>, vector<1x1536xf32>
      %cst_17 = arith.constant 3.906250e-03 : f32
      %19 = vector.broadcast %cst_17 : f32 to vector<1x1536xf32>
      %20 = arith.mulf %18, %19 : vector<1x1536xf32>
      %21 = arith.truncf %20 : vector<1x1536xf32> to vector<1x1536xbf16>
      %c0_18 = arith.constant 0 : index
      %c0_19 = arith.constant 0 : index
      %22 = vector.load %arg5[%c0_18, %c0_19] : memref<1536x256xbf16, #tpu.memory_space<vmem>>, vector<1536x256xbf16>
      %cst_20 = arith.constant dense<0.000000e+00> : vector<1x256xf32>
      %23 = tpu.matmul %21, %22, %cst_20 {dimension_numbers = #tpu.dot_dimension_numbers<[1], [0], [0], [1], [0, 0, 1, 1], [], []>} : vector<1x1536xbf16>, vector<1536x256xbf16>, vector<1x256xf32> -> vector<1x256xf32>
      %c0_21 = arith.constant 0 : index
      %c0_22 = arith.constant 0 : index
      %24 = vector.load %arg6[%c0_21, %c0_22] : memref<1x256xf32, #tpu.memory_space<vmem>>, vector<1x256xf32>
      %25 = arith.mulf %23, %24 : vector<1x256xf32>
      %c0_23 = arith.constant 0 : index
      %c0_24 = arith.constant 0 : index
      %26 = vector.load %arg7[%c0_23, %c0_24] : memref<1x256xf32, #tpu.memory_space<vmem>>, vector<1x256xf32>
      %27 = arith.addf %25, %26 : vector<1x256xf32>
      %cst_25 = arith.constant 0.000000e+00 : f32
      %28 = vector.broadcast %cst_25 : f32 to vector<1x256xf32>
      %29 = arith.maximumf %27, %28 : vector<1x256xf32>
      %30 = arith.truncf %29 : vector<1x256xf32> to vector<1x256xbf16>
      %c0_26 = arith.constant 0 : index
      %c0_27 = arith.constant 0 : index
      %31 = vector.load %arg8[%c0_26, %c0_27] : memref<256x128xbf16, #tpu.memory_space<vmem>>, vector<256x128xbf16>
      %cst_28 = arith.constant dense<0.000000e+00> : vector<1x128xf32>
      %32 = tpu.matmul %30, %31, %cst_28 {dimension_numbers = #tpu.dot_dimension_numbers<[1], [0], [0], [1], [0, 0, 1, 1], [], []>} : vector<1x256xbf16>, vector<256x128xbf16>, vector<1x128xf32> -> vector<1x128xf32>
      %c0_29 = arith.constant 0 : index
      %c0_30 = arith.constant 0 : index
      %33 = vector.load %arg9[%c0_29, %c0_30] : memref<1x128xf32, #tpu.memory_space<vmem>>, vector<1x128xf32>
      %34 = arith.mulf %32, %33 : vector<1x128xf32>
      %c0_31 = arith.constant 0 : index
      %c0_32 = arith.constant 0 : index
      %35 = vector.load %arg10[%c0_31, %c0_32] : memref<1x128xf32, #tpu.memory_space<vmem>>, vector<1x128xf32>
      %36 = arith.addf %34, %35 : vector<1x128xf32>
      %cst_33 = arith.constant 0.000000e+00 : f32
      %37 = vector.broadcast %cst_33 : f32 to vector<1x128xf32>
      %38 = arith.maximumf %36, %37 : vector<1x128xf32>
      %39 = arith.truncf %38 : vector<1x128xf32> to vector<1x128xbf16>
      %c0_34 = arith.constant 0 : index
      %c0_35 = arith.constant 0 : index
      %40 = vector.load %arg11[%c0_34, %c0_35] : memref<128x128xbf16, #tpu.memory_space<vmem>>, vector<128x128xbf16>
      %cst_36 = arith.constant dense<0.000000e+00> : vector<1x128xf32>
      %41 = tpu.matmul %39, %40, %cst_36 {dimension_numbers = #tpu.dot_dimension_numbers<[1], [0], [0], [1], [0, 0, 1, 1], [], []>} : vector<1x128xbf16>, vector<128x128xbf16>, vector<1x128xf32> -> vector<1x128xf32>
      %c0_37 = arith.constant 0 : index
      %c0_38 = arith.constant 0 : index
      %c0_39 = arith.constant 0 : index
      %42 = vector.load %arg12[%c0_37, %c0_38, %c0_39] : memref<1x1x128xf32, #tpu.memory_space<vmem>>, vector<1x1x128xf32>
      %43 = vector.shape_cast %42 : vector<1x1x128xf32> to vector<1x128xf32>
      %44 = vector.shape_cast %41 : vector<1x128xf32> to vector<1x1x128xf32>
      tpu.vector_store %arg12[%c0_37, %c0_38, %c0_39], %44 {strides = array<i32>} : memref<1x1x128xf32, #tpu.memory_space<vmem>>, vector<1x1x128xf32>,
    } else {
    }
    return
  }
  func.func @transform_0(%arg0: i32, %arg1: i32) -> (i32, i32, i32) {
    %c0_i32 = arith.constant 0 : i32
    %c0_i32_0 = arith.constant 0 : i32
    return %arg0, %arg1, %c0_i32 : i32, i32, i32
  }
  func.func @transform_1(%arg0: i32, %arg1: i32) -> (i32, i32) {
    %c0_i32 = arith.constant 0 : i32
    %c0_i32_0 = arith.constant 0 : i32
    %c0_i32_1 = arith.constant 0 : i32
    return %c0_i32, %c0_i32_0 : i32, i32
  }
  func.func @transform_2(%arg0: i32, %arg1: i32) -> (i32, i32) {
    %c0_i32 = arith.constant 0 : i32
    %c0_i32_0 = arith.constant 0 : i32
    %c0_i32_1 = arith.constant 0 : i32
    return %c0_i32, %c0_i32_0 : i32, i32
  }
  func.func @transform_3(%arg0: i32, %arg1: i32) -> (i32, i32) {
    %c0_i32 = arith.constant 0 : i32
    %c0_i32_0 = arith.constant 0 : i32
    %c0_i32_1 = arith.constant 0 : i32
    return %c0_i32, %c0_i32_0 : i32, i32
  }
  func.func @transform_4(%arg0: i32, %arg1: i32) -> (i32, i32) {
    %c0_i32 = arith.constant 0 : i32
    %c0_i32_0 = arith.constant 0 : i32
    %c0_i32_1 = arith.constant 0 : i32
    return %c0_i32, %c0_i32_0 : i32, i32
  }
  func.func @transform_5(%arg0: i32, %arg1: i32) -> (i32, i32) {
    %c0_i32 = arith.constant 0 : i32
    %c0_i32_0 = arith.constant 0 : i32
    %c0_i32_1 = arith.constant 0 : i32
    return %c0_i32, %c0_i32_0 : i32, i32
  }
  func.func @transform_6(%arg0: i32, %arg1: i32) -> (i32, i32) {
    %c0_i32 = arith.constant 0 : i32
    %c0_i32_0 = arith.constant 0 : i32
    %c0_i32_1 = arith.constant 0 : i32
    return %c0_i32, %c0_i32_0 : i32, i32
  }
  func.func @transform_7(%arg0: i32, %arg1: i32) -> (i32, i32) {
    %c0_i32 = arith.constant 0 : i32
    %c0_i32_0 = arith.constant 0 : i32
    %c0_i32_1 = arith.constant 0 : i32
    return %c0_i32, %c0_i32_0 : i32, i32
  }
  func.func @transform_8(%arg0: i32, %arg1: i32) -> (i32, i32) {
    %c0_i32 = arith.constant 0 : i32
    %c0_i32_0 = arith.constant 0 : i32
    %c0_i32_1 = arith.constant 0 : i32
    return %c0_i32, %c0_i32_0 : i32, i32
  }
  func.func @transform_9(%arg0: i32, %arg1: i32) -> (i32, i32) {
    %c0_i32 = arith.constant 0 : i32
    %c0_i32_0 = arith.constant 0 : i32
    %c0_i32_1 = arith.constant 0 : i32
    return %c0_i32, %c0_i32_0 : i32, i32
  }
  func.func @transform_10(%arg0: i32, %arg1: i32) -> (i32, i32, i32) {
    %c0_i32 = arith.constant 0 : i32
    %c0_i32_0 = arith.constant 0 : i32
    %c0_i32_1 = arith.constant 0 : i32
    return %arg0, %c0_i32, %c0_i32_0 : i32, i32, i32
  }
}

</mosaic_0001>

<llo_original>
// kernel: tpu_custom_call.1
$region0: #{tpu_custom_call.1}
  #allocation0 [shape = 'u32[]', space=smem, size = 0x4, offset = 0x4, fixed_abs, tag = 'smem constant byte address 0x4 - core index']
  #allocation1 [shape = 'u32[144,128]{1,0:T(1,128)}', space=vmem, size = 0x12000, scoped, tag = 'internal scratch']
  #allocation2 [shape = 'f32[1,1536]{1,0:T(1,128)}', space=vmem, size = 0x1800, scoped, tag = 'scratch operand']
  %s0 = inlined_call_operand.vmem [shape: bf16[2,256,27], index: 0, kind: input, shape index: {}]
  %s1 = inlined_call_operand.hbm [shape: bf16[1,256], index: 1, kind: input, shape index: {}]
  %s2 = inlined_call_operand.vmem [shape: bf16[27,1536], index: 2, kind: input, shape index: {}]
  %s3 = inlined_call_operand.hbm [shape: bf16[1536,256], index: 3, kind: input, shape index: {}]
  %s4 = inlined_call_operand.vmem [shape: f32[1,256], index: 4, kind: input, shape index: {}]
  %s5 = inlined_call_operand.vmem [shape: f32[1,256], index: 5, kind: input, shape index: {}]
  %s6 = inlined_call_operand.vmem [shape: bf16[256,128], index: 6, kind: input, shape index: {}]
  %s7 = inlined_call_operand.vmem [shape: f32[1,128], index: 7, kind: input, shape index: {}]
  %s8 = inlined_call_operand.vmem [shape: f32[1,128], index: 8, kind: input, shape index: {}]
  %s9 = inlined_call_operand.hbm [shape: bf16[128,128], index: 9, kind: input, shape index: {}]
  %s10 = inlined_call_operand.hbm [shape: f32[2,1,128], index: 10, kind: output, shape index: {}]
  %s11 = sld [smem:[#allocation0]]
  $region93: #{tpu_custom_call.1} parent=0
    _
  %s13 = ssub.s32 1, %s11
  %s14 = scalar_select 0, %s13, %s11
  $region1: #{tpu_custom_call.1} parent=0
    #allocation3 [shape = 'u8[1024]{0}', space=vmem, size = 0x400, scoped, tag = 'input window, operand 1, single buffered']
    #allocation4 [shape = 's32[2]{0}', space=sflag, size = 0x8, scoped, tag = 'scoped memory for tpu_custom_call.1']
    #allocation5 [shape = 's32[2]{0}', space=sflag, size = 0x8, scoped, tag = 'scoped memory for tpu_custom_call.1']
    #allocation6 [shape = 'u8[786432]{0}', space=vmem, size = 0xc0000, scoped, tag = 'input window, operand 3, single buffered']
    #allocation7 [shape = 's32[1]{0}', space=sflag, size = 0x4, scoped, tag = 'scoped memory for tpu_custom_call.1']
    #allocation8 [shape = 'u8[32768]{0}', space=vmem, size = 0x8000, scoped, tag = 'input window, operand 9, single buffered']
    #allocation9 [shape = 'u8[1024]{0}', space=vmem, size = 0x400, scoped, tag = 'output window, operand 0']
    %15 = vsyncpa [#allocation4], 0
    %16 = vsyncpa [#allocation7], 0
    %17 = vsyncpa [#allocation5], 0
    %s18 = scalar_lea.sflag [#allocation5], 1
    %19 = vsyncpa %s18, 0
    loop: start=0, step=1, limit=4
    $region2: #{tpu_custom_call.1} parent=1 // loop_pre_header
      _
    $region3: #{tpu_custom_call.1} parent=1 // loop_header
      %s21 = sphi 0, %s25
      %p22 = scmp.ge.s32.totalorder %s21, 4
      %s28 = sphi 0, %s40
      %s29 = sphi 0, %s36
      %s30 = sphi 0, %s28
      %s31 = sphi 0, %s29
      %s32 = sphi 0, %s30
      %s33 = sphi 0, %s31
      %s45 = sphi 0, %s47
      %s48 = sphi 0, %s45
      %s49 = sphi 0, %s48
      %s65 = sphi 0, %s49
      %s69 = sphi 0, %s69
      %s71 = sphi 0, %s69
      %s72 = sphi 0, %s71
      %s86 = sphi 0, %s72
      %s90 = sphi 0, %s90
      %s92 = sphi 0, %s90
      %s93 = sphi 0, %s92
      %s107 = sphi 0, %s93
      %s111 = sphi 0, %s111
      %s113 = sphi 0, %s111
      %s114 = sphi 0, %s113
      %s128 = sphi 0, %s114
      %s132 = sphi 0, %s132
      %s134 = sphi 0, %s132
      %s135 = sphi 0, %s134
      %s149 = sphi 0, %s135
      %s153 = sphi 0, %s153
      %s155 = sphi 0, %s153
      %s156 = sphi 0, %s155
      %s170 = sphi 0, %s156
      %s174 = sphi 0, %s174
      %s176 = sphi 0, %s174
      %s177 = sphi 0, %s176
      %s191 = sphi 0, %s177
      %s195 = sphi 0, %s195
      %s197 = sphi 0, %s195
      %s198 = sphi 0, %s197
      %s212 = sphi 0, %s198
      %s216 = sphi 0, %s216
      %s218 = sphi 0, %s216
      %s219 = sphi 0, %s218
      %s233 = sphi 0, %s219
      %s237 = sphi 0, %s237
      %s239 = sphi 0, %s237
      %s240 = sphi 0, %s239
      %s254 = sphi 0, %s240
      %s260 = sphi 0, %s262
      %s263 = sphi 0, %s260
      %s264 = sphi 0, %s263
      %s280 = sphi 0, %s264
    $region4: #{tpu_custom_call.1} parent=1 // loop_header_branch
      %24 = sbr.rel (%p22) target = $region8
    $region5: #{tpu_custom_call.1} parent=1 // loop_body
      %s26 = ssub.s32 %s21, 1
      %s27 = ssub.s32 %s21, 2
      %s34 = sadd.s32 1, %s29
      %p35 = scmp.ge.s32.totalorder %s34, 1
      %s36 = scalar_select %p35, 0, %s34
      %s37 = sadd.s32 1, %s28
      %s38 = scalar_select %p35, %s37, %s28
      %p39 = scmp.ge.s32.totalorder %s38, 2
      %s40 = scalar_select %p39, 0, %s38
      %s41 = ssub.s32 %s28, %s40
      %s42 = ssub.s32 %s29, %s36
      %s43 = sor.u32 %s41, %s42
      %p44 = scmp.eq.s32.totalorder %s43, 0
      %s46 = sadd.s32 %s45, 1
      %s47 = scalar_select %p44, %s45, %s46
      %p50 = pneg %p44
      %p51 = scmp.eq.s32.totalorder %s21, 1
      %p52 = por %p50, %p51
      %p53 = scmp.ne.s32.totalorder %s45, %s48
      %p54 = scmp.eq.s32.totalorder %s21, 0
      %p55 = por %p53, %p54
      %p56 = scmp.ne.s32.totalorder %s45, %s48
      %p57 = scmp.eq.s32.totalorder %s26, 1
      %p58 = por %p56, %p57
      %p59 = scmp.ne.s32.totalorder %s48, %s49
      %p60 = scmp.eq.s32.totalorder %s26, 0
      %p61 = por %p59, %p60
      %p62 = scmp.ne.s32.totalorder %s48, %s49
      %p63 = scmp.eq.s32.totalorder %s27, 1
      %p64 = por %p62, %p63
      %p66 = scmp.ne.s32.totalorder %s49, %s65
      %p67 = scmp.eq.s32.totalorder %s27, 0
      %p68 = por %p66, %p67
      %s70 = sadd.s32 %s69, 1
      %p73 = scmp.eq.s32.totalorder %s21, 1
      %p74 = scmp.ne.s32.totalorder %s69, %s71
      %p75 = scmp.eq.s32.totalorder %s21, 0
      %p76 = por %p74, %p75
      %p77 = scmp.ne.s32.totalorder %s69, %s71
      %p78 = scmp.eq.s32.totalorder %s26, 1
      %p79 = por %p77, %p78
      %p80 = scmp.ne.s32.totalorder %s71, %s72
      %p81 = scmp.eq.s32.totalorder %s26, 0
      %p82 = por %p80, %p81
      %p83 = scmp.ne.s32.totalorder %s71, %s72
      %p84 = scmp.eq.s32.totalorder %s27, 1
      %p85 = por %p83, %p84
      %p87 = scmp.ne.s32.totalorder %s72, %s86
      %p88 = scmp.eq.s32.totalorder %s27, 0
      %p89 = por %p87, %p88
      %s91 = sadd.s32 %s90, 1
      %p94 = scmp.eq.s32.totalorder %s21, 1
      %p95 = scmp.ne.s32.totalorder %s90, %s92
      %p96 = scmp.eq.s32.totalorder %s21, 0
      %p97 = por %p95, %p96
      %p98 = scmp.ne.s32.totalorder %s90, %s92
      %p99 = scmp.eq.s32.totalorder %s26, 1
      %p100 = por %p98, %p99
      %p101 = scmp.ne.s32.totalorder %s92, %s93
      %p102 = scmp.eq.s32.totalorder %s26, 0
      %p103 = por %p101, %p102
      %p104 = scmp.ne.s32.totalorder %s92, %s93
      %p105 = scmp.eq.s32.totalorder %s27, 1
      %p106 = por %p104, %p105
      %p108 = scmp.ne.s32.totalorder %s93, %s107
      %p109 = scmp.eq.s32.totalorder %s27, 0
      %p110 = por %p108, %p109
      %s112 = sadd.s32 %s111, 1
      %p115 = scmp.eq.s32.totalorder %s21, 1
      %p116 = scmp.ne.s32.totalorder %s111, %s113
      %p117 = scmp.eq.s32.totalorder %s21, 0
      %p118 = por %p116, %p117
      %p119 = scmp.ne.s32.totalorder %s111, %s113
      %p120 = scmp.eq.s32.totalorder %s26, 1
      %p121 = por %p119, %p120
      %p122 = scmp.ne.s32.totalorder %s113, %s114
      %p123 = scmp.eq.s32.totalorder %s26, 0
      %p124 = por %p122, %p123
      %p125 = scmp.ne.s32.totalorder %s113, %s114
      %p126 = scmp.eq.s32.totalorder %s27, 1
      %p127 = por %p125, %p126
      %p129 = scmp.ne.s32.totalorder %s114, %s128
      %p130 = scmp.eq.s32.totalorder %s27, 0
      %p131 = por %p129, %p130
      %s133 = sadd.s32 %s132, 1
      %p136 = scmp.eq.s32.totalorder %s21, 1
      %p137 = scmp.ne.s32.totalorder %s132, %s134
      %p138 = scmp.eq.s32.totalorder %s21, 0
      %p139 = por %p137, %p138
      %p140 = scmp.ne.s32.totalorder %s132, %s134
      %p141 = scmp.eq.s32.totalorder %s26, 1
      %p142 = por %p140, %p141
      %p143 = scmp.ne.s32.totalorder %s134, %s135
      %p144 = scmp.eq.s32.totalorder %s26, 0
      %p145 = por %p143, %p144
      %p146 = scmp.ne.s32.totalorder %s134, %s135
      %p147 = scmp.eq.s32.totalorder %s27, 1
      %p148 = por %p146, %p147
      %p150 = scmp.ne.s32.totalorder %s135, %s149
      %p151 = scmp.eq.s32.totalorder %s27, 0
      %p152 = por %p150, %p151
      %s154 = sadd.s32 %s153, 1
      %p157 = scmp.eq.s32.totalorder %s21, 1
      %p158 = scmp.ne.s32.totalorder %s153, %s155
      %p159 = scmp.eq.s32.totalorder %s21, 0
      %p160 = por %p158, %p159
      %p161 = scmp.ne.s32.totalorder %s153, %s155
      %p162 = scmp.eq.s32.totalorder %s26, 1
      %p163 = por %p161, %p162
      %p164 = scmp.ne.s32.totalorder %s155, %s156
      %p165 = scmp.eq.s32.totalorder %s26, 0
      %p166 = por %p164, %p165
      %p167 = scmp.ne.s32.totalorder %s155, %s156
      %p168 = scmp.eq.s32.totalorder %s27, 1
      %p169 = por %p167, %p168
      %p171 = scmp.ne.s32.totalorder %s156, %s170
      %p172 = scmp.eq.s32.totalorder %s27, 0
      %p173 = por %p171, %p172
      %s175 = sadd.s32 %s174, 1
      %p178 = scmp.eq.s32.totalorder %s21, 1
      %p179 = scmp.ne.s32.totalorder %s174, %s176
      %p180 = scmp.eq.s32.totalorder %s21, 0
      %p181 = por %p179, %p180
      %p182 = scmp.ne.s32.totalorder %s174, %s176
      %p183 = scmp.eq.s32.totalorder %s26, 1
      %p184 = por %p182, %p183
      %p185 = scmp.ne.s32.totalorder %s176, %s177
      %p186 = scmp.eq.s32.totalorder %s26, 0
      %p187 = por %p185, %p186
      %p188 = scmp.ne.s32.totalorder %s176, %s177
      %p189 = scmp.eq.s32.totalorder %s27, 1
      %p190 = por %p188, %p189
      %p192 = scmp.ne.s32.totalorder %s177, %s191
      %p193 = scmp.eq.s32.totalorder %s27, 0
      %p194 = por %p192, %p193
      %s196 = sadd.s32 %s195, 1
      %p199 = scmp.eq.s32.totalorder %s21, 1
      %p200 = scmp.ne.s32.totalorder %s195, %s197
      %p201 = scmp.eq.s32.totalorder %s21, 0
      %p202 = por %p200, %p201
      %p203 = scmp.ne.s32.totalorder %s195, %s197
      %p204 = scmp.eq.s32.totalorder %s26, 1
      %p205 = por %p203, %p204
      %p206 = scmp.ne.s32.totalorder %s197, %s198
      %p207 = scmp.eq.s32.totalorder %s26, 0
      %p208 = por %p206, %p207
      %p209 = scmp.ne.s32.totalorder %s197, %s198
      %p210 = scmp.eq.s32.totalorder %s27, 1
      %p211 = por %p209, %p210
      %p213 = scmp.ne.s32.totalorder %s198, %s212
      %p214 = scmp.eq.s32.totalorder %s27, 0
      %p215 = por %p213, %p214
      %s217 = sadd.s32 %s216, 1
      %p220 = scmp.eq.s32.totalorder %s21, 1
      %p221 = scmp.ne.s32.totalorder %s216, %s218
      %p222 = scmp.eq.s32.totalorder %s21, 0
      %p223 = por %p221, %p222
      %p224 = scmp.ne.s32.totalorder %s216, %s218
      %p225 = scmp.eq.s32.totalorder %s26, 1
      %p226 = por %p224, %p225
      %p227 = scmp.ne.s32.totalorder %s218, %s219
      %p228 = scmp.eq.s32.totalorder %s26, 0
      %p229 = por %p227, %p228
      %p230 = scmp.ne.s32.totalorder %s218, %s219
      %p231 = scmp.eq.s32.totalorder %s27, 1
      %p232 = por %p230, %p231
      %p234 = scmp.ne.s32.totalorder %s219, %s233
      %p235 = scmp.eq.s32.totalorder %s27, 0
      %p236 = por %p234, %p235
      %s238 = sadd.s32 %s237, 1
      %p241 = scmp.eq.s32.totalorder %s21, 1
      %p242 = scmp.ne.s32.totalorder %s237, %s239
      %p243 = scmp.eq.s32.totalorder %s21, 0
      %p244 = por %p242, %p243
      %p245 = scmp.ne.s32.totalorder %s237, %s239
      %p246 = scmp.eq.s32.totalorder %s26, 1
      %p247 = por %p245, %p246
      %p248 = scmp.ne.s32.totalorder %s239, %s240
      %p249 = scmp.eq.s32.totalorder %s26, 0
      %p250 = por %p248, %p249
      %p251 = scmp.ne.s32.totalorder %s239, %s240
      %p252 = scmp.eq.s32.totalorder %s27, 1
      %p253 = por %p251, %p252
      %p255 = scmp.ne.s32.totalorder %s240, %s254
      %p256 = scmp.eq.s32.totalorder %s27, 0
      %p257 = por %p255, %p256
      %s258 = ssub.s32 %s28, %s40
      %p259 = scmp.eq.s32.totalorder %s258, 0
      %s261 = sadd.s32 %s260, 1
      %s262 = scalar_select %p259, %s260, %s261
      %p265 = pneg %p259
      %p266 = scmp.eq.s32.totalorder %s21, 1
      %p267 = por %p265, %p266
      %p268 = scmp.ne.s32.totalorder %s260, %s263
      %p269 = scmp.eq.s32.totalorder %s21, 0
      %p270 = por %p268, %p269
      %p271 = scmp.ne.s32.totalorder %s260, %s263
      %p272 = scmp.eq.s32.totalorder %s26, 1
      %p273 = por %p271, %p272
      %p274 = scmp.ne.s32.totalorder %s263, %s264
      %p275 = scmp.eq.s32.totalorder %s26, 0
      %p276 = por %p274, %p275
      %p277 = scmp.ne.s32.totalorder %s263, %s264
      %p278 = scmp.eq.s32.totalorder %s27, 1
      %p279 = por %p277, %p278
      %p281 = scmp.ne.s32.totalorder %s264, %s280
      %p282 = scmp.eq.s32.totalorder %s27, 0
      %p283 = por %p281, %p282
      %p284 = scmp.le.s32.totalorder 1, %s21
      %p285 = scmp.lt.s32.totalorder %s21, 3
      %p286 = pnand %p284, %p285
      %p287 = pneg %p286
      // Predicated region
      $region9: #{tpu_custom_call.1} parent=5 // pred_check
        _
      $region10: #{tpu_custom_call.1} parent=5 // pred_check_branch
        %289 = sbr.rel (%p286) target = $region12
      $region11: #{tpu_custom_call.1} parent=5 // pred_region
        %s290 = ssub.s32 %s21, 1
        // Predicated region
        $region13: #{tpu_custom_call.1} parent=11 // pred_check
          %p291 = pneg %p82
        $region14: #{tpu_custom_call.1} parent=11 // pred_check_branch
          %293 = sbr.rel (%p291) target = $region16
        $region15: #{tpu_custom_call.1} parent=11 // pred_region
          %s295 = ssub.s32 32, 32
          %296 = vsyncadd [#allocation4], %s295
          %s298 = sshll.u32 [#allocation3], 4
          %s299 = int_to_ptr.vmem [resolvable:$true] %s298
          %301 = dma.hbm_to_vmem [thread:$0]  %s1, 32, %s299, [#allocation4]
        $region16: #{tpu_custom_call.1} parent=11 // pred_fallthru
          _
        // Predicated region
        $region17: #{tpu_custom_call.1} parent=11 // pred_check
          %p302 = pneg %p103
        $region18: #{tpu_custom_call.1} parent=11 // pred_check_branch
          %304 = sbr.rel (%p302) target = $region20
        $region19: #{tpu_custom_call.1} parent=11 // pred_region
          _
        $region20: #{tpu_custom_call.1} parent=11 // pred_fallthru
          _
        // Predicated region
        $region21: #{tpu_custom_call.1} parent=11 // pred_check
          %p305 = pneg %p124
        $region22: #{tpu_custom_call.1} parent=11 // pred_check_branch
          %307 = sbr.rel (%p305) target = $region24
        $region23: #{tpu_custom_call.1} parent=11 // pred_region
          %s309 = ssub.s32 24576, 24576
          %310 = vsyncadd [#allocation7], %s309
          %s311 = sshll.u32 [#allocation6], 4
          %s312 = int_to_ptr.vmem [resolvable:$true] %s311
          %317 = dma.hbm_to_vmem [thread:$0]  %s3, 24576, %s312, [#allocation7], 128, 128, 8
        $region24: #{tpu_custom_call.1} parent=11 // pred_fallthru
          _
        // Predicated region
        $region25: #{tpu_custom_call.1} parent=11 // pred_check
          %p318 = pneg %p145
        $region26: #{tpu_custom_call.1} parent=11 // pred_check_branch
          %320 = sbr.rel (%p318) target = $region28
        $region27: #{tpu_custom_call.1} parent=11 // pred_region
          _
        $region28: #{tpu_custom_call.1} parent=11 // pred_fallthru
          _
        // Predicated region
        $region29: #{tpu_custom_call.1} parent=11 // pred_check
          %p321 = pneg %p166
        $region30: #{tpu_custom_call.1} parent=11 // pred_check_branch
          %323 = sbr.rel (%p321) target = $region32
        $region31: #{tpu_custom_call.1} parent=11 // pred_region
          _
        $region32: #{tpu_custom_call.1} parent=11 // pred_fallthru
          _
        // Predicated region
        $region33: #{tpu_custom_call.1} parent=11 // pred_check
          %p324 = pneg %p187
        $region34: #{tpu_custom_call.1} parent=11 // pred_check_branch
          %326 = sbr.rel (%p324) target = $region36
        $region35: #{tpu_custom_call.1} parent=11 // pred_region
          _
        $region36: #{tpu_custom_call.1} parent=11 // pred_fallthru
          _
        // Predicated region
        $region37: #{tpu_custom_call.1} parent=11 // pred_check
          %p327 = pneg %p208
        $region38: #{tpu_custom_call.1} parent=11 // pred_check_branch
          %329 = sbr.rel (%p327) target = $region40
        $region39: #{tpu_custom_call.1} parent=11 // pred_region
          _
        $region40: #{tpu_custom_call.1} parent=11 // pred_fallthru
          _
        // Predicated region
        $region41: #{tpu_custom_call.1} parent=11 // pred_check
          %p330 = pneg %p229
        $region42: #{tpu_custom_call.1} parent=11 // pred_check_branch
          %332 = sbr.rel (%p330) target = $region44
        $region43: #{tpu_custom_call.1} parent=11 // pred_region
          _
        $region44: #{tpu_custom_call.1} parent=11 // pred_fallthru
          _
        // Predicated region
        $region45: #{tpu_custom_call.1} parent=11 // pred_check
          %p333 = pneg %p250
        $region46: #{tpu_custom_call.1} parent=11 // pred_check_branch
          %335 = sbr.rel (%p333) target = $region48
        $region47: #{tpu_custom_call.1} parent=11 // pred_region
          %s337 = ssub.s32 1024, 1024
          %338 = vsyncadd [#allocation7], %s337
          %s339 = sshll.u32 [#allocation8], 4
          %s340 = int_to_ptr.vmem [resolvable:$true] %s339
          %345 = dma.hbm_to_vmem [thread:$0]  %s9, 1024, %s340, [#allocation7], 64, 64, 4
        $region48: #{tpu_custom_call.1} parent=11 // pred_fallthru
          _
      $region12: #{tpu_custom_call.1} parent=5 // pred_fallthru
        _
      %p346 = scmp.lt.s32.totalorder %s21, 2
      // Predicated region
      $region49: #{tpu_custom_call.1} parent=5 // pred_check
        %p347 = pneg %p346
      $region50: #{tpu_custom_call.1} parent=5 // pred_check_branch
        %349 = sbr.rel (%p347) target = $region52
      $region51: #{tpu_custom_call.1} parent=5 // pred_region
        // Predicated region
        $region53: #{tpu_custom_call.1} parent=51 // pred_check
          %p350 = pneg %p55
        $region54: #{tpu_custom_call.1} parent=51 // pred_check_branch
          %352 = sbr.rel (%p350) target = $region56
        $region55: #{tpu_custom_call.1} parent=51 // pred_region
          %s353 = smul.u32 32, %s29
          %p354 = scmp.lt.s32.totalorder %s28, 1
          %s355 = scalar_select %p354, %s28, 1
          %p356 = scmp.lt.s32.totalorder %s353, 31
          %s357 = scalar_select %p356, %s353, 31
          %s358 = smul.addr %s355, 32
          %s359 = sadd.s32 %s357, %s358
          %s360 = smul.addr %s359, 4
          %s361 = scalar_lea.vmem %s0, %s360
          %s362 = smul.u32 32, %s29
        $region56: #{tpu_custom_call.1} parent=51 // pred_fallthru
          _
      $region52: #{tpu_custom_call.1} parent=5 // pred_fallthru
        _
      %p363 = scmp.le.s32.totalorder 1, %s21
      %p364 = scmp.lt.s32.totalorder %s21, 3
      %p365 = pnand %p363, %p364
      %p366 = pneg %p365
      // Predicated region
      $region57: #{tpu_custom_call.1} parent=5 // pred_check
        _
      $region58: #{tpu_custom_call.1} parent=5 // pred_check_branch
        %368 = sbr.rel (%p365) target = $region60
      $region59: #{tpu_custom_call.1} parent=5 // pred_region
        %s369 = ssub.s32 %s21, 1
        // Predicated region
        $region61: #{tpu_custom_call.1} parent=59 // pred_check
          %p370 = pneg %p82
        $region62: #{tpu_custom_call.1} parent=59 // pred_check_branch
          %372 = sbr.rel (%p370) target = $region64
        $region63: #{tpu_custom_call.1} parent=59 // pred_region
          %373 = dma.done [#allocation4], 32
        $region64: #{tpu_custom_call.1} parent=59 // pred_fallthru
          _
        // Predicated region
        $region65: #{tpu_custom_call.1} parent=59 // pred_check
          %p374 = pneg %p124
        $region66: #{tpu_custom_call.1} parent=59 // pred_check_branch
          %376 = sbr.rel (%p374) target = $region68
        $region67: #{tpu_custom_call.1} parent=59 // pred_region
          %377 = dma.done [#allocation7], 24576
        $region68: #{tpu_custom_call.1} parent=59 // pred_fallthru
          _
        // Predicated region
        $region69: #{tpu_custom_call.1} parent=59 // pred_check
          %p378 = pneg %p250
        $region70: #{tpu_custom_call.1} parent=59 // pred_check_branch
          %380 = sbr.rel (%p378) target = $region72
        $region71: #{tpu_custom_call.1} parent=59 // pred_region
          %381 = dma.done [#allocation7], 1024
        $region72: #{tpu_custom_call.1} parent=59 // pred_fallthru
          _
        %s382 = smul.u32 32, %s31
        %p383 = scmp.lt.s32.totalorder %s30, 1
        %s384 = scalar_select %p383, %s30, 1
        %p385 = scmp.lt.s32.totalorder %s382, 31
        %s386 = scalar_select %p385, %s382, 31
        %s387 = smul.addr %s384, 32
        %s388 = sadd.s32 %s386, %s387
        %s389 = smul.addr %s388, 4
        %s390 = scalar_lea.vmem %s0, %s389
        %p391 = pneg %p61
        %p392 = pneg %p58
        %p393 = pneg %p82
        %p394 = pneg %p79
        %p395 = pneg %p103
        %p396 = pneg %p100
        %p397 = pneg %p124
        %p398 = pneg %p121
        %p399 = pneg %p145
        %p400 = pneg %p142
        %p401 = pneg %p166
        %p402 = pneg %p163
        %p403 = pneg %p187
        %p404 = pneg %p184
        %p405 = pneg %p208
        %p406 = pneg %p205
        %p407 = pneg %p229
        %p408 = pneg %p226
        %p409 = pneg %p250
        %p410 = pneg %p247
        %p411 = pneg %p276
        %p412 = pneg %p273
        %s413 = sand.u32 %s263, 1
        %s414 = scalar_lea.sflag [#allocation5], %s413
        %s415 = sand.u32 %s263, 1
        %s416 = scalar_lea.vmem [#allocation9], %s415
        %s417 = smul.u32 32, %s31
        %p418 = scmp.lt.s32.totalorder %s30, 1
        %s419 = scalar_select %p418, %s30, 1
        %p420 = scmp.lt.s32.totalorder %s417, 31
        %s421 = scalar_select %p420, %s417, 31
        %s422 = smul.addr %s419, 32
        %s423 = sadd.s32 %s421, %s422
        %s424 = smul.addr %s423, 4
        %s425 = scalar_lea.vmem %s0, %s424
        %s426 = smul.u32 32, %s31
        %p428 = scmp.eq.s32.totalorder %s31, 0
        // Predicated region
        $region73: #{tpu_custom_call.1} parent=59 // pred_check
          %p429 = pneg %p428
        $region74: #{tpu_custom_call.1} parent=59 // pred_check_branch
          %431 = sbr.rel (%p429) target = $region76
        $region75: #{tpu_custom_call.1} parent=59 // pred_region
          %432 = vst [vmem:[#allocation2] sm:$0xff] 0.0
          %v433 = vlaneseq
          %vm434 = vcmp.ge.s32.totalorder %v433, 0
          %vm435 = vcmp.lt.s32.totalorder %v433, 512
          %vm436 = vmand %vm434, %vm435
          %437 = vst.msk [vmem:[#allocation2 + $0x8] sm:$0xf] %vm436, 0.0
        $region76: #{tpu_custom_call.1} parent=59 // pred_fallthru
          _
        %v438 = vld [vmem:[%s425] sm:$0xf]
        %v439 = vld [vmem:[%s425 + $0x4] sm:$0xf]
        %v440 = vld [vmem:[%s425 + $0x8] sm:$0xf]
        %v441 = vld [vmem:[%s425 + $0xc] sm:$0xf]
        %v442 = vld [vmem:[%s425 + $0x10] sm:$0xf]
        %v443 = vld [vmem:[%s425 + $0x14] sm:$0xf]
        %v444 = vld [vmem:[%s425 + $0x18] sm:$0xf]
        %v445 = vld [vmem:[%s425 + $0x1c] sm:$0xf]
        %v446 = vld [vmem:[%s425 + $0x20] sm:$0xf]
        %v447 = vld [vmem:[%s425 + $0x24] sm:$0xf]
        %v448 = vld [vmem:[%s425 + $0x28] sm:$0xf]
        %v449 = vld [vmem:[%s425 + $0x2c] sm:$0xf]
        %v450 = vld [vmem:[%s425 + $0x30] sm:$0xf]
        %v451 = vld [vmem:[%s425 + $0x34] sm:$0xf]
        %v452 = vld [vmem:[%s425 + $0x38] sm:$0xf]
        %v453 = vld [vmem:[%s425 + $0x3c] sm:$0xf]
        %v454 = vld [vmem:[%s425 + $0x40] sm:$0xf]
        %v455 = vld [vmem:[%s425 + $0x44] sm:$0xf]
        %v456 = vld [vmem:[%s425 + $0x48] sm:$0xf]
        %v457 = vld [vmem:[%s425 + $0x4c] sm:$0xf]
        %v458 = vld [vmem:[%s425 + $0x50] sm:$0xf]
        %v459 = vld [vmem:[%s425 + $0x54] sm:$0xf]
        %v460 = vld [vmem:[%s425 + $0x58] sm:$0xf]
        %v461 = vld [vmem:[%s425 + $0x5c] sm:$0xf]
        %v462 = vld [vmem:[%s425 + $0x60] sm:$0xf]
        %v463 = vld [vmem:[%s425 + $0x64] sm:$0xf]
        %v464 = vld [vmem:[%s425 + $0x68] sm:$0xf]
        %v465 = vld [vmem:[%s425 + $0x6c] sm:$0xf]
        %v466 = vld [vmem:[%s425 + $0x70] sm:$0xf]
        %v467 = vld [vmem:[%s425 + $0x74] sm:$0xf]
        %v468 = vld [vmem:[%s425 + $0x78] sm:$0xf]
        %v469 = vld [vmem:[%s425 + $0x7c] sm:$0xf]
        %v470 = vld [vmem:[%s2] sm:$0xff]
        %v471 = vld [vmem:[%s2 + $0x8] sm:$0xff]
        %v472 = vld [vmem:[%s2 + $0x10] sm:$0xff]
        %v473 = vld [vmem:[%s2 + $0x18] sm:$0xff]
        %v474 = vld [vmem:[%s2 + $0x20] sm:$0xff]
        %v475 = vld [vmem:[%s2 + $0x28] sm:$0xff]
        %v476 = vld [vmem:[%s2 + $0x30] sm:$0xff]
        %v477 = vld [vmem:[%s2 + $0x38] sm:$0xff]
        %v478 = vld [vmem:[%s2 + $0x40] sm:$0xff]
        %v479 = vld [vmem:[%s2 + $0x48] sm:$0xff]
        %v480 = vld [vmem:[%s2 + $0x50] sm:$0xff]
        %v481 = vld [vmem:[%s2 + $0x58] sm:$0xff]
        %v482 = vld [vmem:[%s2 + $0x60] sm:$0xff]
        %v483 = vld [vmem:[%s2 + $0x68] sm:$0xff]
        %v484 = vld [vmem:[%s2 + $0x70] sm:$0xff]
        %v485 = vld [vmem:[%s2 + $0x78] sm:$0xff]
        %v486 = vld [vmem:[%s2 + $0x80] sm:$0xff]
        %v487 = vld [vmem:[%s2 + $0x88] sm:$0xff]
        %v488 = vld [vmem:[%s2 + $0x90] sm:$0x33]
        %v489 = vld [vmem:[%s2 + $0x98] sm:$0x33]
        %v490 = vld [vmem:[%s2 + $0xa0] sm:$0x33]
        %v491 = vld [vmem:[%s2 + $0xa8] sm:$0x33]
        %v492 = vld [vmem:[%s2 + $0xb0] sm:$0x33]
        %v493 = vld [vmem:[%s2 + $0xb8] sm:$0x33]
        %v526 = vunpack.c.l.b16 %v438
        %v527 = vunpack.c.l.b16 %v439
        %v528 = vunpack.c.l.b16 %v440
        %v529 = vunpack.c.l.b16 %v441
        %v530 = vunpack.c.l.b16 %v442
        %v531 = vunpack.c.l.b16 %v443
        %v532 = vunpack.c.l.b16 %v444
        %v533 = vunpack.c.l.b16 %v445
        %v534 = vunpack.c.l.b16 %v446
        %v535 = vunpack.c.l.b16 %v447
        %v536 = vunpack.c.l.b16 %v448
        %v537 = vunpack.c.l.b16 %v449
        %v538 = vunpack.c.l.b16 %v450
        %v539 = vunpack.c.l.b16 %v451
        %v540 = vunpack.c.l.b16 %v452
        %v541 = vunpack.c.l.b16 %v453
        %v542 = vunpack.c.l.b16 %v454
        %v543 = vunpack.c.l.b16 %v455
        %v544 = vunpack.c.l.b16 %v456
        %v545 = vunpack.c.l.b16 %v457
        %v546 = vunpack.c.l.b16 %v458
        %v547 = vunpack.c.l.b16 %v459
        %v548 = vunpack.c.l.b16 %v460
        %v549 = vunpack.c.l.b16 %v461
        %v550 = vunpack.c.l.b16 %v462
        %v551 = vunpack.c.l.b16 %v463
        %v552 = vunpack.c.l.b16 %v464
        %v553 = vunpack.c.l.b16 %v465
        %v554 = vunpack.c.l.b16 %v466
        %v555 = vunpack.c.l.b16 %v467
        %v556 = vunpack.c.l.b16 %v468
        %v557 = vunpack.c.l.b16 %v469
        %v558 = vpack.c.b16 %v527, %v526
        %v559 = vpack.c.b16 %v529, %v528
        %v560 = vpack.c.b16 %v531, %v530
        %v561 = vpack.c.b16 %v533, %v532
        %v562 = vpack.c.b16 %v535, %v534
        %v563 = vpack.c.b16 %v537, %v536
        %v564 = vpack.c.b16 %v539, %v538
        %v565 = vpack.c.b16 %v541, %v540
        %v566 = vpack.c.b16 %v543, %v542
        %v567 = vpack.c.b16 %v545, %v544
        %v568 = vpack.c.b16 %v547, %v546
        %v569 = vpack.c.b16 %v549, %v548
        %v570 = vpack.c.b16 %v551, %v550
        %v571 = vpack.c.b16 %v553, %v552
        %v572 = vpack.c.b16 %v555, %v554
        %v573 = vpack.c.b16 %v557, %v556
        %v598 = vunpack.c.l.b16 %v470
        %v599 = vunpack.c.h.b16 %v470
        %v600 = vunpack.c.l.b16 %v471
        %v601 = vunpack.c.h.b16 %v471
        %v602 = vunpack.c.l.b16 %v472
        %v603 = vunpack.c.h.b16 %v472
        %v604 = vunpack.c.l.b16 %v473
        %v605 = vunpack.c.h.b16 %v473
        %v606 = vunpack.c.l.b16 %v474
        %v607 = vunpack.c.h.b16 %v474
        %v608 = vunpack.c.l.b16 %v475
        %v609 = vunpack.c.h.b16 %v475
        %v610 = vunpack.c.l.b16 %v476
        %v611 = vunpack.c.h.b16 %v476
        %v612 = vunpack.c.l.b16 %v477
        %v613 = vunpack.c.h.b16 %v477
        %v614 = vunpack.c.l.b16 %v478
        %v615 = vunpack.c.h.b16 %v478
        %v616 = vunpack.c.l.b16 %v479
        %v617 = vunpack.c.h.b16 %v479
        %v618 = vunpack.c.l.b16 %v480
        %v619 = vunpack.c.h.b16 %v480
        %v620 = vunpack.c.l.b16 %v481
        %v621 = vunpack.c.h.b16 %v481
        %v622 = vunpack.c.l.b16 %v482
        %v623 = vunpack.c.h.b16 %v482
        %v624 = vunpack.c.l.b16 %v483
        %v625 = vunpack.c.h.b16 %v483
        %v626 = vunpack.c.l.b16 %v484
        %v627 = vunpack.c.h.b16 %v484
        %v628 = vunpack.c.l.b16 %v485
        %v629 = vunpack.c.h.b16 %v485
        %v630 = vunpack.c.l.b16 %v486
        %v631 = vunpack.c.h.b16 %v486
        %v632 = vunpack.c.l.b16 %v487
        %v633 = vunpack.c.h.b16 %v487
        %v634 = vunpack.c.l.b16 %v488
        %v635 = vunpack.c.h.b16 %v488
        %v636 = vunpack.c.l.b16 %v489
        %v637 = vunpack.c.h.b16 %v489
        %v638 = vunpack.c.l.b16 %v490
        %v639 = vunpack.c.h.b16 %v490
        %v640 = vunpack.c.l.b16 %v491
        %v641 = vunpack.c.h.b16 %v491
        %v642 = vunpack.c.l.b16 %v492
        %v643 = vunpack.c.h.b16 %v492
        %v644 = vunpack.c.l.b16 %v493
        %v645 = vunpack.c.h.b16 %v493
        %v646 = vpack.c.b16 %v610, %v598
        %v647 = vpack.c.b16 %v611, %v599
        %v648 = vpack.c.b16 %v612, %v600
        %v649 = vpack.c.b16 %v613, %v601
        %v650 = vpack.c.b16 %v614, %v602
        %v651 = vpack.c.b16 %v615, %v603
        %v652 = vpack.c.b16 %v616, %v604
        %v653 = vpack.c.b16 %v617, %v605
        %v654 = vpack.c.b16 %v618, %v606
        %v655 = vpack.c.b16 %v619, %v607
        %v656 = vpack.c.b16 %v620, %v608
        %v657 = vpack.c.b16 %v621, %v609
        %v658 = vpack.c.b16 %v634, %v622
        %v659 = vpack.c.b16 %v635, %v623
        %v660 = vpack.c.b16 %v636, %v624
        %v661 = vpack.c.b16 %v637, %v625
        %v662 = vpack.c.b16 %v638, %v626
        %v663 = vpack.c.b16 %v639, %v627
        %v664 = vpack.c.b16 %v640, %v628
        %v665 = vpack.c.b16 %v641, %v629
        %v666 = vpack.c.b16 %v642, %v630
        %v667 = vpack.c.b16 %v643, %v631
        %v668 = vpack.c.b16 %v644, %v632
        %v669 = vpack.c.b16 %v645, %v633
        %vm682 = vcmask 220160
        %v684 = vsel %vm682, %v558, 0
        %v687 = vsel %vm682, %v559, 0
        %v690 = vsel %vm682, %v560, 0
        %v693 = vsel %vm682, %v561, 0
        %v696 = vsel %vm682, %v562, 0
        %v699 = vsel %vm682, %v563, 0
        %v702 = vsel %vm682, %v564, 0
        %v705 = vsel %vm682, %v565, 0
        %v708 = vsel %vm682, %v566, 0
        %v711 = vsel %vm682, %v567, 0
        %v714 = vsel %vm682, %v568, 0
        %v717 = vsel %vm682, %v569, 0
        %v720 = vsel %vm682, %v570, 0
        %v723 = vsel %vm682, %v571, 0
        %v726 = vsel %vm682, %v572, 0
        %v729 = vsel %vm682, %v573, 0
        %vm731 = vcmask 1044480
        %vm732 = vcmask 1045504
        %v733 = vsel %vm731, 4294967295, 65535
        %v734 = vsel %vm732, %v733, 0
        %v736 = vand.u32 %v658, %v734
        %v739 = vand.u32 %v659, %v734
        %v742 = vand.u32 %v660, %v734
        %v745 = vand.u32 %v661, %v734
        %v748 = vand.u32 %v662, %v734
        %v751 = vand.u32 %v663, %v734
        %v754 = vand.u32 %v664, %v734
        %v757 = vand.u32 %v665, %v734
        %v760 = vand.u32 %v666, %v734
        %v763 = vand.u32 %v667, %v734
        %v766 = vand.u32 %v668, %v734
        %v769 = vand.u32 %v669, %v734
        %771 = vmatprep.subr.bf16.mxu0 %v647
        %772 = vmatpush1.bf16.msra.mxu0 %v646
        %773 = vmatprep.subr.bf16.mxu0 %v739
        %774 = vmatpush1.bf16.msra.mxu0 %v736
        %775 = vmatprep.subr.bf16.mxu0 0
        %776 = vmatpush1.bf16.msra.mxu0 0
        %777 = vmatprep.subr.bf16.mxu0 0
        %778 = vmatpush1.bf16.msra.mxu0 0
        %779 = vmatprep.subr.bf16.mxu0 0
        %780 = vmatpush1.bf16.msra.mxu0 0
        %781 = vmatprep.subr.bf16.mxu0 0
        %782 = vmatpush1.bf16.msra.mxu0 0
        %783 = vmatprep.subr.bf16.mxu0 0
        %784 = vmatpush1.bf16.msra.mxu0 0
        %785 = vmatprep.subr.bf16.mxu0 0
        %786 = vmatpush1.bf16.msra.mxu0 0
        %787 = vmatprep.subr.bf16.mxu0 0
        %788 = vmatpush1.bf16.msra.mxu0 0
        %789 = vmatprep.subr.bf16.mxu0 0
        %790 = vmatpush1.bf16.msra.mxu0 0
        %791 = vmatprep.subr.bf16.mxu0 0
        %792 = vmatpush1.bf16.msra.mxu0 0
        %793 = vmatprep.subr.bf16.mxu0 0
        %794 = vmatpush1.bf16.msra.mxu0 0
        %795 = vmatprep.subr.bf16.mxu0 0
        %796 = vmatpush1.bf16.msra.mxu0 0
        %797 = vmatprep.subr.bf16.mxu0 0
        %798 = vmatpush1.bf16.msra.mxu0 0
        %799 = vmatprep.subr.bf16.mxu0 0
        %800 = vmatpush1.bf16.msra.mxu0 0
        %801 = vmatprep.subr.bf16.mxu0 0
        %802 = vmatpush1.bf16.msra.mxu0 0
        %803 = vmatprep.mubr.bf16.mxu0 0
        %804 = vmatmul.mubr.bf16.gmra.mrb[0].mxu0 %v684
        %v805 = vpop.f32.mrb[0].mxu0
        %v806 = vadd.f32 0.0, %v805
        %v807 = vpop.f32.mrb[0].mxu0
        %v808 = vadd.f32 0.0, %v807
        %v809 = vpop.f32.mrb[0].mxu0
        %v810 = vadd.f32 0.0, %v809
        %v811 = vpop.f32.mrb[0].mxu0
        %v812 = vadd.f32 0.0, %v811
        %813 = vmatprep.mubr.bf16.mxu0 0
        %814 = vmatmul.mubr.bf16.gmra.mrb[0].mxu0 %v687
        %v815 = vpop.f32.mrb[0].mxu0
        %v816 = vadd.f32 0.0, %v815
        %v817 = vpop.f32.mrb[0].mxu0
        %v818 = vadd.f32 0.0, %v817
        %v819 = vpop.f32.mrb[0].mxu0
        %v820 = vadd.f32 0.0, %v819
        %v821 = vpop.f32.mrb[0].mxu0
        %v822 = vadd.f32 0.0, %v821
        %823 = vmatprep.mubr.bf16.mxu0 0
        %824 = vmatmul.mubr.bf16.gmra.mrb[0].mxu0 %v690
        %v825 = vpop.f32.mrb[0].mxu0
        %v826 = vadd.f32 0.0, %v825
        %v827 = vpop.f32.mrb[0].mxu0
        %v828 = vadd.f32 0.0, %v827
        %v829 = vpop.f32.mrb[0].mxu0
        %v830 = vadd.f32 0.0, %v829
        %v831 = vpop.f32.mrb[0].mxu0
        %v832 = vadd.f32 0.0, %v831
        %833 = vmatprep.mubr.bf16.mxu0 0
        %834 = vmatmul.mubr.bf16.gmra.mrb[0].mxu0 %v693
        %v835 = vpop.f32.mrb[0].mxu0
        %v836 = vadd.f32 0.0, %v835
        %v837 = vpop.f32.mrb[0].mxu0
        %v838 = vadd.f32 0.0, %v837
        %v839 = vpop.f32.mrb[0].mxu0
        %v840 = vadd.f32 0.0, %v839
        %v841 = vpop.f32.mrb[0].mxu0
        %v842 = vadd.f32 0.0, %v841
        %843 = vmatprep.mubr.bf16.mxu0 0
        %844 = vmatmul.mubr.bf16.gmra.mrb[0].mxu0 %v696
        %v845 = vpop.f32.mrb[0].mxu0
        %v846 = vadd.f32 0.0, %v845
        %v847 = vpop.f32.mrb[0].mxu0
        %v848 = vadd.f32 0.0, %v847
        %v849 = vpop.f32.mrb[0].mxu0
        %v850 = vadd.f32 0.0, %v849
        %v851 = vpop.f32.mrb[0].mxu0
        %v852 = vadd.f32 0.0, %v851
        %853 = vmatprep.mubr.bf16.mxu0 0
        %854 = vmatmul.mubr.bf16.gmra.mrb[0].mxu0 %v699
        %v855 = vpop.f32.mrb[0].mxu0
        %v856 = vadd.f32 0.0, %v855
        %v857 = vpop.f32.mrb[0].mxu0
        %v858 = vadd.f32 0.0, %v857
        %v859 = vpop.f32.mrb[0].mxu0
        %v860 = vadd.f32 0.0, %v859
        %v861 = vpop.f32.mrb[0].mxu0
        %v862 = vadd.f32 0.0, %v861
        %863 = vmatprep.mubr.bf16.mxu0 0
        %864 = vmatmul.mubr.bf16.gmra.mrb[0].mxu0 %v702
        %v865 = vpop.f32.mrb[0].mxu0
        %v866 = vadd.f32 0.0, %v865
        %v867 = vpop.f32.mrb[0].mxu0
        %v868 = vadd.f32 0.0, %v867
        %v869 = vpop.f32.mrb[0].mxu0
        %v870 = vadd.f32 0.0, %v869
        %v871 = vpop.f32.mrb[0].mxu0
        %v872 = vadd.f32 0.0, %v871
        %873 = vmatprep.mubr.bf16.mxu0 0
        %874 = vmatmul.mubr.bf16.gmra.mrb[0].mxu0 %v705
        %v875 = vpop.f32.mrb[0].mxu0
        %v876 = vadd.f32 0.0, %v875
        %v877 = vpop.f32.mrb[0].mxu0
        %v878 = vadd.f32 0.0, %v877
        %v879 = vpop.f32.mrb[0].mxu0
        %v880 = vadd.f32 0.0, %v879
        %v881 = vpop.f32.mrb[0].mxu0
        %v882 = vadd.f32 0.0, %v881
        %883 = vmatprep.mubr.bf16.mxu0 0
        %884 = vmatmul.mubr.bf16.gmra.mrb[0].mxu0 %v708
        %v885 = vpop.f32.mrb[0].mxu0
        %v886 = vadd.f32 0.0, %v885
        %v887 = vpop.f32.mrb[0].mxu0
        %v888 = vadd.f32 0.0, %v887
        %v889 = vpop.f32.mrb[0].mxu0
        %v890 = vadd.f32 0.0, %v889
        %v891 = vpop.f32.mrb[0].mxu0
        %v892 = vadd.f32 0.0, %v891
        %893 = vmatprep.mubr.bf16.mxu0 0
        %894 = vmatmul.mubr.bf16.gmra.mrb[0].mxu0 %v711
        %v895 = vpop.f32.mrb[0].mxu0
        %v896 = vadd.f32 0.0, %v895
        %v897 = vpop.f32.mrb[0].mxu0
        %v898 = vadd.f32 0.0, %v897
        %v899 = vpop.f32.mrb[0].mxu0
        %v900 = vadd.f32 0.0, %v899
        %v901 = vpop.f32.mrb[0].mxu0
        %v902 = vadd.f32 0.0, %v901
        %903 = vmatprep.mubr.bf16.mxu0 0
        %904 = vmatmul.mubr.bf16.gmra.mrb[0].mxu0 %v714
        %v905 = vpop.f32.mrb[0].mxu0
        %v906 = vadd.f32 0.0, %v905
        %v907 = vpop.f32.mrb[0].mxu0
        %v908 = vadd.f32 0.0, %v907
        %v909 = vpop.f32.mrb[0].mxu0
        %v910 = vadd.f32 0.0, %v909
        %v911 = vpop.f32.mrb[0].mxu0
        %v912 = vadd.f32 0.0, %v911
        %913 = vmatprep.mubr.bf16.mxu0 0
        %914 = vmatmul.mubr.bf16.gmra.mrb[0].mxu0 %v717
        %v915 = vpop.f32.mrb[0].mxu0
        %v916 = vadd.f32 0.0, %v915
        %v917 = vpop.f32.mrb[0].mxu0
        %v918 = vadd.f32 0.0, %v917
        %v919 = vpop.f32.mrb[0].mxu0
        %v920 = vadd.f32 0.0, %v919
        %v921 = vpop.f32.mrb[0].mxu0
        %v922 = vadd.f32 0.0, %v921
        %923 = vmatprep.mubr.bf16.mxu0 0
        %924 = vmatmul.mubr.bf16.gmra.mrb[0].mxu0 %v720
        %v925 = vpop.f32.mrb[0].mxu0
        %v926 = vadd.f32 0.0, %v925
        %v927 = vpop.f32.mrb[0].mxu0
        %v928 = vadd.f32 0.0, %v927
        %v929 = vpop.f32.mrb[0].mxu0
        %v930 = vadd.f32 0.0, %v929
        %v931 = vpop.f32.mrb[0].mxu0
        %v932 = vadd.f32 0.0, %v931
        %933 = vmatprep.mubr.bf16.mxu0 0
        %934 = vmatmul.mubr.bf16.gmra.mrb[0].mxu0 %v723
        %v935 = vpop.f32.mrb[0].mxu0
        %v936 = vadd.f32 0.0, %v935
        %v937 = vpop.f32.mrb[0].mxu0
        %v938 = vadd.f32 0.0, %v937
        %v939 = vpop.f32.mrb[0].mxu0
        %v940 = vadd.f32 0.0, %v939
        %v941 = vpop.f32.mrb[0].mxu0
        %v942 = vadd.f32 0.0, %v941
        %943 = vmatprep.mubr.bf16.mxu0 0
        %944 = vmatmul.mubr.bf16.gmra.mrb[0].mxu0 %v726
        %v945 = vpop.f32.mrb[0].mxu0
        %v946 = vadd.f32 0.0, %v945
        %v947 = vpop.f32.mrb[0].mxu0
        %v948 = vadd.f32 0.0, %v947
        %v949 = vpop.f32.mrb[0].mxu0
        %v950 = vadd.f32 0.0, %v949
        %v951 = vpop.f32.mrb[0].mxu0
        %v952 = vadd.f32 0.0, %v951
        %953 = vmatprep.mubr.bf16.mxu0 0
        %954 = vmatmul.mubr.bf16.gmra.mrb[0].mxu0 %v729
        %v955 = vpop.f32.mrb[0].mxu0
        %v956 = vadd.f32 0.0, %v955
        %v957 = vpop.f32.mrb[0].mxu0
        %v958 = vadd.f32 0.0, %v957
        %v959 = vpop.f32.mrb[0].mxu0
        %v960 = vadd.f32 0.0, %v959
        %v961 = vpop.f32.mrb[0].mxu0
        %v962 = vadd.f32 0.0, %v961
        %963 = vdwg.mxu0
        %964 = vmatprep.subr.bf16.mxu0 %v649
        %965 = vmatpush1.bf16.msra.mxu0 %v648
        %966 = vmatprep.subr.bf16.mxu0 %v745
        %967 = vmatpush1.bf16.msra.mxu0 %v742
        %968 = vmatprep.subr.bf16.mxu0 0
        %969 = vmatpush1.bf16.msra.mxu0 0
        %970 = vmatprep.subr.bf16.mxu0 0
        %971 = vmatpush1.bf16.msra.mxu0 0
        %972 = vmatprep.subr.bf16.mxu0 0
        %973 = vmatpush1.bf16.msra.mxu0 0
        %974 = vmatprep.subr.bf16.mxu0 0
        %975 = vmatpush1.bf16.msra.mxu0 0
        %976 = vmatprep.subr.bf16.mxu0 0
        %977 = vmatpush1.bf16.msra.mxu0 0
        %978 = vmatprep.subr.bf16.mxu0 0
        %979 = vmatpush1.bf16.msra.mxu0 0
        %980 = vmatprep.subr.bf16.mxu0 0
        %981 = vmatpush1.bf16.msra.mxu0 0
        %982 = vmatprep.subr.bf16.mxu0 0
        %983 = vmatpush1.bf16.msra.mxu0 0
        %984 = vmatprep.subr.bf16.mxu0 0
        %985 = vmatpush1.bf16.msra.mxu0 0
        %986 = vmatprep.subr.bf16.mxu0 0
        %987 = vmatpush1.bf16.msra.mxu0 0
        %988 = vmatprep.subr.bf16.mxu0 0
        %989 = vmatpush1.bf16.msra.mxu0 0
        %990 = vmatprep.subr.bf16.mxu0 0
        %991 = vmatpush1.bf16.msra.mxu0 0
        %992 = vmatprep.subr.bf16.mxu0 0
        %993 = vmatpush1.bf16.msra.mxu0 0
        %994 = vmatprep.subr.bf16.mxu0 0
        %995 = vmatpush1.bf16.msra.mxu0 0
        %996 = vmatprep.mubr.bf16.mxu0 0
        %997 = vmatmul.mubr.bf16.gmra.mrb[0].mxu0 %v684
        %v998 = vpop.f32.mrb[0].mxu0
        %v999 = vadd.f32 0.0, %v998
        %v1000 = vpop.f32.mrb[0].mxu0
        %v1001 = vadd.f32 0.0, %v1000
        %v1002 = vpop.f32.mrb[0].mxu0
        %v1003 = vadd.f32 0.0, %v1002
        %v1004 = vpop.f32.mrb[0].mxu0
        %v1005 = vadd.f32 0.0, %v1004
        %1006 = vmatprep.mubr.bf16.mxu0 0
        %1007 = vmatmul.mubr.bf16.gmra.mrb[0].mxu0 %v687
        %v1008 = vpop.f32.mrb[0].mxu0
        %v1009 = vadd.f32 0.0, %v1008
        %v1010 = vpop.f32.mrb[0].mxu0
        %v1011 = vadd.f32 0.0, %v1010
        %v1012 = vpop.f32.mrb[0].mxu0
        %v1013 = vadd.f32 0.0, %v1012
        %v1014 = vpop.f32.mrb[0].mxu0
        %v1015 = vadd.f32 0.0, %v1014
        %1016 = vmatprep.mubr.bf16.mxu0 0
        %1017 = vmatmul.mubr.bf16.gmra.mrb[0].mxu0 %v690
        %v1018 = vpop.f32.mrb[0].mxu0
        %v1019 = vadd.f32 0.0, %v1018
        %v1020 = vpop.f32.mrb[0].mxu0
        %v1021 = vadd.f32 0.0, %v1020
        %v1022 = vpop.f32.mrb[0].mxu0
        %v1023 = vadd.f32 0.0, %v1022
        %v1024 = vpop.f32.mrb[0].mxu0
        %v1025 = vadd.f32 0.0, %v1024
        %1026 = vmatprep.mubr.bf16.mxu0 0
        %1027 = vmatmul.mubr.bf16.gmra.mrb[0].mxu0 %v693
        %v1028 = vpop.f32.mrb[0].mxu0
        %v1029 = vadd.f32 0.0, %v1028
        %v1030 = vpop.f32.mrb[0].mxu0
        %v1031 = vadd.f32 0.0, %v1030
        %v1032 = vpop.f32.mrb[0].mxu0
        %v1033 = vadd.f32 0.0, %v1032
        %v1034 = vpop.f32.mrb[0].mxu0
        %v1035 = vadd.f32 0.0, %v1034
        %1036 = vmatprep.mubr.bf16.mxu0 0
        %1037 = vmatmul.mubr.bf16.gmra.mrb[0].mxu0 %v696
        %v1038 = vpop.f32.mrb[0].mxu0
        %v1039 = vadd.f32 0.0, %v1038
        %v1040 = vpop.f32.mrb[0].mxu0
        %v1041 = vadd.f32 0.0, %v1040
        %v1042 = vpop.f32.mrb[0].mxu0
        %v1043 = vadd.f32 0.0, %v1042
        %v1044 = vpop.f32.mrb[0].mxu0
        %v1045 = vadd.f32 0.0, %v1044
        %1046 = vmatprep.mubr.bf16.mxu0 0
        %1047 = vmatmul.mubr.bf16.gmra.mrb[0].mxu0 %v699
        %v1048 = vpop.f32.mrb[0].mxu0
        %v1049 = vadd.f32 0.0, %v1048
        %v1050 = vpop.f32.mrb[0].mxu0
        %v1051 = vadd.f32 0.0, %v1050
        %v1052 = vpop.f32.mrb[0].mxu0
        %v1053 = vadd.f32 0.0, %v1052
        %v1054 = vpop.f32.mrb[0].mxu0
        %v1055 = vadd.f32 0.0, %v1054
        %1056 = vmatprep.mubr.bf16.mxu0 0
        %1057 = vmatmul.mubr.bf16.gmra.mrb[0].mxu0 %v702
        %v1058 = vpop.f32.mrb[0].mxu0
        %v1059 = vadd.f32 0.0, %v1058
        %v1060 = vpop.f32.mrb[0].mxu0
        %v1061 = vadd.f32 0.0, %v1060
        %v1062 = vpop.f32.mrb[0].mxu0
        %v1063 = vadd.f32 0.0, %v1062
        %v1064 = vpop.f32.mrb[0].mxu0
        %v1065 = vadd.f32 0.0, %v1064
        %1066 = vmatprep.mubr.bf16.mxu0 0
        %1067 = vmatmul.mubr.bf16.gmra.mrb[0].mxu0 %v705
        %v1068 = vpop.f32.mrb[0].mxu0
        %v1069 = vadd.f32 0.0, %v1068
        %v1070 = vpop.f32.mrb[0].mxu0
        %v1071 = vadd.f32 0.0, %v1070
        %v1072 = vpop.f32.mrb[0].mxu0
        %v1073 = vadd.f32 0.0, %v1072
        %v1074 = vpop.f32.mrb[0].mxu0
        %v1075 = vadd.f32 0.0, %v1074
        %1076 = vmatprep.mubr.bf16.mxu0 0
        %1077 = vmatmul.mubr.bf16.gmra.mrb[0].mxu0 %v708
        %v1078 = vpop.f32.mrb[0].mxu0
        %v1079 = vadd.f32 0.0, %v1078
        %v1080 = vpop.f32.mrb[0].mxu0
        %v1081 = vadd.f32 0.0, %v1080
        %v1082 = vpop.f32.mrb[0].mxu0
        %v1083 = vadd.f32 0.0, %v1082
        %v1084 = vpop.f32.mrb[0].mxu0
        %v1085 = vadd.f32 0.0, %v1084
        %1086 = vmatprep.mubr.bf16.mxu0 0
        %1087 = vmatmul.mubr.bf16.gmra.mrb[0].mxu0 %v711
        %v1088 = vpop.f32.mrb[0].mxu0
        %v1089 = vadd.f32 0.0, %v1088
        %v1090 = vpop.f32.mrb[0].mxu0
        %v1091 = vadd.f32 0.0, %v1090
        %v1092 = vpop.f32.mrb[0].mxu0
        %v1093 = vadd.f32 0.0, %v1092
        %v1094 = vpop.f32.mrb[0].mxu0
        %v1095 = vadd.f32 0.0, %v1094
        %1096 = vmatprep.mubr.bf16.mxu0 0
        %1097 = vmatmul.mubr.bf16.gmra.mrb[0].mxu0 %v714
        %v1098 = vpop.f32.mrb[0].mxu0
        %v1099 = vadd.f32 0.0, %v1098
        %v1100 = vpop.f32.mrb[0].mxu0
        %v1101 = vadd.f32 0.0, %v1100
        %v1102 = vpop.f32.mrb[0].mxu0
        %v1103 = vadd.f32 0.0, %v1102
        %v1104 = vpop.f32.mrb[0].mxu0
        %v1105 = vadd.f32 0.0, %v1104
        %1106 = vmatprep.mubr.bf16.mxu0 0
        %1107 = vmatmul.mubr.bf16.gmra.mrb[0].mxu0 %v717
        %v1108 = vpop.f32.mrb[0].mxu0
        %v1109 = vadd.f32 0.0, %v1108
        %v1110 = vpop.f32.mrb[0].mxu0
        %v1111 = vadd.f32 0.0, %v1110
        %v1112 = vpop.f32.mrb[0].mxu0
        %v1113 = vadd.f32 0.0, %v1112
        %v1114 = vpop.f32.mrb[0].mxu0
        %v1115 = vadd.f32 0.0, %v1114
        %1116 = vmatprep.mubr.bf16.mxu0 0
        %1117 = vmatmul.mubr.bf16.gmra.mrb[0].mxu0 %v720
        %v1118 = vpop.f32.mrb[0].mxu0
        %v1119 = vadd.f32 0.0, %v1118
        %v1120 = vpop.f32.mrb[0].mxu0
        %v1121 = vadd.f32 0.0, %v1120
        %v1122 = vpop.f32.mrb[0].mxu0
        %v1123 = vadd.f32 0.0, %v1122
        %v1124 = vpop.f32.mrb[0].mxu0
        %v1125 = vadd.f32 0.0, %v1124
        %1126 = vmatprep.mubr.bf16.mxu0 0
        %1127 = vmatmul.mubr.bf16.gmra.mrb[0].mxu0 %v723
        %v1128 = vpop.f32.mrb[0].mxu0
        %v1129 = vadd.f32 0.0, %v1128
        %v1130 = vpop.f32.mrb[0].mxu0
        %v1131 = vadd.f32 0.0, %v1130
        %v1132 = vpop.f32.mrb[0].mxu0
        %v1133 = vadd.f32 0.0, %v1132
        %v1134 = vpop.f32.mrb[0].mxu0
        %v1135 = vadd.f32 0.0, %v1134
        %1136 = vmatprep.mubr.bf16.mxu0 0
        %1137 = vmatmul.mubr.bf16.gmra.mrb[0].mxu0 %v726
        %v1138 = vpop.f32.mrb[0].mxu0
        %v1139 = vadd.f32 0.0, %v1138
        %v1140 = vpop.f32.mrb[0].mxu0
        %v1141 = vadd.f32 0.0, %v1140
        %v1142 = vpop.f32.mrb[0].mxu0
        %v1143 = vadd.f32 0.0, %v1142
        %v1144 = vpop.f32.mrb[0].mxu0
        %v1145 = vadd.f32 0.0, %v1144
        %1146 = vmatprep.mubr.bf16.mxu0 0
        %1147 = vmatmul.mubr.bf16.gmra.mrb[0].mxu0 %v729
        %v1148 = vpop.f32.mrb[0].mxu0
        %v1149 = vadd.f32 0.0, %v1148
        %v1150 = vpop.f32.mrb[0].mxu0
        %v1151 = vadd.f32 0.0, %v1150
        %v1152 = vpop.f32.mrb[0].mxu0
        %v1153 = vadd.f32 0.0, %v1152
        %v1154 = vpop.f32.mrb[0].mxu0
        %v1155 = vadd.f32 0.0, %v1154
        %1156 = vdwg.mxu0
        %1157 = vmatprep.subr.bf16.mxu0 %v651
        %1158 = vmatpush1.bf16.msra.mxu0 %v650
        %1159 = vmatprep.subr.bf16.mxu0 %v751
        %1160 = vmatpush1.bf16.msra.mxu0 %v748
        %1161 = vmatprep.subr.bf16.mxu0 0
        %1162 = vmatpush1.bf16.msra.mxu0 0
        %1163 = vmatprep.subr.bf16.mxu0 0
        %1164 = vmatpush1.bf16.msra.mxu0 0
        %1165 = vmatprep.subr.bf16.mxu0 0
        %1166 = vmatpush1.bf16.msra.mxu0 0
        %1167 = vmatprep.subr.bf16.mxu0 0
        %1168 = vmatpush1.bf16.msra.mxu0 0
        %1169 = vmatprep.subr.bf16.mxu0 0
        %1170 = vmatpush1.bf16.msra.mxu0 0
        %1171 = vmatprep.subr.bf16.mxu0 0
        %1172 = vmatpush1.bf16.msra.mxu0 0
        %1173 = vmatprep.subr.bf16.mxu0 0
        %1174 = vmatpush1.bf16.msra.mxu0 0
        %1175 = vmatprep.subr.bf16.mxu0 0
        %1176 = vmatpush1.bf16.msra.mxu0 0
        %1177 = vmatprep.subr.bf16.mxu0 0
        %1178 = vmatpush1.bf16.msra.mxu0 0
        %1179 = vmatprep.subr.bf16.mxu0 0
        %1180 = vmatpush1.bf16.msra.mxu0 0
        %1181 = vmatprep.subr.bf16.mxu0 0
        %1182 = vmatpush1.bf16.msra.mxu0 0
        %1183 = vmatprep.subr.bf16.mxu0 0
        %1184 = vmatpush1.bf16.msra.mxu0 0
        %1185 = vmatprep.subr.bf16.mxu0 0
        %1186 = vmatpush1.bf16.msra.mxu0 0
        %1187 = vmatprep.subr.bf16.mxu0 0
        %1188 = vmatpush1.bf16.msra.mxu0 0
        %1189 = vmatprep.mubr.bf16.mxu0 0
        %1190 = vmatmul.mubr.bf16.gmra.mrb[0].mxu0 %v684
        %v1191 = vpop.f32.mrb[0].mxu0
        %v1192 = vadd.f32 0.0, %v1191
        %v1193 = vpop.f32.mrb[0].mxu0
        %v1194 = vadd.f32 0.0, %v1193
        %v1195 = vpop.f32.mrb[0].mxu0
        %v1196 = vadd.f32 0.0, %v1195
        %v1197 = vpop.f32.mrb[0].mxu0
        %v1198 = vadd.f32 0.0, %v1197
        %1199 = vmatprep.mubr.bf16.mxu0 0
        %1200 = vmatmul.mubr.bf16.gmra.mrb[0].mxu0 %v687
        %v1201 = vpop.f32.mrb[0].mxu0
        %v1202 = vadd.f32 0.0, %v1201
        %v1203 = vpop.f32.mrb[0].mxu0
        %v1204 = vadd.f32 0.0, %v1203
        %v1205 = vpop.f32.mrb[0].mxu0
        %v1206 = vadd.f32 0.0, %v1205
        %v1207 = vpop.f32.mrb[0].mxu0
        %v1208 = vadd.f32 0.0, %v1207
        %1209 = vmatprep.mubr.bf16.mxu0 0
        %1210 = vmatmul.mubr.bf16.gmra.mrb[0].mxu0 %v690
        %v1211 = vpop.f32.mrb[0].mxu0
        %v1212 = vadd.f32 0.0, %v1211
        %v1213 = vpop.f32.mrb[0].mxu0
        %v1214 = vadd.f32 0.0, %v1213
        %v1215 = vpop.f32.mrb[0].mxu0
        %v1216 = vadd.f32 0.0, %v1215
        %v1217 = vpop.f32.mrb[0].mxu0
        %v1218 = vadd.f32 0.0, %v1217
        %1219 = vmatprep.mubr.bf16.mxu0 0
        %1220 = vmatmul.mubr.bf16.gmra.mrb[0].mxu0 %v693
        %v1221 = vpop.f32.mrb[0].mxu0
        %v1222 = vadd.f32 0.0, %v1221
        %v1223 = vpop.f32.mrb[0].mxu0
        %v1224 = vadd.f32 0.0, %v1223
        %v1225 = vpop.f32.mrb[0].mxu0
        %v1226 = vadd.f32 0.0, %v1225
        %v1227 = vpop.f32.mrb[0].mxu0
        %v1228 = vadd.f32 0.0, %v1227
        %1229 = vmatprep.mubr.bf16.mxu0 0
        %1230 = vmatmul.mubr.bf16.gmra.mrb[0].mxu0 %v696
        %v1231 = vpop.f32.mrb[0].mxu0
        %v1232 = vadd.f32 0.0, %v1231
        %v1233 = vpop.f32.mrb[0].mxu0
        %v1234 = vadd.f32 0.0, %v1233
        %v1235 = vpop.f32.mrb[0].mxu0
        %v1236 = vadd.f32 0.0, %v1235
        %v1237 = vpop.f32.mrb[0].mxu0
        %v1238 = vadd.f32 0.0, %v1237
        %1239 = vmatprep.mubr.bf16.mxu0 0
        %1240 = vmatmul.mubr.bf16.gmra.mrb[0].mxu0 %v699
        %v1241 = vpop.f32.mrb[0].mxu0
        %v1242 = vadd.f32 0.0, %v1241
        %v1243 = vpop.f32.mrb[0].mxu0
        %v1244 = vadd.f32 0.0, %v1243
        %v1245 = vpop.f32.mrb[0].mxu0
        %v1246 = vadd.f32 0.0, %v1245
        %v1247 = vpop.f32.mrb[0].mxu0
        %v1248 = vadd.f32 0.0, %v1247
        %1249 = vmatprep.mubr.bf16.mxu0 0
        %1250 = vmatmul.mubr.bf16.gmra.mrb[0].mxu0 %v702
        %v1251 = vpop.f32.mrb[0].mxu0
        %v1252 = vadd.f32 0.0, %v1251
        %v1253 = vpop.f32.mrb[0].mxu0
        %v1254 = vadd.f32 0.0, %v1253
        %v1255 = vpop.f32.mrb[0].mxu0
        %v1256 = vadd.f32 0.0, %v1255
        %v1257 = vpop.f32.mrb[0].mxu0
        %v1258 = vadd.f32 0.0, %v1257
        %1259 = vmatprep.mubr.bf16.mxu0 0
        %1260 = vmatmul.mubr.bf16.gmra.mrb[0].mxu0 %v705
        %v1261 = vpop.f32.mrb[0].mxu0
        %v1262 = vadd.f32 0.0, %v1261
        %v1263 = vpop.f32.mrb[0].mxu0
        %v1264 = vadd.f32 0.0, %v1263
        %v1265 = vpop.f32.mrb[0].mxu0
        %v1266 = vadd.f32 0.0, %v1265
        %v1267 = vpop.f32.mrb[0].mxu0
        %v1268 = vadd.f32 0.0, %v1267
        %1269 = vmatprep.mubr.bf16.mxu0 0
        %1270 = vmatmul.mubr.bf16.gmra.mrb[0].mxu0 %v708
        %v1271 = vpop.f32.mrb[0].mxu0
        %v1272 = vadd.f32 0.0, %v1271
        %v1273 = vpop.f32.mrb[0].mxu0
        %v1274 = vadd.f32 0.0, %v1273
        %v1275 = vpop.f32.mrb[0].mxu0
        %v1276 = vadd.f32 0.0, %v1275
        %v1277 = vpop.f32.mrb[0].mxu0
        %v1278 = vadd.f32 0.0, %v1277
        %1279 = vmatprep.mubr.bf16.mxu0 0
        %1280 = vmatmul.mubr.bf16.gmra.mrb[0].mxu0 %v711
        %v1281 = vpop.f32.mrb[0].mxu0
        %v1282 = vadd.f32 0.0, %v1281
        %v1283 = vpop.f32.mrb[0].mxu0
        %v1284 = vadd.f32 0.0, %v1283
        %v1285 = vpop.f32.mrb[0].mxu0
        %v1286 = vadd.f32 0.0, %v1285
        %v1287 = vpop.f32.mrb[0].mxu0
        %v1288 = vadd.f32 0.0, %v1287
        %1289 = vmatprep.mubr.bf16.mxu0 0
        %1290 = vmatmul.mubr.bf16.gmra.mrb[0].mxu0 %v714
        %v1291 = vpop.f32.mrb[0].mxu0
        %v1292 = vadd.f32 0.0, %v1291
        %v1293 = vpop.f32.mrb[0].mxu0
        %v1294 = vadd.f32 0.0, %v1293
        %v1295 = vpop.f32.mrb[0].mxu0
        %v1296 = vadd.f32 0.0, %v1295
        %v1297 = vpop.f32.mrb[0].mxu0
        %v1298 = vadd.f32 0.0, %v1297
        %1299 = vmatprep.mubr.bf16.mxu0 0
        %1300 = vmatmul.mubr.bf16.gmra.mrb[0].mxu0 %v717
        %v1301 = vpop.f32.mrb[0].mxu0
        %v1302 = vadd.f32 0.0, %v1301
        %v1303 = vpop.f32.mrb[0].mxu0
        %v1304 = vadd.f32 0.0, %v1303
        %v1305 = vpop.f32.mrb[0].mxu0
        %v1306 = vadd.f32 0.0, %v1305
        %v1307 = vpop.f32.mrb[0].mxu0
        %v1308 = vadd.f32 0.0, %v1307
        %1309 = vmatprep.mubr.bf16.mxu0 0
        %1310 = vmatmul.mubr.bf16.gmra.mrb[0].mxu0 %v720
        %v1311 = vpop.f32.mrb[0].mxu0
        %v1312 = vadd.f32 0.0, %v1311
        %v1313 = vpop.f32.mrb[0].mxu0
        %v1314 = vadd.f32 0.0, %v1313
        %v1315 = vpop.f32.mrb[0].mxu0
        %v1316 = vadd.f32 0.0, %v1315
        %v1317 = vpop.f32.mrb[0].mxu0
        %v1318 = vadd.f32 0.0, %v1317
        %1319 = vmatprep.mubr.bf16.mxu0 0
        %1320 = vmatmul.mubr.bf16.gmra.mrb[0].mxu0 %v723
        %v1321 = vpop.f32.mrb[0].mxu0
        %v1322 = vadd.f32 0.0, %v1321
        %v1323 = vpop.f32.mrb[0].mxu0
        %v1324 = vadd.f32 0.0, %v1323
        %v1325 = vpop.f32.mrb[0].mxu0
        %v1326 = vadd.f32 0.0, %v1325
        %v1327 = vpop.f32.mrb[0].mxu0
        %v1328 = vadd.f32 0.0, %v1327
        %1329 = vmatprep.mubr.bf16.mxu0 0
        %1330 = vmatmul.mubr.bf16.gmra.mrb[0].mxu0 %v726
        %v1331 = vpop.f32.mrb[0].mxu0
        %v1332 = vadd.f32 0.0, %v1331
        %v1333 = vpop.f32.mrb[0].mxu0
        %v1334 = vadd.f32 0.0, %v1333
        %v1335 = vpop.f32.mrb[0].mxu0
        %v1336 = vadd.f32 0.0, %v1335
        %v1337 = vpop.f32.mrb[0].mxu0
        %v1338 = vadd.f32 0.0, %v1337
        %1339 = vmatprep.mubr.bf16.mxu0 0
        %1340 = vmatmul.mubr.bf16.gmra.mrb[0].mxu0 %v729
        %v1341 = vpop.f32.mrb[0].mxu0
        %v1342 = vadd.f32 0.0, %v1341
        %v1343 = vpop.f32.mrb[0].mxu0
        %v1344 = vadd.f32 0.0, %v1343
        %v1345 = vpop.f32.mrb[0].mxu0
        %v1346 = vadd.f32 0.0, %v1345
        %v1347 = vpop.f32.mrb[0].mxu0
        %v1348 = vadd.f32 0.0, %v1347
        %1349 = vdwg.mxu0
        %1350 = vmatprep.subr.bf16.mxu0 %v653
        %1351 = vmatpush1.bf16.msra.mxu0 %v652
        %1352 = vmatprep.subr.bf16.mxu0 %v757
        %1353 = vmatpush1.bf16.msra.mxu0 %v754
        %1354 = vmatprep.subr.bf16.mxu0 0
        %1355 = vmatpush1.bf16.msra.mxu0 0
        %1356 = vmatprep.subr.bf16.mxu0 0
        %1357 = vmatpush1.bf16.msra.mxu0 0
        %1358 = vmatprep.subr.bf16.mxu0 0
        %1359 = vmatpush1.bf16.msra.mxu0 0
        %1360 = vmatprep.subr.bf16.mxu0 0
        %1361 = vmatpush1.bf16.msra.mxu0 0
        %1362 = vmatprep.subr.bf16.mxu0 0
        %1363 = vmatpush1.bf16.msra.mxu0 0
        %1364 = vmatprep.subr.bf16.mxu0 0
        %1365 = vmatpush1.bf16.msra.mxu0 0
        %1366 = vmatprep.subr.bf16.mxu0 0
        %1367 = vmatpush1.bf16.msra.mxu0 0
        %1368 = vmatprep.subr.bf16.mxu0 0
        %1369 = vmatpush1.bf16.msra.mxu0 0
        %1370 = vmatprep.subr.bf16.mxu0 0
        %1371 = vmatpush1.bf16.msra.mxu0 0
        %1372 = vmatprep.subr.bf16.mxu0 0
        %1373 = vmatpush1.bf16.msra.mxu0 0
        %1374 = vmatprep.subr.bf16.mxu0 0
        %1375 = vmatpush1.bf16.msra.mxu0 0
        %1376 = vmatprep.subr.bf16.mxu0 0
        %1377 = vmatpush1.bf16.msra.mxu0 0
        %1378 = vmatprep.subr.bf16.mxu0 0
        %1379 = vmatpush1.bf16.msra.mxu0 0
        %1380 = vmatprep.subr.bf16.mxu0 0
        %1381 = vmatpush1.bf16.msra.mxu0 0
        %1382 = vmatprep.mubr.bf16.mxu0 0
        %1383 = vmatmul.mubr.bf16.gmra.mrb[0].mxu0 %v684
        %v1384 = vpop.f32.mrb[0].mxu0
        %v1385 = vadd.f32 0.0, %v1384
        %v1386 = vpop.f32.mrb[0].mxu0
        %v1387 = vadd.f32 0.0, %v1386
        %v1388 = vpop.f32.mrb[0].mxu0
        %v1389 = vadd.f32 0.0, %v1388
        %v1390 = vpop.f32.mrb[0].mxu0
        %v1391 = vadd.f32 0.0, %v1390
        %1392 = vmatprep.mubr.bf16.mxu0 0
        %1393 = vmatmul.mubr.bf16.gmra.mrb[0].mxu0 %v687
        %v1394 = vpop.f32.mrb[0].mxu0
        %v1395 = vadd.f32 0.0, %v1394
        %v1396 = vpop.f32.mrb[0].mxu0
        %v1397 = vadd.f32 0.0, %v1396
        %v1398 = vpop.f32.mrb[0].mxu0
        %v1399 = vadd.f32 0.0, %v1398
        %v1400 = vpop.f32.mrb[0].mxu0
        %v1401 = vadd.f32 0.0, %v1400
        %1402 = vmatprep.mubr.bf16.mxu0 0
        %1403 = vmatmul.mubr.bf16.gmra.mrb[0].mxu0 %v690
        %v1404 = vpop.f32.mrb[0].mxu0
        %v1405 = vadd.f32 0.0, %v1404
        %v1406 = vpop.f32.mrb[0].mxu0
        %v1407 = vadd.f32 0.0, %v1406
        %v1408 = vpop.f32.mrb[0].mxu0
        %v1409 = vadd.f32 0.0, %v1408
        %v1410 = vpop.f32.mrb[0].mxu0
        %v1411 = vadd.f32 0.0, %v1410
        %1412 = vmatprep.mubr.bf16.mxu0 0
        %1413 = vmatmul.mubr.bf16.gmra.mrb[0].mxu0 %v693
        %v1414 = vpop.f32.mrb[0].mxu0
        %v1415 = vadd.f32 0.0, %v1414
        %v1416 = vpop.f32.mrb[0].mxu0
        %v1417 = vadd.f32 0.0, %v1416
        %v1418 = vpop.f32.mrb[0].mxu0
        %v1419 = vadd.f32 0.0, %v1418
        %v1420 = vpop.f32.mrb[0].mxu0
        %v1421 = vadd.f32 0.0, %v1420
        %1422 = vmatprep.mubr.bf16.mxu0 0
        %1423 = vmatmul.mubr.bf16.gmra.mrb[0].mxu0 %v696
        %v1424 = vpop.f32.mrb[0].mxu0
        %v1425 = vadd.f32 0.0, %v1424
        %v1426 = vpop.f32.mrb[0].mxu0
        %v1427 = vadd.f32 0.0, %v1426
        %v1428 = vpop.f32.mrb[0].mxu0
        %v1429 = vadd.f32 0.0, %v1428
        %v1430 = vpop.f32.mrb[0].mxu0
        %v1431 = vadd.f32 0.0, %v1430
        %1432 = vmatprep.mubr.bf16.mxu0 0
        %1433 = vmatmul.mubr.bf16.gmra.mrb[0].mxu0 %v699
        %v1434 = vpop.f32.mrb[0].mxu0
        %v1435 = vadd.f32 0.0, %v1434
        %v1436 = vpop.f32.mrb[0].mxu0
        %v1437 = vadd.f32 0.0, %v1436
        %v1438 = vpop.f32.mrb[0].mxu0
        %v1439 = vadd.f32 0.0, %v1438
        %v1440 = vpop.f32.mrb[0].mxu0
        %v1441 = vadd.f32 0.0, %v1440
        %1442 = vmatprep.mubr.bf16.mxu0 0
        %1443 = vmatmul.mubr.bf16.gmra.mrb[0].mxu0 %v702
        %v1444 = vpop.f32.mrb[0].mxu0
        %v1445 = vadd.f32 0.0, %v1444
        %v1446 = vpop.f32.mrb[0].mxu0
        %v1447 = vadd.f32 0.0, %v1446
        %v1448 = vpop.f32.mrb[0].mxu0
        %v1449 = vadd.f32 0.0, %v1448
        %v1450 = vpop.f32.mrb[0].mxu0
        %v1451 = vadd.f32 0.0, %v1450
        %1452 = vmatprep.mubr.bf16.mxu0 0
        %1453 = vmatmul.mubr.bf16.gmra.mrb[0].mxu0 %v705
        %v1454 = vpop.f32.mrb[0].mxu0
        %v1455 = vadd.f32 0.0, %v1454
        %v1456 = vpop.f32.mrb[0].mxu0
        %v1457 = vadd.f32 0.0, %v1456
        %v1458 = vpop.f32.mrb[0].mxu0
        %v1459 = vadd.f32 0.0, %v1458
        %v1460 = vpop.f32.mrb[0].mxu0
        %v1461 = vadd.f32 0.0, %v1460
        %1462 = vmatprep.mubr.bf16.mxu0 0
        %1463 = vmatmul.mubr.bf16.gmra.mrb[0].mxu0 %v708
        %v1464 = vpop.f32.mrb[0].mxu0
        %v1465 = vadd.f32 0.0, %v1464
        %v1466 = vpop.f32.mrb[0].mxu0
        %v1467 = vadd.f32 0.0, %v1466
        %v1468 = vpop.f32.mrb[0].mxu0
        %v1469 = vadd.f32 0.0, %v1468
        %v1470 = vpop.f32.mrb[0].mxu0
        %v1471 = vadd.f32 0.0, %v1470
        %1472 = vmatprep.mubr.bf16.mxu0 0
        %1473 = vmatmul.mubr.bf16.gmra.mrb[0].mxu0 %v711
        %v1474 = vpop.f32.mrb[0].mxu0
        %v1475 = vadd.f32 0.0, %v1474
        %v1476 = vpop.f32.mrb[0].mxu0
        %v1477 = vadd.f32 0.0, %v1476
        %v1478 = vpop.f32.mrb[0].mxu0
        %v1479 = vadd.f32 0.0, %v1478
        %v1480 = vpop.f32.mrb[0].mxu0
        %v1481 = vadd.f32 0.0, %v1480
        %1482 = vmatprep.mubr.bf16.mxu0 0
        %1483 = vmatmul.mubr.bf16.gmra.mrb[0].mxu0 %v714
        %v1484 = vpop.f32.mrb[0].mxu0
        %v1485 = vadd.f32 0.0, %v1484
        %v1486 = vpop.f32.mrb[0].mxu0
        %v1487 = vadd.f32 0.0, %v1486
        %v1488 = vpop.f32.mrb[0].mxu0
        %v1489 = vadd.f32 0.0, %v1488
        %v1490 = vpop.f32.mrb[0].mxu0
        %v1491 = vadd.f32 0.0, %v1490
        %1492 = vmatprep.mubr.bf16.mxu0 0
        %1493 = vmatmul.mubr.bf16.gmra.mrb[0].mxu0 %v717
        %v1494 = vpop.f32.mrb[0].mxu0
        %v1495 = vadd.f32 0.0, %v1494
        %v1496 = vpop.f32.mrb[0].mxu0
        %v1497 = vadd.f32 0.0, %v1496
        %v1498 = vpop.f32.mrb[0].mxu0
        %v1499 = vadd.f32 0.0, %v1498
        %v1500 = vpop.f32.mrb[0].mxu0
        %v1501 = vadd.f32 0.0, %v1500
        %1502 = vmatprep.mubr.bf16.mxu0 0
        %1503 = vmatmul.mubr.bf16.gmra.mrb[0].mxu0 %v720
        %v1504 = vpop.f32.mrb[0].mxu0
        %v1505 = vadd.f32 0.0, %v1504
        %v1506 = vpop.f32.mrb[0].mxu0
        %v1507 = vadd.f32 0.0, %v1506
        %v1508 = vpop.f32.mrb[0].mxu0
        %v1509 = vadd.f32 0.0, %v1508
        %v1510 = vpop.f32.mrb[0].mxu0
        %v1511 = vadd.f32 0.0, %v1510
        %1512 = vmatprep.mubr.bf16.mxu0 0
        %1513 = vmatmul.mubr.bf16.gmra.mrb[0].mxu0 %v723
        %v1514 = vpop.f32.mrb[0].mxu0
        %v1515 = vadd.f32 0.0, %v1514
        %v1516 = vpop.f32.mrb[0].mxu0
        %v1517 = vadd.f32 0.0, %v1516
        %v1518 = vpop.f32.mrb[0].mxu0
        %v1519 = vadd.f32 0.0, %v1518
        %v1520 = vpop.f32.mrb[0].mxu0
        %v1521 = vadd.f32 0.0, %v1520
        %1522 = vmatprep.mubr.bf16.mxu0 0
        %1523 = vmatmul.mubr.bf16.gmra.mrb[0].mxu0 %v726
        %v1524 = vpop.f32.mrb[0].mxu0
        %v1525 = vadd.f32 0.0, %v1524
        %v1526 = vpop.f32.mrb[0].mxu0
        %v1527 = vadd.f32 0.0, %v1526
        %v1528 = vpop.f32.mrb[0].mxu0
        %v1529 = vadd.f32 0.0, %v1528
        %v1530 = vpop.f32.mrb[0].mxu0
        %v1531 = vadd.f32 0.0, %v1530
        %1532 = vmatprep.mubr.bf16.mxu0 0
        %1533 = vmatmul.mubr.bf16.gmra.mrb[0].mxu0 %v729
        %v1534 = vpop.f32.mrb[0].mxu0
        %v1535 = vadd.f32 0.0, %v1534
        %v1536 = vpop.f32.mrb[0].mxu0
        %v1537 = vadd.f32 0.0, %v1536
        %v1538 = vpop.f32.mrb[0].mxu0
        %v1539 = vadd.f32 0.0, %v1538
        %v1540 = vpop.f32.mrb[0].mxu0
        %v1541 = vadd.f32 0.0, %v1540
        %1542 = vdwg.mxu0
        %1543 = vmatprep.subr.bf16.mxu0 %v655
        %1544 = vmatpush1.bf16.msra.mxu0 %v654
        %1545 = vmatprep.subr.bf16.mxu0 %v763
        %1546 = vmatpush1.bf16.msra.mxu0 %v760
        %1547 = vmatprep.subr.bf16.mxu0 0
        %1548 = vmatpush1.bf16.msra.mxu0 0
        %1549 = vmatprep.subr.bf16.mxu0 0
        %1550 = vmatpush1.bf16.msra.mxu0 0
        %1551 = vmatprep.subr.bf16.mxu0 0
        %1552 = vmatpush1.bf16.msra.mxu0 0
        %1553 = vmatprep.subr.bf16.mxu0 0
        %1554 = vmatpush1.bf16.msra.mxu0 0
        %1555 = vmatprep.subr.bf16.mxu0 0
        %1556 = vmatpush1.bf16.msra.mxu0 0
        %1557 = vmatprep.subr.bf16.mxu0 0
        %1558 = vmatpush1.bf16.msra.mxu0 0
        %1559 = vmatprep.subr.bf16.mxu0 0
        %1560 = vmatpush1.bf16.msra.mxu0 0
        %1561 = vmatprep.subr.bf16.mxu0 0
        %1562 = vmatpush1.bf16.msra.mxu0 0
        %1563 = vmatprep.subr.bf16.mxu0 0
        %1564 = vmatpush1.bf16.msra.mxu0 0
        %1565 = vmatprep.subr.bf16.mxu0 0
        %1566 = vmatpush1.bf16.msra.mxu0 0
        %1567 = vmatprep.subr.bf16.mxu0 0
        %1568 = vmatpush1.bf16.msra.mxu0 0
        %1569 = vmatprep.subr.bf16.mxu0 0
        %1570 = vmatpush1.bf16.msra.mxu0 0
        %1571 = vmatprep.subr.bf16.mxu0 0
        %1572 = vmatpush1.bf16.msra.mxu0 0
        %1573 = vmatprep.subr.bf16.mxu0 0
        %1574 = vmatpush1.bf16.msra.mxu0 0
        %1575 = vmatprep.mubr.bf16.mxu0 0
        %1576 = vmatmul.mubr.bf16.gmra.mrb[0].mxu0 %v684
        %v1577 = vpop.f32.mrb[0].mxu0
        %v1578 = vadd.f32 0.0, %v1577
        %v1579 = vpop.f32.mrb[0].mxu0
        %v1580 = vadd.f32 0.0, %v1579
        %v1581 = vpop.f32.mrb[0].mxu0
        %v1582 = vadd.f32 0.0, %v1581
        %v1583 = vpop.f32.mrb[0].mxu0
        %v1584 = vadd.f32 0.0, %v1583
        %1585 = vmatprep.mubr.bf16.mxu0 0
        %1586 = vmatmul.mubr.bf16.gmra.mrb[0].mxu0 %v687
        %v1587 = vpop.f32.mrb[0].mxu0
        %v1588 = vadd.f32 0.0, %v1587
        %v1589 = vpop.f32.mrb[0].mxu0
        %v1590 = vadd.f32 0.0, %v1589
        %v1591 = vpop.f32.mrb[0].mxu0
        %v1592 = vadd.f32 0.0, %v1591
        %v1593 = vpop.f32.mrb[0].mxu0
        %v1594 = vadd.f32 0.0, %v1593
        %1595 = vmatprep.mubr.bf16.mxu0 0
        %1596 = vmatmul.mubr.bf16.gmra.mrb[0].mxu0 %v690
        %v1597 = vpop.f32.mrb[0].mxu0
        %v1598 = vadd.f32 0.0, %v1597
        %v1599 = vpop.f32.mrb[0].mxu0
        %v1600 = vadd.f32 0.0, %v1599
        %v1601 = vpop.f32.mrb[0].mxu0
        %v1602 = vadd.f32 0.0, %v1601
        %v1603 = vpop.f32.mrb[0].mxu0
        %v1604 = vadd.f32 0.0, %v1603
        %1605 = vmatprep.mubr.bf16.mxu0 0
        %1606 = vmatmul.mubr.bf16.gmra.mrb[0].mxu0 %v693
        %v1607 = vpop.f32.mrb[0].mxu0
        %v1608 = vadd.f32 0.0, %v1607
        %v1609 = vpop.f32.mrb[0].mxu0
        %v1610 = vadd.f32 0.0, %v1609
        %v1611 = vpop.f32.mrb[0].mxu0
        %v1612 = vadd.f32 0.0, %v1611
        %v1613 = vpop.f32.mrb[0].mxu0
        %v1614 = vadd.f32 0.0, %v1613
        %1615 = vmatprep.mubr.bf16.mxu0 0
        %1616 = vmatmul.mubr.bf16.gmra.mrb[0].mxu0 %v696
        %v1617 = vpop.f32.mrb[0].mxu0
        %v1618 = vadd.f32 0.0, %v1617
        %v1619 = vpop.f32.mrb[0].mxu0
        %v1620 = vadd.f32 0.0, %v1619
        %v1621 = vpop.f32.mrb[0].mxu0
        %v1622 = vadd.f32 0.0, %v1621
        %v1623 = vpop.f32.mrb[0].mxu0
        %v1624 = vadd.f32 0.0, %v1623
        %1625 = vmatprep.mubr.bf16.mxu0 0
        %1626 = vmatmul.mubr.bf16.gmra.mrb[0].mxu0 %v699
        %v1627 = vpop.f32.mrb[0].mxu0
        %v1628 = vadd.f32 0.0, %v1627
        %v1629 = vpop.f32.mrb[0].mxu0
        %v1630 = vadd.f32 0.0, %v1629
        %v1631 = vpop.f32.mrb[0].mxu0
        %v1632 = vadd.f32 0.0, %v1631
        %v1633 = vpop.f32.mrb[0].mxu0
        %v1634 = vadd.f32 0.0, %v1633
        %1635 = vmatprep.mubr.bf16.mxu0 0
        %1636 = vmatmul.mubr.bf16.gmra.mrb[0].mxu0 %v702
        %v1637 = vpop.f32.mrb[0].mxu0
        %v1638 = vadd.f32 0.0, %v1637
        %v1639 = vpop.f32.mrb[0].mxu0
        %v1640 = vadd.f32 0.0, %v1639
        %v1641 = vpop.f32.mrb[0].mxu0
        %v1642 = vadd.f32 0.0, %v1641
        %v1643 = vpop.f32.mrb[0].mxu0
        %v1644 = vadd.f32 0.0, %v1643
        %1645 = vmatprep.mubr.bf16.mxu0 0
        %1646 = vmatmul.mubr.bf16.gmra.mrb[0].mxu0 %v705
        %v1647 = vpop.f32.mrb[0].mxu0
        %v1648 = vadd.f32 0.0, %v1647
        %v1649 = vpop.f32.mrb[0].mxu0
        %v1650 = vadd.f32 0.0, %v1649
        %v1651 = vpop.f32.mrb[0].mxu0
        %v1652 = vadd.f32 0.0, %v1651
        %v1653 = vpop.f32.mrb[0].mxu0
        %v1654 = vadd.f32 0.0, %v1653
        %1655 = vmatprep.mubr.bf16.mxu0 0
        %1656 = vmatmul.mubr.bf16.gmra.mrb[0].mxu0 %v708
        %v1657 = vpop.f32.mrb[0].mxu0
        %v1658 = vadd.f32 0.0, %v1657
        %v1659 = vpop.f32.mrb[0].mxu0
        %v1660 = vadd.f32 0.0, %v1659
        %v1661 = vpop.f32.mrb[0].mxu0
        %v1662 = vadd.f32 0.0, %v1661
        %v1663 = vpop.f32.mrb[0].mxu0
        %v1664 = vadd.f32 0.0, %v1663
        %1665 = vmatprep.mubr.bf16.mxu0 0
        %1666 = vmatmul.mubr.bf16.gmra.mrb[0].mxu0 %v711
        %v1667 = vpop.f32.mrb[0].mxu0
        %v1668 = vadd.f32 0.0, %v1667
        %v1669 = vpop.f32.mrb[0].mxu0
        %v1670 = vadd.f32 0.0, %v1669
        %v1671 = vpop.f32.mrb[0].mxu0
        %v1672 = vadd.f32 0.0, %v1671
        %v1673 = vpop.f32.mrb[0].mxu0
        %v1674 = vadd.f32 0.0, %v1673
        %1675 = vmatprep.mubr.bf16.mxu0 0
        %1676 = vmatmul.mubr.bf16.gmra.mrb[0].mxu0 %v714
        %v1677 = vpop.f32.mrb[0].mxu0
        %v1678 = vadd.f32 0.0, %v1677
        %v1679 = vpop.f32.mrb[0].mxu0
        %v1680 = vadd.f32 0.0, %v1679
        %v1681 = vpop.f32.mrb[0].mxu0
        %v1682 = vadd.f32 0.0, %v1681
        %v1683 = vpop.f32.mrb[0].mxu0
        %v1684 = vadd.f32 0.0, %v1683
        %1685 = vmatprep.mubr.bf16.mxu0 0
        %1686 = vmatmul.mubr.bf16.gmra.mrb[0].mxu0 %v717
        %v1687 = vpop.f32.mrb[0].mxu0
        %v1688 = vadd.f32 0.0, %v1687
        %v1689 = vpop.f32.mrb[0].mxu0
        %v1690 = vadd.f32 0.0, %v1689
        %v1691 = vpop.f32.mrb[0].mxu0
        %v1692 = vadd.f32 0.0, %v1691
        %v1693 = vpop.f32.mrb[0].mxu0
        %v1694 = vadd.f32 0.0, %v1693
        %1695 = vmatprep.mubr.bf16.mxu0 0
        %1696 = vmatmul.mubr.bf16.gmra.mrb[0].mxu0 %v720
        %v1697 = vpop.f32.mrb[0].mxu0
        %v1698 = vadd.f32 0.0, %v1697
        %v1699 = vpop.f32.mrb[0].mxu0
        %v1700 = vadd.f32 0.0, %v1699
        %v1701 = vpop.f32.mrb[0].mxu0
        %v1702 = vadd.f32 0.0, %v1701
        %v1703 = vpop.f32.mrb[0].mxu0
        %v1704 = vadd.f32 0.0, %v1703
        %1705 = vmatprep.mubr.bf16.mxu0 0
        %1706 = vmatmul.mubr.bf16.gmra.mrb[0].mxu0 %v723
        %v1707 = vpop.f32.mrb[0].mxu0
        %v1708 = vadd.f32 0.0, %v1707
        %v1709 = vpop.f32.mrb[0].mxu0
        %v1710 = vadd.f32 0.0, %v1709
        %v1711 = vpop.f32.mrb[0].mxu0
        %v1712 = vadd.f32 0.0, %v1711
        %v1713 = vpop.f32.mrb[0].mxu0
        %v1714 = vadd.f32 0.0, %v1713
        %1715 = vmatprep.mubr.bf16.mxu0 0
        %1716 = vmatmul.mubr.bf16.gmra.mrb[0].mxu0 %v726
        %v1717 = vpop.f32.mrb[0].mxu0
        %v1718 = vadd.f32 0.0, %v1717
        %v1719 = vpop.f32.mrb[0].mxu0
        %v1720 = vadd.f32 0.0, %v1719
        %v1721 = vpop.f32.mrb[0].mxu0
        %v1722 = vadd.f32 0.0, %v1721
        %v1723 = vpop.f32.mrb[0].mxu0
        %v1724 = vadd.f32 0.0, %v1723
        %1725 = vmatprep.mubr.bf16.mxu0 0
        %1726 = vmatmul.mubr.bf16.gmra.mrb[0].mxu0 %v729
        %v1727 = vpop.f32.mrb[0].mxu0
        %v1728 = vadd.f32 0.0, %v1727
        %v1729 = vpop.f32.mrb[0].mxu0
        %v1730 = vadd.f32 0.0, %v1729
        %v1731 = vpop.f32.mrb[0].mxu0
        %v1732 = vadd.f32 0.0, %v1731
        %v1733 = vpop.f32.mrb[0].mxu0
        %v1734 = vadd.f32 0.0, %v1733
        %1735 = vdwg.mxu0
        %1736 = vmatprep.subr.bf16.mxu0 %v657
        %1737 = vmatpush1.bf16.msra.mxu0 %v656
        %1738 = vmatprep.subr.bf16.mxu0 %v769
        %1739 = vmatpush1.bf16.msra.mxu0 %v766
        %1740 = vmatprep.subr.bf16.mxu0 0
        %1741 = vmatpush1.bf16.msra.mxu0 0
        %1742 = vmatprep.subr.bf16.mxu0 0
        %1743 = vmatpush1.bf16.msra.mxu0 0
        %1744 = vmatprep.subr.bf16.mxu0 0
        %1745 = vmatpush1.bf16.msra.mxu0 0
        %1746 = vmatprep.subr.bf16.mxu0 0
        %1747 = vmatpush1.bf16.msra.mxu0 0
        %1748 = vmatprep.subr.bf16.mxu0 0
        %1749 = vmatpush1.bf16.msra.mxu0 0
        %1750 = vmatprep.subr.bf16.mxu0 0
        %1751 = vmatpush1.bf16.msra.mxu0 0
        %1752 = vmatprep.subr.bf16.mxu0 0
        %1753 = vmatpush1.bf16.msra.mxu0 0
        %1754 = vmatprep.subr.bf16.mxu0 0
        %1755 = vmatpush1.bf16.msra.mxu0 0
        %1756 = vmatprep.subr.bf16.mxu0 0
        %1757 = vmatpush1.bf16.msra.mxu0 0
        %1758 = vmatprep.subr.bf16.mxu0 0
        %1759 = vmatpush1.bf16.msra.mxu0 0
        %1760 = vmatprep.subr.bf16.mxu0 0
        %1761 = vmatpush1.bf16.msra.mxu0 0
        %1762 = vmatprep.subr.bf16.mxu0 0
        %1763 = vmatpush1.bf16.msra.mxu0 0
        %1764 = vmatprep.subr.bf16.mxu0 0
        %1765 = vmatpush1.bf16.msra.mxu0 0
        %1766 = vmatprep.subr.bf16.mxu0 0
        %1767 = vmatpush1.bf16.msra.mxu0 0
        %1768 = vmatprep.mubr.bf16.mxu0 0
        %1769 = vmatmul.mubr.bf16.gmra.mrb[0].mxu0 %v684
        %v1770 = vpop.f32.mrb[0].mxu0
        %v1771 = vadd.f32 0.0, %v1770
        %v1772 = vpop.f32.mrb[0].mxu0
        %v1773 = vadd.f32 0.0, %v1772
        %v1774 = vpop.f32.mrb[0].mxu0
        %v1775 = vadd.f32 0.0, %v1774
        %v1776 = vpop.f32.mrb[0].mxu0
        %v1777 = vadd.f32 0.0, %v1776
        %1778 = vmatprep.mubr.bf16.mxu0 0
        %1779 = vmatmul.mubr.bf16.gmra.mrb[0].mxu0 %v687
        %v1780 = vpop.f32.mrb[0].mxu0
        %v1781 = vadd.f32 0.0, %v1780
        %v1782 = vpop.f32.mrb[0].mxu0
        %v1783 = vadd.f32 0.0, %v1782
        %v1784 = vpop.f32.mrb[0].mxu0
        %v1785 = vadd.f32 0.0, %v1784
        %v1786 = vpop.f32.mrb[0].mxu0
        %v1787 = vadd.f32 0.0, %v1786
        %1788 = vmatprep.mubr.bf16.mxu0 0
        %1789 = vmatmul.mubr.bf16.gmra.mrb[0].mxu0 %v690
        %v1790 = vpop.f32.mrb[0].mxu0
        %v1791 = vadd.f32 0.0, %v1790
        %v1792 = vpop.f32.mrb[0].mxu0
        %v1793 = vadd.f32 0.0, %v1792
        %v1794 = vpop.f32.mrb[0].mxu0
        %v1795 = vadd.f32 0.0, %v1794
        %v1796 = vpop.f32.mrb[0].mxu0
        %v1797 = vadd.f32 0.0, %v1796
        %1798 = vmatprep.mubr.bf16.mxu0 0
        %1799 = vmatmul.mubr.bf16.gmra.mrb[0].mxu0 %v693
        %v1800 = vpop.f32.mrb[0].mxu0
        %v1801 = vadd.f32 0.0, %v1800
        %v1802 = vpop.f32.mrb[0].mxu0
        %v1803 = vadd.f32 0.0, %v1802
        %v1804 = vpop.f32.mrb[0].mxu0
        %v1805 = vadd.f32 0.0, %v1804
        %v1806 = vpop.f32.mrb[0].mxu0
        %v1807 = vadd.f32 0.0, %v1806
        %1808 = vmatprep.mubr.bf16.mxu0 0
        %1809 = vmatmul.mubr.bf16.gmra.mrb[0].mxu0 %v696
        %v1810 = vpop.f32.mrb[0].mxu0
        %v1811 = vadd.f32 0.0, %v1810
        %v1812 = vpop.f32.mrb[0].mxu0
        %v1813 = vadd.f32 0.0, %v1812
        %v1814 = vpop.f32.mrb[0].mxu0
        %v1815 = vadd.f32 0.0, %v1814
        %v1816 = vpop.f32.mrb[0].mxu0
        %v1817 = vadd.f32 0.0, %v1816
        %1818 = vmatprep.mubr.bf16.mxu0 0
        %1819 = vmatmul.mubr.bf16.gmra.mrb[0].mxu0 %v699
        %v1820 = vpop.f32.mrb[0].mxu0
        %v1821 = vadd.f32 0.0, %v1820
        %v1822 = vpop.f32.mrb[0].mxu0
        %v1823 = vadd.f32 0.0, %v1822
        %v1824 = vpop.f32.mrb[0].mxu0
        %v1825 = vadd.f32 0.0, %v1824
        %v1826 = vpop.f32.mrb[0].mxu0
        %v1827 = vadd.f32 0.0, %v1826
        %1828 = vmatprep.mubr.bf16.mxu0 0
        %1829 = vmatmul.mubr.bf16.gmra.mrb[0].mxu0 %v702
        %v1830 = vpop.f32.mrb[0].mxu0
        %v1831 = vadd.f32 0.0, %v1830
        %v1832 = vpop.f32.mrb[0].mxu0
        %v1833 = vadd.f32 0.0, %v1832
        %v1834 = vpop.f32.mrb[0].mxu0
        %v1835 = vadd.f32 0.0, %v1834
        %v1836 = vpop.f32.mrb[0].mxu0
        %v1837 = vadd.f32 0.0, %v1836
        %1838 = vmatprep.mubr.bf16.mxu0 0
        %1839 = vmatmul.mubr.bf16.gmra.mrb[0].mxu0 %v705
        %v1840 = vpop.f32.mrb[0].mxu0
        %v1841 = vadd.f32 0.0, %v1840
        %v1842 = vpop.f32.mrb[0].mxu0
        %v1843 = vadd.f32 0.0, %v1842
        %v1844 = vpop.f32.mrb[0].mxu0
        %v1845 = vadd.f32 0.0, %v1844
        %v1846 = vpop.f32.mrb[0].mxu0
        %v1847 = vadd.f32 0.0, %v1846
        %1848 = vmatprep.mubr.bf16.mxu0 0
        %1849 = vmatmul.mubr.bf16.gmra.mrb[0].mxu0 %v708
        %v1850 = vpop.f32.mrb[0].mxu0
        %v1851 = vadd.f32 0.0, %v1850
        %v1852 = vpop.f32.mrb[0].mxu0
        %v1853 = vadd.f32 0.0, %v1852
        %v1854 = vpop.f32.mrb[0].mxu0
        %v1855 = vadd.f32 0.0, %v1854
        %v1856 = vpop.f32.mrb[0].mxu0
        %v1857 = vadd.f32 0.0, %v1856
        %1858 = vmatprep.mubr.bf16.mxu0 0
        %1859 = vmatmul.mubr.bf16.gmra.mrb[0].mxu0 %v711
        %v1860 = vpop.f32.mrb[0].mxu0
        %v1861 = vadd.f32 0.0, %v1860
        %v1862 = vpop.f32.mrb[0].mxu0
        %v1863 = vadd.f32 0.0, %v1862
        %v1864 = vpop.f32.mrb[0].mxu0
        %v1865 = vadd.f32 0.0, %v1864
        %v1866 = vpop.f32.mrb[0].mxu0
        %v1867 = vadd.f32 0.0, %v1866
        %1868 = vmatprep.mubr.bf16.mxu0 0
        %1869 = vmatmul.mubr.bf16.gmra.mrb[0].mxu0 %v714
        %v1870 = vpop.f32.mrb[0].mxu0
        %v1871 = vadd.f32 0.0, %v1870
        %v1872 = vpop.f32.mrb[0].mxu0
        %v1873 = vadd.f32 0.0, %v1872
        %v1874 = vpop.f32.mrb[0].mxu0
        %v1875 = vadd.f32 0.0, %v1874
        %v1876 = vpop.f32.mrb[0].mxu0
        %v1877 = vadd.f32 0.0, %v1876
        %1878 = vmatprep.mubr.bf16.mxu0 0
        %1879 = vmatmul.mubr.bf16.gmra.mrb[0].mxu0 %v717
        %v1880 = vpop.f32.mrb[0].mxu0
        %v1881 = vadd.f32 0.0, %v1880
        %v1882 = vpop.f32.mrb[0].mxu0
        %v1883 = vadd.f32 0.0, %v1882
        %v1884 = vpop.f32.mrb[0].mxu0
        %v1885 = vadd.f32 0.0, %v1884
        %v1886 = vpop.f32.mrb[0].mxu0
        %v1887 = vadd.f32 0.0, %v1886
        %1888 = vmatprep.mubr.bf16.mxu0 0
        %1889 = vmatmul.mubr.bf16.gmra.mrb[0].mxu0 %v720
        %v1890 = vpop.f32.mrb[0].mxu0
        %v1891 = vadd.f32 0.0, %v1890
        %v1892 = vpop.f32.mrb[0].mxu0
        %v1893 = vadd.f32 0.0, %v1892
        %v1894 = vpop.f32.mrb[0].mxu0
        %v1895 = vadd.f32 0.0, %v1894
        %v1896 = vpop.f32.mrb[0].mxu0
        %v1897 = vadd.f32 0.0, %v1896
        %1898 = vmatprep.mubr.bf16.mxu0 0
        %1899 = vmatmul.mubr.bf16.gmra.mrb[0].mxu0 %v723
        %v1900 = vpop.f32.mrb[0].mxu0
        %v1901 = vadd.f32 0.0, %v1900
        %v1902 = vpop.f32.mrb[0].mxu0
        %v1903 = vadd.f32 0.0, %v1902
        %v1904 = vpop.f32.mrb[0].mxu0
        %v1905 = vadd.f32 0.0, %v1904
        %v1906 = vpop.f32.mrb[0].mxu0
        %v1907 = vadd.f32 0.0, %v1906
        %1908 = vmatprep.mubr.bf16.mxu0 0
        %1909 = vmatmul.mubr.bf16.gmra.mrb[0].mxu0 %v726
        %v1910 = vpop.f32.mrb[0].mxu0
        %v1911 = vadd.f32 0.0, %v1910
        %v1912 = vpop.f32.mrb[0].mxu0
        %v1913 = vadd.f32 0.0, %v1912
        %v1914 = vpop.f32.mrb[0].mxu0
        %v1915 = vadd.f32 0.0, %v1914
        %v1916 = vpop.f32.mrb[0].mxu0
        %v1917 = vadd.f32 0.0, %v1916
        %1918 = vmatprep.mubr.bf16.mxu0 0
        %1919 = vmatmul.mubr.bf16.gmra.mrb[0].mxu0 %v729
        %v1920 = vpop.f32.mrb[0].mxu0
        %v1921 = vadd.f32 0.0, %v1920
        %v1922 = vpop.f32.mrb[0].mxu0
        %v1923 = vadd.f32 0.0, %v1922
        %v1924 = vpop.f32.mrb[0].mxu0
        %v1925 = vadd.f32 0.0, %v1924
        %v1926 = vpop.f32.mrb[0].mxu0
        %v1927 = vadd.f32 0.0, %v1926
        %1928 = vdwg.mxu0
        %v1929 = vpack.c.bf16 %v810, %v806
        %v1930 = vpack.c.bf16 %v812, %v808
        %v1931 = vpack.c.bf16 %v1003, %v999
        %v1932 = vpack.c.bf16 %v1005, %v1001
        %v1933 = vpack.c.bf16 %v1196, %v1192
        %v1934 = vpack.c.bf16 %v1198, %v1194
        %v1935 = vpack.c.bf16 %v1389, %v1385
        %v1936 = vpack.c.bf16 %v1391, %v1387
        %v1937 = vpack.c.bf16 %v1582, %v1578
        %v1938 = vpack.c.bf16 %v1584, %v1580
        %v1939 = vpack.c.bf16 %v1775, %v1771
        %v1940 = vpack.c.bf16 %v1777, %v1773
        %v1941 = vpack.c.bf16 %v820, %v816
        %v1942 = vpack.c.bf16 %v822, %v818
        %v1943 = vpack.c.bf16 %v1013, %v1009
        %v1944 = vpack.c.bf16 %v1015, %v1011
        %v1945 = vpack.c.bf16 %v1206, %v1202
        %v1946 = vpack.c.bf16 %v1208, %v1204
        %v1947 = vpack.c.bf16 %v1399, %v1395
        %v1948 = vpack.c.bf16 %v1401, %v1397
        %v1949 = vpack.c.bf16 %v1592, %v1588
        %v1950 = vpack.c.bf16 %v1594, %v1590
        %v1951 = vpack.c.bf16 %v1785, %v1781
        %v1952 = vpack.c.bf16 %v1787, %v1783
        %v1953 = vpack.c.bf16 %v830, %v826
        %v1954 = vpack.c.bf16 %v832, %v828
        %v1955 = vpack.c.bf16 %v1023, %v1019
        %v1956 = vpack.c.bf16 %v1025, %v1021
        %v1957 = vpack.c.bf16 %v1216, %v1212
        %v1958 = vpack.c.bf16 %v1218, %v1214
        %v1959 = vpack.c.bf16 %v1409, %v1405
        %v1960 = vpack.c.bf16 %v1411, %v1407
        %v1961 = vpack.c.bf16 %v1602, %v1598
        %v1962 = vpack.c.bf16 %v1604, %v1600
        %v1963 = vpack.c.bf16 %v1795, %v1791
        %v1964 = vpack.c.bf16 %v1797, %v1793
        %v1965 = vpack.c.bf16 %v840, %v836
        %v1966 = vpack.c.bf16 %v842, %v838
        %v1967 = vpack.c.bf16 %v1033, %v1029
        %v1968 = vpack.c.bf16 %v1035, %v1031
        %v1969 = vpack.c.bf16 %v1226, %v1222
        %v1970 = vpack.c.bf16 %v1228, %v1224
        %v1971 = vpack.c.bf16 %v1419, %v1415
        %v1972 = vpack.c.bf16 %v1421, %v1417
        %v1973 = vpack.c.bf16 %v1612, %v1608
        %v1974 = vpack.c.bf16 %v1614, %v1610
        %v1975 = vpack.c.bf16 %v1805, %v1801
        %v1976 = vpack.c.bf16 %v1807, %v1803
        %v1977 = vpack.c.bf16 %v850, %v846
        %v1978 = vpack.c.bf16 %v852, %v848
        %v1979 = vpack.c.bf16 %v1043, %v1039
        %v1980 = vpack.c.bf16 %v1045, %v1041
        %v1981 = vpack.c.bf16 %v1236, %v1232
        %v1982 = vpack.c.bf16 %v1238, %v1234
        %v1983 = vpack.c.bf16 %v1429, %v1425
        %v1984 = vpack.c.bf16 %v1431, %v1427
        %v1985 = vpack.c.bf16 %v1622, %v1618
        %v1986 = vpack.c.bf16 %v1624, %v1620
        %v1987 = vpack.c.bf16 %v1815, %v1811
        %v1988 = vpack.c.bf16 %v1817, %v1813
        %v1989 = vpack.c.bf16 %v860, %v856
        %v1990 = vpack.c.bf16 %v862, %v858
        %v1991 = vpack.c.bf16 %v1053, %v1049
        %v1992 = vpack.c.bf16 %v1055, %v1051
        %v1993 = vpack.c.bf16 %v1246, %v1242
        %v1994 = vpack.c.bf16 %v1248, %v1244
        %v1995 = vpack.c.bf16 %v1439, %v1435
        %v1996 = vpack.c.bf16 %v1441, %v1437
        %v1997 = vpack.c.bf16 %v1632, %v1628
        %v1998 = vpack.c.bf16 %v1634, %v1630
        %v1999 = vpack.c.bf16 %v1825, %v1821
        %v2000 = vpack.c.bf16 %v1827, %v1823
        %v2001 = vpack.c.bf16 %v870, %v866
        %v2002 = vpack.c.bf16 %v872, %v868
        %v2003 = vpack.c.bf16 %v1063, %v1059
        %v2004 = vpack.c.bf16 %v1065, %v1061
        %v2005 = vpack.c.bf16 %v1256, %v1252
        %v2006 = vpack.c.bf16 %v1258, %v1254
        %v2007 = vpack.c.bf16 %v1449, %v1445
        %v2008 = vpack.c.bf16 %v1451, %v1447
        %v2009 = vpack.c.bf16 %v1642, %v1638
        %v2010 = vpack.c.bf16 %v1644, %v1640
        %v2011 = vpack.c.bf16 %v1835, %v1831
        %v2012 = vpack.c.bf16 %v1837, %v1833
        %v2013 = vpack.c.bf16 %v880, %v876
        %v2014 = vpack.c.bf16 %v882, %v878
        %v2015 = vpack.c.bf16 %v1073, %v1069
        %v2016 = vpack.c.bf16 %v1075, %v1071
        %v2017 = vpack.c.bf16 %v1266, %v1262
        %v2018 = vpack.c.bf16 %v1268, %v1264
        %v2019 = vpack.c.bf16 %v1459, %v1455
        %v2020 = vpack.c.bf16 %v1461, %v1457
        %v2021 = vpack.c.bf16 %v1652, %v1648
        %v2022 = vpack.c.bf16 %v1654, %v1650
        %v2023 = vpack.c.bf16 %v1845, %v1841
        %v2024 = vpack.c.bf16 %v1847, %v1843
        %v2025 = vpack.c.bf16 %v890, %v886
        %v2026 = vpack.c.bf16 %v892, %v888
        %v2027 = vpack.c.bf16 %v1083, %v1079
        %v2028 = vpack.c.bf16 %v1085, %v1081
        %v2029 = vpack.c.bf16 %v1276, %v1272
        %v2030 = vpack.c.bf16 %v1278, %v1274
        %v2031 = vpack.c.bf16 %v1469, %v1465
        %v2032 = vpack.c.bf16 %v1471, %v1467
        %v2033 = vpack.c.bf16 %v1662, %v1658
        %v2034 = vpack.c.bf16 %v1664, %v1660
        %v2035 = vpack.c.bf16 %v1855, %v1851
        %v2036 = vpack.c.bf16 %v1857, %v1853
        %v2037 = vpack.c.bf16 %v900, %v896
        %v2038 = vpack.c.bf16 %v902, %v898
        %v2039 = vpack.c.bf16 %v1093, %v1089
        %v2040 = vpack.c.bf16 %v1095, %v1091
        %v2041 = vpack.c.bf16 %v1286, %v1282
        %v2042 = vpack.c.bf16 %v1288, %v1284
        %v2043 = vpack.c.bf16 %v1479, %v1475
        %v2044 = vpack.c.bf16 %v1481, %v1477
        %v2045 = vpack.c.bf16 %v1672, %v1668
        %v2046 = vpack.c.bf16 %v1674, %v1670
        %v2047 = vpack.c.bf16 %v1865, %v1861
        %v2048 = vpack.c.bf16 %v1867, %v1863
        %v2049 = vpack.c.bf16 %v910, %v906
        %v2050 = vpack.c.bf16 %v912, %v908
        %v2051 = vpack.c.bf16 %v1103, %v1099
        %v2052 = vpack.c.bf16 %v1105, %v1101
        %v2053 = vpack.c.bf16 %v1296, %v1292
        %v2054 = vpack.c.bf16 %v1298, %v1294
        %v2055 = vpack.c.bf16 %v1489, %v1485
        %v2056 = vpack.c.bf16 %v1491, %v1487
        %v2057 = vpack.c.bf16 %v1682, %v1678
        %v2058 = vpack.c.bf16 %v1684, %v1680
        %v2059 = vpack.c.bf16 %v1875, %v1871
        %v2060 = vpack.c.bf16 %v1877, %v1873
        %v2061 = vpack.c.bf16 %v920, %v916
        %v2062 = vpack.c.bf16 %v922, %v918
        %v2063 = vpack.c.bf16 %v1113, %v1109
        %v2064 = vpack.c.bf16 %v1115, %v1111
        %v2065 = vpack.c.bf16 %v1306, %v1302
        %v2066 = vpack.c.bf16 %v1308, %v1304
        %v2067 = vpack.c.bf16 %v1499, %v1495
        %v2068 = vpack.c.bf16 %v1501, %v1497
        %v2069 = vpack.c.bf16 %v1692, %v1688
        %v2070 = vpack.c.bf16 %v1694, %v1690
        %v2071 = vpack.c.bf16 %v1885, %v1881
        %v2072 = vpack.c.bf16 %v1887, %v1883
        %v2073 = vpack.c.bf16 %v930, %v926
        %v2074 = vpack.c.bf16 %v932, %v928
        %v2075 = vpack.c.bf16 %v1123, %v1119
        %v2076 = vpack.c.bf16 %v1125, %v1121
        %v2077 = vpack.c.bf16 %v1316, %v1312
        %v2078 = vpack.c.bf16 %v1318, %v1314
        %v2079 = vpack.c.bf16 %v1509, %v1505
        %v2080 = vpack.c.bf16 %v1511, %v1507
        %v2081 = vpack.c.bf16 %v1702, %v1698
        %v2082 = vpack.c.bf16 %v1704, %v1700
        %v2083 = vpack.c.bf16 %v1895, %v1891
        %v2084 = vpack.c.bf16 %v1897, %v1893
        %v2085 = vpack.c.bf16 %v940, %v936
        %v2086 = vpack.c.bf16 %v942, %v938
        %v2087 = vpack.c.bf16 %v1133, %v1129
        %v2088 = vpack.c.bf16 %v1135, %v1131
        %v2089 = vpack.c.bf16 %v1326, %v1322
        %v2090 = vpack.c.bf16 %v1328, %v1324
        %v2091 = vpack.c.bf16 %v1519, %v1515
        %v2092 = vpack.c.bf16 %v1521, %v1517
        %v2093 = vpack.c.bf16 %v1712, %v1708
        %v2094 = vpack.c.bf16 %v1714, %v1710
        %v2095 = vpack.c.bf16 %v1905, %v1901
        %v2096 = vpack.c.bf16 %v1907, %v1903
        %v2097 = vpack.c.bf16 %v950, %v946
        %v2098 = vpack.c.bf16 %v952, %v948
        %v2099 = vpack.c.bf16 %v1143, %v1139
        %v2100 = vpack.c.bf16 %v1145, %v1141
        %v2101 = vpack.c.bf16 %v1336, %v1332
        %v2102 = vpack.c.bf16 %v1338, %v1334
        %v2103 = vpack.c.bf16 %v1529, %v1525
        %v2104 = vpack.c.bf16 %v1531, %v1527
        %v2105 = vpack.c.bf16 %v1722, %v1718
        %v2106 = vpack.c.bf16 %v1724, %v1720
        %v2107 = vpack.c.bf16 %v1915, %v1911
        %v2108 = vpack.c.bf16 %v1917, %v1913
        %v2109 = vpack.c.bf16 %v960, %v956
        %v2110 = vpack.c.bf16 %v962, %v958
        %v2111 = vpack.c.bf16 %v1153, %v1149
        %v2112 = vpack.c.bf16 %v1155, %v1151
        %v2113 = vpack.c.bf16 %v1346, %v1342
        %v2114 = vpack.c.bf16 %v1348, %v1344
        %v2115 = vpack.c.bf16 %v1539, %v1535
        %v2116 = vpack.c.bf16 %v1541, %v1537
        %v2117 = vpack.c.bf16 %v1732, %v1728
        %v2118 = vpack.c.bf16 %v1734, %v1730
        %v2119 = vpack.c.bf16 %v1925, %v1921
        %v2120 = vpack.c.bf16 %v1927, %v1923
        %v2121 = vmax.bf16 %v1929, 0
        %v2122 = vmax.bf16 %v1930, 0
        %v2123 = vmax.bf16 %v1931, 0
        %v2124 = vmax.bf16 %v1932, 0
        %v2125 = vmax.bf16 %v1933, 0
        %v2126 = vmax.bf16 %v1934, 0
        %v2127 = vmax.bf16 %v1935, 0
        %v2128 = vmax.bf16 %v1936, 0
        %v2129 = vmax.bf16 %v1937, 0
        %v2130 = vmax.bf16 %v1938, 0
        %v2131 = vmax.bf16 %v1939, 0
        %v2132 = vmax.bf16 %v1940, 0
        %v2133 = vmax.bf16 %v1941, 0
        %v2134 = vmax.bf16 %v1942, 0
        %v2135 = vmax.bf16 %v1943, 0
        %v2136 = vmax.bf16 %v1944, 0
        %v2137 = vmax.bf16 %v1945, 0
        %v2138 = vmax.bf16 %v1946, 0
        %v2139 = vmax.bf16 %v1947, 0
        %v2140 = vmax.bf16 %v1948, 0
        %v2141 = vmax.bf16 %v1949, 0
        %v2142 = vmax.bf16 %v1950, 0
        %v2143 = vmax.bf16 %v1951, 0
        %v2144 = vmax.bf16 %v1952, 0
        %v2145 = vmax.bf16 %v1953, 0
        %v2146 = vmax.bf16 %v1954, 0
        %v2147 = vmax.bf16 %v1955, 0
        %v2148 = vmax.bf16 %v1956, 0
        %v2149 = vmax.bf16 %v1957, 0
        %v2150 = vmax.bf16 %v1958, 0
        %v2151 = vmax.bf16 %v1959, 0
        %v2152 = vmax.bf16 %v1960, 0
        %v2153 = vmax.bf16 %v1961, 0
        %v2154 = vmax.bf16 %v1962, 0
        %v2155 = vmax.bf16 %v1963, 0
        %v2156 = vmax.bf16 %v1964, 0
        %v2157 = vmax.bf16 %v1965, 0
        %v2158 = vmax.bf16 %v1966, 0
        %v2159 = vmax.bf16 %v1967, 0
        %v2160 = vmax.bf16 %v1968, 0
        %v2161 = vmax.bf16 %v1969, 0
        %v2162 = vmax.bf16 %v1970, 0
        %v2163 = vmax.bf16 %v1971, 0
        %v2164 = vmax.bf16 %v1972, 0
        %v2165 = vmax.bf16 %v1973, 0
        %v2166 = vmax.bf16 %v1974, 0
        %v2167 = vmax.bf16 %v1975, 0
        %v2168 = vmax.bf16 %v1976, 0
        %v2169 = vmax.bf16 %v1977, 0
        %v2170 = vmax.bf16 %v1978, 0
        %v2171 = vmax.bf16 %v1979, 0
        %v2172 = vmax.bf16 %v1980, 0
        %v2173 = vmax.bf16 %v1981, 0
        %v2174 = vmax.bf16 %v1982, 0
        %v2175 = vmax.bf16 %v1983, 0
        %v2176 = vmax.bf16 %v1984, 0
        %v2177 = vmax.bf16 %v1985, 0
        %v2178 = vmax.bf16 %v1986, 0
        %v2179 = vmax.bf16 %v1987, 0
        %v2180 = vmax.bf16 %v1988, 0
        %v2181 = vmax.bf16 %v1989, 0
        %v2182 = vmax.bf16 %v1990, 0
        %v2183 = vmax.bf16 %v1991, 0
        %v2184 = vmax.bf16 %v1992, 0
        %v2185 = vmax.bf16 %v1993, 0
        %v2186 = vmax.bf16 %v1994, 0
        %v2187 = vmax.bf16 %v1995, 0
        %v2188 = vmax.bf16 %v1996, 0
        %v2189 = vmax.bf16 %v1997, 0
        %v2190 = vmax.bf16 %v1998, 0
        %v2191 = vmax.bf16 %v1999, 0
        %v2192 = vmax.bf16 %v2000, 0
        %v2193 = vmax.bf16 %v2001, 0
        %v2194 = vmax.bf16 %v2002, 0
        %v2195 = vmax.bf16 %v2003, 0
        %v2196 = vmax.bf16 %v2004, 0
        %v2197 = vmax.bf16 %v2005, 0
        %v2198 = vmax.bf16 %v2006, 0
        %v2199 = vmax.bf16 %v2007, 0
        %v2200 = vmax.bf16 %v2008, 0
        %v2201 = vmax.bf16 %v2009, 0
        %v2202 = vmax.bf16 %v2010, 0
        %v2203 = vmax.bf16 %v2011, 0
        %v2204 = vmax.bf16 %v2012, 0
        %v2205 = vmax.bf16 %v2013, 0
        %v2206 = vmax.bf16 %v2014, 0
        %v2207 = vmax.bf16 %v2015, 0
        %v2208 = vmax.bf16 %v2016, 0
        %v2209 = vmax.bf16 %v2017, 0
        %v2210 = vmax.bf16 %v2018, 0
        %v2211 = vmax.bf16 %v2019, 0
        %v2212 = vmax.bf16 %v2020, 0
        %v2213 = vmax.bf16 %v2021, 0
        %v2214 = vmax.bf16 %v2022, 0
        %v2215 = vmax.bf16 %v2023, 0
        %v2216 = vmax.bf16 %v2024, 0
        %v2217 = vmax.bf16 %v2025, 0
        %v2218 = vmax.bf16 %v2026, 0
        %v2219 = vmax.bf16 %v2027, 0
        %v2220 = vmax.bf16 %v2028, 0
        %v2221 = vmax.bf16 %v2029, 0
        %v2222 = vmax.bf16 %v2030, 0
        %v2223 = vmax.bf16 %v2031, 0
        %v2224 = vmax.bf16 %v2032, 0
        %v2225 = vmax.bf16 %v2033, 0
        %v2226 = vmax.bf16 %v2034, 0
        %v2227 = vmax.bf16 %v2035, 0
        %v2228 = vmax.bf16 %v2036, 0
        %v2229 = vmax.bf16 %v2037, 0
        %v2230 = vmax.bf16 %v2038, 0
        %v2231 = vmax.bf16 %v2039, 0
        %v2232 = vmax.bf16 %v2040, 0
        %v2233 = vmax.bf16 %v2041, 0
        %v2234 = vmax.bf16 %v2042, 0
        %v2235 = vmax.bf16 %v2043, 0
        %v2236 = vmax.bf16 %v2044, 0
        %v2237 = vmax.bf16 %v2045, 0
        %v2238 = vmax.bf16 %v2046, 0
        %v2239 = vmax.bf16 %v2047, 0
        %v2240 = vmax.bf16 %v2048, 0
        %v2241 = vmax.bf16 %v2049, 0
        %v2242 = vmax.bf16 %v2050, 0
        %v2243 = vmax.bf16 %v2051, 0
        %v2244 = vmax.bf16 %v2052, 0
        %v2245 = vmax.bf16 %v2053, 0
        %v2246 = vmax.bf16 %v2054, 0
        %v2247 = vmax.bf16 %v2055, 0
        %v2248 = vmax.bf16 %v2056, 0
        %v2249 = vmax.bf16 %v2057, 0
        %v2250 = vmax.bf16 %v2058, 0
        %v2251 = vmax.bf16 %v2059, 0
        %v2252 = vmax.bf16 %v2060, 0
        %v2253 = vmax.bf16 %v2061, 0
        %v2254 = vmax.bf16 %v2062, 0
        %v2255 = vmax.bf16 %v2063, 0
        %v2256 = vmax.bf16 %v2064, 0
        %v2257 = vmax.bf16 %v2065, 0
        %v2258 = vmax.bf16 %v2066, 0
        %v2259 = vmax.bf16 %v2067, 0
        %v2260 = vmax.bf16 %v2068, 0
        %v2261 = vmax.bf16 %v2069, 0
        %v2262 = vmax.bf16 %v2070, 0
        %v2263 = vmax.bf16 %v2071, 0
        %v2264 = vmax.bf16 %v2072, 0
        %v2265 = vmax.bf16 %v2073, 0
        %v2266 = vmax.bf16 %v2074, 0
        %v2267 = vmax.bf16 %v2075, 0
        %v2268 = vmax.bf16 %v2076, 0
        %v2269 = vmax.bf16 %v2077, 0
        %v2270 = vmax.bf16 %v2078, 0
        %v2271 = vmax.bf16 %v2079, 0
        %v2272 = vmax.bf16 %v2080, 0
        %v2273 = vmax.bf16 %v2081, 0
        %v2274 = vmax.bf16 %v2082, 0
        %v2275 = vmax.bf16 %v2083, 0
        %v2276 = vmax.bf16 %v2084, 0
        %v2277 = vmax.bf16 %v2085, 0
        %v2278 = vmax.bf16 %v2086, 0
        %v2279 = vmax.bf16 %v2087, 0
        %v2280 = vmax.bf16 %v2088, 0
        %v2281 = vmax.bf16 %v2089, 0
        %v2282 = vmax.bf16 %v2090, 0
        %v2283 = vmax.bf16 %v2091, 0
        %v2284 = vmax.bf16 %v2092, 0
        %v2285 = vmax.bf16 %v2093, 0
        %v2286 = vmax.bf16 %v2094, 0
        %v2287 = vmax.bf16 %v2095, 0
        %v2288 = vmax.bf16 %v2096, 0
        %v2289 = vmax.bf16 %v2097, 0
        %v2290 = vmax.bf16 %v2098, 0
        %v2291 = vmax.bf16 %v2099, 0
        %v2292 = vmax.bf16 %v2100, 0
        %v2293 = vmax.bf16 %v2101, 0
        %v2294 = vmax.bf16 %v2102, 0
        %v2295 = vmax.bf16 %v2103, 0
        %v2296 = vmax.bf16 %v2104, 0
        %v2297 = vmax.bf16 %v2105, 0
        %v2298 = vmax.bf16 %v2106, 0
        %v2299 = vmax.bf16 %v2107, 0
        %v2300 = vmax.bf16 %v2108, 0
        %v2301 = vmax.bf16 %v2109, 0
        %v2302 = vmax.bf16 %v2110, 0
        %v2303 = vmax.bf16 %v2111, 0
        %v2304 = vmax.bf16 %v2112, 0
        %v2305 = vmax.bf16 %v2113, 0
        %v2306 = vmax.bf16 %v2114, 0
        %v2307 = vmax.bf16 %v2115, 0
        %v2308 = vmax.bf16 %v2116, 0
        %v2309 = vmax.bf16 %v2117, 0
        %v2310 = vmax.bf16 %v2118, 0
        %v2311 = vmax.bf16 %v2119, 0
        %v2312 = vmax.bf16 %v2120, 0
        %v2313 = vld [vmem:[#allocation2] sm:$0xff]
        %v2314 = vld [vmem:[#allocation2 + $0x8] sm:$0xf]
        %v2315 = vld [vmem:[#allocation3] sm:$0x3]
        %v2318 = vunpack.c.l.s4 1966171168
        %v2319 = vunpack.c.0.s8 %v2318
        %v2320 = vlaneseq
        %v2321 = vshrl.u32 %v2320, 7
        %v2322 = vsub.s32 %v2319, %v2321
        %v2323 = vrot.slane %v2315, %v2322
        %v2324 = vcombine.high %v2323, %v2323
        %v2326 = vunpack.c.l.s4 1966171168
        %v2327 = vunpack.c.0.s8 %v2326
        %v2328 = vlaneseq
        %v2329 = vshrl.u32 %v2328, 7
        %v2330 = vsub.s32 %v2327, %v2329
        %v2331 = vrot.slane %v2323, %v2330
        %v2333 = vunpack.c.l.s4 1966171168
        %v2334 = vunpack.c.0.s8 %v2333
        %v2335 = vlaneseq
        %v2336 = vshrl.u32 %v2335, 7
        %v2337 = vsub.s32 %v2334, %v2336
        %v2338 = vrot.slane %v2324, %v2337
        %2341 = vmatprep.subr.bf16.mxu0 %v2122
        %2342 = vmatpush1.bf16.msra.mxu0 %v2121
        %2343 = vmatprep.subr.bf16.mxu0 %v2134
        %2344 = vmatpush1.bf16.msra.mxu0 %v2133
        %2345 = vmatprep.subr.bf16.mxu0 %v2146
        %2346 = vmatpush1.bf16.msra.mxu0 %v2145
        %2347 = vmatprep.subr.bf16.mxu0 %v2158
        %2348 = vmatpush1.bf16.msra.mxu0 %v2157
        %2349 = vmatprep.subr.bf16.mxu0 %v2170
        %2350 = vmatpush1.bf16.msra.mxu0 %v2169
        %2351 = vmatprep.subr.bf16.mxu0 %v2182
        %2352 = vmatpush1.bf16.msra.mxu0 %v2181
        %2353 = vmatprep.subr.bf16.mxu0 %v2194
        %2354 = vmatpush1.bf16.msra.mxu0 %v2193
        %2355 = vmatprep.subr.bf16.mxu0 %v2206
        %2356 = vmatpush1.bf16.msra.mxu0 %v2205
        %2357 = vmatprep.subr.bf16.mxu0 %v2218
        %2358 = vmatpush1.bf16.msra.mxu0 %v2217
        %2359 = vmatprep.subr.bf16.mxu0 %v2230
        %2360 = vmatpush1.bf16.msra.mxu0 %v2229
        %2361 = vmatprep.subr.bf16.mxu0 %v2242
        %2362 = vmatpush1.bf16.msra.mxu0 %v2241
        %2363 = vmatprep.subr.bf16.mxu0 %v2254
        %2364 = vmatpush1.bf16.msra.mxu0 %v2253
        %2365 = vmatprep.subr.bf16.mxu0 %v2266
        %2366 = vmatpush1.bf16.msra.mxu0 %v2265
        %2367 = vmatprep.subr.bf16.mxu0 %v2278
        %2368 = vmatpush1.bf16.msra.mxu0 %v2277
        %2369 = vmatprep.subr.bf16.mxu0 %v2290
        %2370 = vmatpush1.bf16.msra.mxu0 %v2289
        %2371 = vmatprep.subr.bf16.mxu0 %v2302
        %2372 = vmatpush1.bf16.msra.mxu0 %v2301
        %2373 = vmatprep.mubr.bf16.mxu0 %v2338
        %2374 = vmatmul.mubr.bf16.gmra.mrb[0].mxu0 %v2331
        %v2375 = vpop.f32.mrb[0].mxu0
        %v2376 = vadd.f32 0.0, %v2375
        %v2377 = vpop.f32.mrb[0].mxu0
        %v2378 = vadd.f32 0.0, %v2377
        %v2379 = vpop.f32.mrb[0].mxu0
        %v2380 = vpop.f32.mrb[0].mxu0
        %2381 = vdwg.mxu0
        %2382 = vmatprep.subr.bf16.mxu0 %v2124
        %2383 = vmatpush1.bf16.msra.mxu0 %v2123
        %2384 = vmatprep.subr.bf16.mxu0 %v2136
        %2385 = vmatpush1.bf16.msra.mxu0 %v2135
        %2386 = vmatprep.subr.bf16.mxu0 %v2148
        %2387 = vmatpush1.bf16.msra.mxu0 %v2147
        %2388 = vmatprep.subr.bf16.mxu0 %v2160
        %2389 = vmatpush1.bf16.msra.mxu0 %v2159
        %2390 = vmatprep.subr.bf16.mxu0 %v2172
        %2391 = vmatpush1.bf16.msra.mxu0 %v2171
        %2392 = vmatprep.subr.bf16.mxu0 %v2184
        %2393 = vmatpush1.bf16.msra.mxu0 %v2183
        %2394 = vmatprep.subr.bf16.mxu0 %v2196
        %2395 = vmatpush1.bf16.msra.mxu0 %v2195
        %2396 = vmatprep.subr.bf16.mxu0 %v2208
        %2397 = vmatpush1.bf16.msra.mxu0 %v2207
        %2398 = vmatprep.subr.bf16.mxu0 %v2220
        %2399 = vmatpush1.bf16.msra.mxu0 %v2219
        %2400 = vmatprep.subr.bf16.mxu0 %v2232
        %2401 = vmatpush1.bf16.msra.mxu0 %v2231
        %2402 = vmatprep.subr.bf16.mxu0 %v2244
        %2403 = vmatpush1.bf16.msra.mxu0 %v2243
        %2404 = vmatprep.subr.bf16.mxu0 %v2256
        %2405 = vmatpush1.bf16.msra.mxu0 %v2255
        %2406 = vmatprep.subr.bf16.mxu0 %v2268
        %2407 = vmatpush1.bf16.msra.mxu0 %v2267
        %2408 = vmatprep.subr.bf16.mxu0 %v2280
        %2409 = vmatpush1.bf16.msra.mxu0 %v2279
        %2410 = vmatprep.subr.bf16.mxu0 %v2292
        %2411 = vmatpush1.bf16.msra.mxu0 %v2291
        %2412 = vmatprep.subr.bf16.mxu0 %v2304
        %2413 = vmatpush1.bf16.msra.mxu0 %v2303
        %2414 = vmatprep.mubr.bf16.mxu0 %v2338
        %2415 = vmatmul.mubr.bf16.gmra.mrb[0].mxu0 %v2331
        %v2416 = vpop.f32.mrb[0].mxu0
        %v2417 = vadd.f32 0.0, %v2416
        %v2418 = vpop.f32.mrb[0].mxu0
        %v2419 = vadd.f32 0.0, %v2418
        %v2420 = vpop.f32.mrb[0].mxu0
        %v2421 = vpop.f32.mrb[0].mxu0
        %2422 = vdwg.mxu0
        %2423 = vmatprep.subr.bf16.mxu0 %v2126
        %2424 = vmatpush1.bf16.msra.mxu0 %v2125
        %2425 = vmatprep.subr.bf16.mxu0 %v2138
        %2426 = vmatpush1.bf16.msra.mxu0 %v2137
        %2427 = vmatprep.subr.bf16.mxu0 %v2150
        %2428 = vmatpush1.bf16.msra.mxu0 %v2149
        %2429 = vmatprep.subr.bf16.mxu0 %v2162
        %2430 = vmatpush1.bf16.msra.mxu0 %v2161
        %2431 = vmatprep.subr.bf16.mxu0 %v2174
        %2432 = vmatpush1.bf16.msra.mxu0 %v2173
        %2433 = vmatprep.subr.bf16.mxu0 %v2186
        %2434 = vmatpush1.bf16.msra.mxu0 %v2185
        %2435 = vmatprep.subr.bf16.mxu0 %v2198
        %2436 = vmatpush1.bf16.msra.mxu0 %v2197
        %2437 = vmatprep.subr.bf16.mxu0 %v2210
        %2438 = vmatpush1.bf16.msra.mxu0 %v2209
        %2439 = vmatprep.subr.bf16.mxu0 %v2222
        %2440 = vmatpush1.bf16.msra.mxu0 %v2221
        %2441 = vmatprep.subr.bf16.mxu0 %v2234
        %2442 = vmatpush1.bf16.msra.mxu0 %v2233
        %2443 = vmatprep.subr.bf16.mxu0 %v2246
        %2444 = vmatpush1.bf16.msra.mxu0 %v2245
        %2445 = vmatprep.subr.bf16.mxu0 %v2258
        %2446 = vmatpush1.bf16.msra.mxu0 %v2257
        %2447 = vmatprep.subr.bf16.mxu0 %v2270
        %2448 = vmatpush1.bf16.msra.mxu0 %v2269
        %2449 = vmatprep.subr.bf16.mxu0 %v2282
        %2450 = vmatpush1.bf16.msra.mxu0 %v2281
        %2451 = vmatprep.subr.bf16.mxu0 %v2294
        %2452 = vmatpush1.bf16.msra.mxu0 %v2293
        %2453 = vmatprep.subr.bf16.mxu0 %v2306
        %2454 = vmatpush1.bf16.msra.mxu0 %v2305
        %2455 = vmatprep.mubr.bf16.mxu0 %v2338
        %2456 = vmatmul.mubr.bf16.gmra.mrb[0].mxu0 %v2331
        %v2457 = vpop.f32.mrb[0].mxu0
        %v2458 = vadd.f32 0.0, %v2457
        %v2459 = vpop.f32.mrb[0].mxu0
        %v2460 = vadd.f32 0.0, %v2459
        %v2461 = vpop.f32.mrb[0].mxu0
        %v2462 = vpop.f32.mrb[0].mxu0
        %2463 = vdwg.mxu0
        %2464 = vmatprep.subr.bf16.mxu0 %v2128
        %2465 = vmatpush1.bf16.msra.mxu0 %v2127
        %2466 = vmatprep.subr.bf16.mxu0 %v2140
        %2467 = vmatpush1.bf16.msra.mxu0 %v2139
        %2468 = vmatprep.subr.bf16.mxu0 %v2152
        %2469 = vmatpush1.bf16.msra.mxu0 %v2151
        %2470 = vmatprep.subr.bf16.mxu0 %v2164
        %2471 = vmatpush1.bf16.msra.mxu0 %v2163
        %2472 = vmatprep.subr.bf16.mxu0 %v2176
        %2473 = vmatpush1.bf16.msra.mxu0 %v2175
        %2474 = vmatprep.subr.bf16.mxu0 %v2188
        %2475 = vmatpush1.bf16.msra.mxu0 %v2187
        %2476 = vmatprep.subr.bf16.mxu0 %v2200
        %2477 = vmatpush1.bf16.msra.mxu0 %v2199
        %2478 = vmatprep.subr.bf16.mxu0 %v2212
        %2479 = vmatpush1.bf16.msra.mxu0 %v2211
        %2480 = vmatprep.subr.bf16.mxu0 %v2224
        %2481 = vmatpush1.bf16.msra.mxu0 %v2223
        %2482 = vmatprep.subr.bf16.mxu0 %v2236
        %2483 = vmatpush1.bf16.msra.mxu0 %v2235
        %2484 = vmatprep.subr.bf16.mxu0 %v2248
        %2485 = vmatpush1.bf16.msra.mxu0 %v2247
        %2486 = vmatprep.subr.bf16.mxu0 %v2260
        %2487 = vmatpush1.bf16.msra.mxu0 %v2259
        %2488 = vmatprep.subr.bf16.mxu0 %v2272
        %2489 = vmatpush1.bf16.msra.mxu0 %v2271
        %2490 = vmatprep.subr.bf16.mxu0 %v2284
        %2491 = vmatpush1.bf16.msra.mxu0 %v2283
        %2492 = vmatprep.subr.bf16.mxu0 %v2296
        %2493 = vmatpush1.bf16.msra.mxu0 %v2295
        %2494 = vmatprep.subr.bf16.mxu0 %v2308
        %2495 = vmatpush1.bf16.msra.mxu0 %v2307
        %2496 = vmatprep.mubr.bf16.mxu0 %v2338
        %2497 = vmatmul.mubr.bf16.gmra.mrb[0].mxu0 %v2331
        %v2498 = vpop.f32.mrb[0].mxu0
        %v2499 = vadd.f32 0.0, %v2498
        %v2500 = vpop.f32.mrb[0].mxu0
        %v2501 = vadd.f32 0.0, %v2500
        %v2502 = vpop.f32.mrb[0].mxu0
        %v2503 = vpop.f32.mrb[0].mxu0
        %2504 = vdwg.mxu0
        %2505 = vmatprep.subr.bf16.mxu0 %v2130
        %2506 = vmatpush1.bf16.msra.mxu0 %v2129
        %2507 = vmatprep.subr.bf16.mxu0 %v2142
        %2508 = vmatpush1.bf16.msra.mxu0 %v2141
        %2509 = vmatprep.subr.bf16.mxu0 %v2154
        %2510 = vmatpush1.bf16.msra.mxu0 %v2153
        %2511 = vmatprep.subr.bf16.mxu0 %v2166
        %2512 = vmatpush1.bf16.msra.mxu0 %v2165
        %2513 = vmatprep.subr.bf16.mxu0 %v2178
        %2514 = vmatpush1.bf16.msra.mxu0 %v2177
        %2515 = vmatprep.subr.bf16.mxu0 %v2190
        %2516 = vmatpush1.bf16.msra.mxu0 %v2189
        %2517 = vmatprep.subr.bf16.mxu0 %v2202
        %2518 = vmatpush1.bf16.msra.mxu0 %v2201
        %2519 = vmatprep.subr.bf16.mxu0 %v2214
        %2520 = vmatpush1.bf16.msra.mxu0 %v2213
        %2521 = vmatprep.subr.bf16.mxu0 %v2226
        %2522 = vmatpush1.bf16.msra.mxu0 %v2225
        %2523 = vmatprep.subr.bf16.mxu0 %v2238
        %2524 = vmatpush1.bf16.msra.mxu0 %v2237
        %2525 = vmatprep.subr.bf16.mxu0 %v2250
        %2526 = vmatpush1.bf16.msra.mxu0 %v2249
        %2527 = vmatprep.subr.bf16.mxu0 %v2262
        %2528 = vmatpush1.bf16.msra.mxu0 %v2261
        %2529 = vmatprep.subr.bf16.mxu0 %v2274
        %2530 = vmatpush1.bf16.msra.mxu0 %v2273
        %2531 = vmatprep.subr.bf16.mxu0 %v2286
        %2532 = vmatpush1.bf16.msra.mxu0 %v2285
        %2533 = vmatprep.subr.bf16.mxu0 %v2298
        %2534 = vmatpush1.bf16.msra.mxu0 %v2297
        %2535 = vmatprep.subr.bf16.mxu0 %v2310
        %2536 = vmatpush1.bf16.msra.mxu0 %v2309
        %2537 = vmatprep.mubr.bf16.mxu0 %v2338
        %2538 = vmatmul.mubr.bf16.gmra.mrb[0].mxu0 %v2331
        %v2539 = vpop.f32.mrb[0].mxu0
        %v2540 = vadd.f32 0.0, %v2539
        %v2541 = vpop.f32.mrb[0].mxu0
        %v2542 = vadd.f32 0.0, %v2541
        %v2543 = vpop.f32.mrb[0].mxu0
        %v2544 = vpop.f32.mrb[0].mxu0
        %2545 = vdwg.mxu0
        %2546 = vmatprep.subr.bf16.mxu0 %v2132
        %2547 = vmatpush1.bf16.msra.mxu0 %v2131
        %2548 = vmatprep.subr.bf16.mxu0 %v2144
        %2549 = vmatpush1.bf16.msra.mxu0 %v2143
        %2550 = vmatprep.subr.bf16.mxu0 %v2156
        %2551 = vmatpush1.bf16.msra.mxu0 %v2155
        %2552 = vmatprep.subr.bf16.mxu0 %v2168
        %2553 = vmatpush1.bf16.msra.mxu0 %v2167
        %2554 = vmatprep.subr.bf16.mxu0 %v2180
        %2555 = vmatpush1.bf16.msra.mxu0 %v2179
        %2556 = vmatprep.subr.bf16.mxu0 %v2192
        %2557 = vmatpush1.bf16.msra.mxu0 %v2191
        %2558 = vmatprep.subr.bf16.mxu0 %v2204
        %2559 = vmatpush1.bf16.msra.mxu0 %v2203
        %2560 = vmatprep.subr.bf16.mxu0 %v2216
        %2561 = vmatpush1.bf16.msra.mxu0 %v2215
        %2562 = vmatprep.subr.bf16.mxu0 %v2228
        %2563 = vmatpush1.bf16.msra.mxu0 %v2227
        %2564 = vmatprep.subr.bf16.mxu0 %v2240
        %2565 = vmatpush1.bf16.msra.mxu0 %v2239
        %2566 = vmatprep.subr.bf16.mxu0 %v2252
        %2567 = vmatpush1.bf16.msra.mxu0 %v2251
        %2568 = vmatprep.subr.bf16.mxu0 %v2264
        %2569 = vmatpush1.bf16.msra.mxu0 %v2263
        %2570 = vmatprep.subr.bf16.mxu0 %v2276
        %2571 = vmatpush1.bf16.msra.mxu0 %v2275
        %2572 = vmatprep.subr.bf16.mxu0 %v2288
        %2573 = vmatpush1.bf16.msra.mxu0 %v2287
        %2574 = vmatprep.subr.bf16.mxu0 %v2300
        %2575 = vmatpush1.bf16.msra.mxu0 %v2299
        %2576 = vmatprep.subr.bf16.mxu0 %v2312
        %2577 = vmatpush1.bf16.msra.mxu0 %v2311
        %2578 = vmatprep.mubr.bf16.mxu0 %v2338
        %2579 = vmatmul.mubr.bf16.gmra.mrb[0].mxu0 %v2331
        %v2580 = vpop.f32.mrb[0].mxu0
        %v2581 = vadd.f32 0.0, %v2580
        %v2582 = vpop.f32.mrb[0].mxu0
        %v2583 = vadd.f32 0.0, %v2582
        %v2584 = vpop.f32.mrb[0].mxu0
        %v2585 = vpop.f32.mrb[0].mxu0
        %2586 = vdwg.mxu0
        %v2599 = vcombine.low %v2376, %v2378
        %v2600 = vcombine.low %v2417, %v2419
        %v2601 = vcombine.low %v2458, %v2460
        %v2602 = vcombine.low %v2499, %v2501
        %v2604 = vunpack.c.l.s4 1966171168
        %v2605 = vunpack.c.0.s8 %v2604
        %v2606 = vlaneseq
        %v2607 = vshrl.u32 %v2606, 7
        %v2608 = vsub.s32 %v2605, %v2607
        %v2609 = vrot.slane %v2599, %v2608
        %v2611 = vunpack.c.l.s4 1966171168
        %v2612 = vunpack.c.0.s8 %v2611
        %v2613 = vlaneseq
        %v2614 = vshrl.u32 %v2613, 7
        %v2615 = vsub.s32 %v2612, %v2614
        %v2616 = vrot.slane %v2600, %v2615
        %v2618 = vunpack.c.l.s4 1966171168
        %v2619 = vunpack.c.0.s8 %v2618
        %v2620 = vlaneseq
        %v2621 = vshrl.u32 %v2620, 7
        %v2622 = vsub.s32 %v2619, %v2621
        %v2623 = vrot.slane %v2601, %v2622
        %v2625 = vunpack.c.l.s4 1966171168
        %v2626 = vunpack.c.0.s8 %v2625
        %v2627 = vlaneseq
        %v2628 = vshrl.u32 %v2627, 7
        %v2629 = vsub.s32 %v2626, %v2628
        %v2630 = vrot.slane %v2602, %v2629
        %v2631 = vcombine.low %v2609, %v2616
        %v2632 = vcombine.low %v2623, %v2630
        %v2634 = vunpack.c.l.s4 1966171168
        %v2635 = vunpack.c.0.s8 %v2634
        %v2636 = vlaneseq
        %v2637 = vshrl.u32 %v2636, 7
        %v2638 = vsub.s32 %v2635, %v2637
        %v2639 = vrot.slane %v2631, %v2638
        %v2641 = vunpack.c.l.s4 1966171168
        %v2642 = vunpack.c.0.s8 %v2641
        %v2643 = vlaneseq
        %v2644 = vshrl.u32 %v2643, 7
        %v2645 = vsub.s32 %v2642, %v2644
        %v2646 = vrot.slane %v2632, %v2645
        %v2647 = vcombine.low %v2639, %v2646
        %v2648 = vcombine.low %v2540, %v2542
        %v2649 = vcombine.low %v2581, %v2583
        %v2651 = vunpack.c.l.s4 1966171168
        %v2652 = vunpack.c.0.s8 %v2651
        %v2653 = vlaneseq
        %v2654 = vshrl.u32 %v2653, 7
        %v2655 = vsub.s32 %v2652, %v2654
        %v2656 = vrot.slane %v2648, %v2655
        %v2658 = vunpack.c.l.s4 1966171168
        %v2659 = vunpack.c.0.s8 %v2658
        %v2660 = vlaneseq
        %v2661 = vshrl.u32 %v2660, 7
        %v2662 = vsub.s32 %v2659, %v2661
        %v2663 = vrot.slane %v2649, %v2662
        %v2664 = vcombine.low %v2656, %v2663
        %v2666 = vunpack.c.l.s4 1966171168
        %v2667 = vunpack.c.0.s8 %v2666
        %v2668 = vlaneseq
        %v2669 = vshrl.u32 %v2668, 7
        %v2670 = vsub.s32 %v2667, %v2669
        %v2671 = vrot.slane %v2664, %v2670
        %v2674 = vadd.f32 %v2313, %v2647
        %v2675 = vadd.f32 %v2314, %v2671
        %2676 = vst [vmem:[#allocation2] sm:$0xff] %v2674
        %v2677 = vlaneseq
        %vm2678 = vcmp.ge.s32.totalorder %v2677, 0
        %vm2679 = vcmp.lt.s32.totalorder %v2677, 512
        %vm2680 = vmand %vm2678, %vm2679
        %2681 = vst.msk [vmem:[#allocation2 + $0x8] sm:$0xf] %vm2680, %v2675
        // Predicated region
        $region77: #{tpu_custom_call.1} parent=59 // pred_check
          %p2682 = pneg %p428
        $region78: #{tpu_custom_call.1} parent=59 // pred_check_branch
          %2684 = sbr.rel (%p2682) target = $region80
        $region79: #{tpu_custom_call.1} parent=59 // pred_region
          %v2685 = vld [vmem:[#allocation2] sm:$0xff]
          %v2686 = vld [vmem:[#allocation2 + $0x8] sm:$0xf]
          %v2687 = vmul.f32 %v2685, 0.00390625
          %v2688 = vmul.f32 %v2686, 0.00390625
          %v2691 = vlaneseq
          %v2692 = vshrl.u32 %v2691, 7
          %v2693 = vsub.s32 0, %v2692
          %v2694 = vrot.slane %v2687, %v2693
          %v2695 = vlaneseq
          %v2696 = vshrl.u32 %v2695, 7
          %v2697 = vsub.s32 1, %v2696
          %v2698 = vrot.slane %v2687, %v2697
          %v2699 = vlaneseq
          %v2700 = vshrl.u32 %v2699, 7
          %v2701 = vsub.s32 2, %v2700
          %v2702 = vrot.slane %v2687, %v2701
          %v2703 = vlaneseq
          %v2704 = vshrl.u32 %v2703, 7
          %v2705 = vsub.s32 3, %v2704
          %v2706 = vrot.slane %v2687, %v2705
          %v2707 = vlaneseq
          %v2708 = vshrl.u32 %v2707, 7
          %v2709 = vsub.s32 4, %v2708
          %v2710 = vrot.slane %v2687, %v2709
          %v2711 = vlaneseq
          %v2712 = vshrl.u32 %v2711, 7
          %v2713 = vsub.s32 5, %v2712
          %v2714 = vrot.slane %v2687, %v2713
          %v2715 = vlaneseq
          %v2716 = vshrl.u32 %v2715, 7
          %v2717 = vsub.s32 6, %v2716
          %v2718 = vrot.slane %v2687, %v2717
          %v2719 = vlaneseq
          %v2720 = vshrl.u32 %v2719, 7
          %v2721 = vsub.s32 7, %v2720
          %v2722 = vrot.slane %v2687, %v2721
          %v2723 = vlaneseq
          %v2724 = vshrl.u32 %v2723, 7
          %v2725 = vsub.s32 0, %v2724
          %v2726 = vrot.slane %v2688, %v2725
          %v2727 = vlaneseq
          %v2728 = vshrl.u32 %v2727, 7
          %v2729 = vsub.s32 1, %v2728
          %v2730 = vrot.slane %v2688, %v2729
          %v2731 = vlaneseq
          %v2732 = vshrl.u32 %v2731, 7
          %v2733 = vsub.s32 2, %v2732
          %v2734 = vrot.slane %v2688, %v2733
          %v2735 = vlaneseq
          %v2736 = vshrl.u32 %v2735, 7
          %v2737 = vsub.s32 3, %v2736
          %v2738 = vrot.slane %v2688, %v2737
          %v2751 = vpack.c.bf16 %v2694, %v2694
          %v2752 = vpack.c.bf16 %v2698, %v2698
          %v2753 = vpack.c.bf16 %v2702, %v2702
          %v2754 = vpack.c.bf16 %v2706, %v2706
          %v2755 = vpack.c.bf16 %v2710, %v2710
          %v2756 = vpack.c.bf16 %v2714, %v2714
          %v2757 = vpack.c.bf16 %v2718, %v2718
          %v2758 = vpack.c.bf16 %v2722, %v2722
          %v2759 = vpack.c.bf16 %v2726, %v2726
          %v2760 = vpack.c.bf16 %v2730, %v2730
          %v2761 = vpack.c.bf16 %v2734, %v2734
          %v2762 = vpack.c.bf16 %v2738, %v2738
          %v2763 = vld [vmem:[#allocation6] sm:$0xff]
          %v2764 = vld [vmem:[#allocation6 + $0x8] sm:$0xff]
          %v2765 = vld [vmem:[#allocation6 + $0x10] sm:$0xff]
          %v2766 = vld [vmem:[#allocation6 + $0x18] sm:$0xff]
          %v2767 = vld [vmem:[#allocation6 + $0x20] sm:$0xff]
          %v2768 = vld [vmem:[#allocation6 + $0x28] sm:$0xff]
          %v2769 = vld [vmem:[#allocation6 + $0x30] sm:$0xff]
          %v2770 = vld [vmem:[#allocation6 + $0x38] sm:$0xff]
          %v2771 = vld [vmem:[#allocation6 + $0x40] sm:$0xff]
          %v2772 = vld [vmem:[#allocation6 + $0x48] sm:$0xff]
          %v2773 = vld [vmem:[#allocation6 + $0x50] sm:$0xff]
          %v2774 = vld [vmem:[#allocation6 + $0x58] sm:$0xff]
          %v2775 = vld [vmem:[#allocation6 + $0x60] sm:$0xff]
          %v2776 = vld [vmem:[#allocation6 + $0x68] sm:$0xff]
          %v2777 = vld [vmem:[#allocation6 + $0x70] sm:$0xff]
          %v2778 = vld [vmem:[#allocation6 + $0x78] sm:$0xff]
          %v2779 = vld [vmem:[#allocation6 + $0x80] sm:$0xff]
          %v2780 = vld [vmem:[#allocation6 + $0x88] sm:$0xff]
          %v2781 = vld [vmem:[#allocation6 + $0x90] sm:$0xff]
          %v2782 = vld [vmem:[#allocation6 + $0x98] sm:$0xff]
          %v2783 = vld [vmem:[#allocation6 + $0xa0] sm:$0xff]
          %v2784 = vld [vmem:[#allocation6 + $0xa8] sm:$0xff]
          %v2785 = vld [vmem:[#allocation6 + $0xb0] sm:$0xff]
          %v2786 = vld [vmem:[#allocation6 + $0xb8] sm:$0xff]
          %v2787 = vld [vmem:[#allocation6 + $0xc0] sm:$0xff]
          %v2788 = vld [vmem:[#allocation6 + $0xc8] sm:$0xff]
          %v2789 = vld [vmem:[#allocation6 + $0xd0] sm:$0xff]
          %v2790 = vld [vmem:[#allocation6 + $0xd8] sm:$0xff]
          %v2791 = vld [vmem:[#allocation6 + $0xe0] sm:$0xff]
          %v2792 = vld [vmem:[#allocation6 + $0xe8] sm:$0xff]
          %v2793 = vld [vmem:[#allocation6 + $0xf0] sm:$0xff]
          %v2794 = vld [vmem:[#allocation6 + $0xf8] sm:$0xff]
          %v2795 = vld [vmem:[#allocation6 + $0x100] sm:$0xff]
          %v2796 = vld [vmem:[#allocation6 + $0x108] sm:$0xff]
          %v2797 = vld [vmem:[#allocation6 + $0x110] sm:$0xff]
          %v2798 = vld [vmem:[#allocation6 + $0x118] sm:$0xff]
          %v2799 = vld [vmem:[#allocation6 + $0x120] sm:$0xff]
          %v2800 = vld [vmem:[#allocation6 + $0x128] sm:$0xff]
          %v2801 = vld [vmem:[#allocation6 + $0x130] sm:$0xff]
          %v2802 = vld [vmem:[#allocation6 + $0x138] sm:$0xff]
          %v2803 = vld [vmem:[#allocation6 + $0x140] sm:$0xff]
          %v2804 = vld [vmem:[#allocation6 + $0x148] sm:$0xff]
          %v2805 = vld [vmem:[#allocation6 + $0x150] sm:$0xff]
          %v2806 = vld [vmem:[#allocation6 + $0x158] sm:$0xff]
          %v2807 = vld [vmem:[#allocation6 + $0x160] sm:$0xff]
          %v2808 = vld [vmem:[#allocation6 + $0x168] sm:$0xff]
          %v2809 = vld [vmem:[#allocation6 + $0x170] sm:$0xff]
          %v2810 = vld [vmem:[#allocation6 + $0x178] sm:$0xff]
          %v2811 = vld [vmem:[#allocation6 + $0x180] sm:$0xff]
          %v2812 = vld [vmem:[#allocation6 + $0x188] sm:$0xff]
          %v2813 = vld [vmem:[#allocation6 + $0x190] sm:$0xff]
          %v2814 = vld [vmem:[#allocation6 + $0x198] sm:$0xff]
          %v2815 = vld [vmem:[#allocation6 + $0x1a0] sm:$0xff]
          %v2816 = vld [vmem:[#allocation6 + $0x1a8] sm:$0xff]
          %v2817 = vld [vmem:[#allocation6 + $0x1b0] sm:$0xff]
          %v2818 = vld [vmem:[#allocation6 + $0x1b8] sm:$0xff]
          %v2819 = vld [vmem:[#allocation6 + $0x1c0] sm:$0xff]
          %v2820 = vld [vmem:[#allocation6 + $0x1c8] sm:$0xff]
          %v2821 = vld [vmem:[#allocation6 + $0x1d0] sm:$0xff]
          %v2822 = vld [vmem:[#allocation6 + $0x1d8] sm:$0xff]
          %v2823 = vld [vmem:[#allocation6 + $0x1e0] sm:$0xff]
          %v2824 = vld [vmem:[#allocation6 + $0x1e8] sm:$0xff]
          %v2825 = vld [vmem:[#allocation6 + $0x1f0] sm:$0xff]
          %v2826 = vld [vmem:[#allocation6 + $0x1f8] sm:$0xff]
          %v2827 = vld [vmem:[#allocation6 + $0x200] sm:$0xff]
          %v2828 = vld [vmem:[#allocation6 + $0x208] sm:$0xff]
          %v2829 = vld [vmem:[#allocation6 + $0x210] sm:$0xff]
          %v2830 = vld [vmem:[#allocation6 + $0x218] sm:$0xff]
          %v2831 = vld [vmem:[#allocation6 + $0x220] sm:$0xff]
          %v2832 = vld [vmem:[#allocation6 + $0x228] sm:$0xff]
          %v2833 = vld [vmem:[#allocation6 + $0x230] sm:$0xff]
          %v2834 = vld [vmem:[#allocation6 + $0x238] sm:$0xff]
          %v2835 = vld [vmem:[#allocation6 + $0x240] sm:$0xff]
          %v2836 = vld [vmem:[#allocation6 + $0x248] sm:$0xff]
          %v2837 = vld [vmem:[#allocation6 + $0x250] sm:$0xff]
          %v2838 = vld [vmem:[#allocation6 + $0x258] sm:$0xff]
          %v2839 = vld [vmem:[#allocation6 + $0x260] sm:$0xff]
          %v2840 = vld [vmem:[#allocation6 + $0x268] sm:$0xff]
          %v2841 = vld [vmem:[#allocation6 + $0x270] sm:$0xff]
          %v2842 = vld [vmem:[#allocation6 + $0x278] sm:$0xff]
          %v2843 = vld [vmem:[#allocation6 + $0x280] sm:$0xff]
          %v2844 = vld [vmem:[#allocation6 + $0x288] sm:$0xff]
          %v2845 = vld [vmem:[#allocation6 + $0x290] sm:$0xff]
          %v2846 = vld [vmem:[#allocation6 + $0x298] sm:$0xff]
          %v2847 = vld [vmem:[#allocation6 + $0x2a0] sm:$0xff]
          %v2848 = vld [vmem:[#allocation6 + $0x2a8] sm:$0xff]
          %v2849 = vld [vmem:[#allocation6 + $0x2b0] sm:$0xff]
          %v2850 = vld [vmem:[#allocation6 + $0x2b8] sm:$0xff]
          %v2851 = vld [vmem:[#allocation6 + $0x2c0] sm:$0xff]
          %v2852 = vld [vmem:[#allocation6 + $0x2c8] sm:$0xff]
          %v2853 = vld [vmem:[#allocation6 + $0x2d0] sm:$0xff]
          %v2854 = vld [vmem:[#allocation6 + $0x2d8] sm:$0xff]
          %v2855 = vld [vmem:[#allocation6 + $0x2e0] sm:$0xff]
          %v2856 = vld [vmem:[#allocation6 + $0x2e8] sm:$0xff]
          %v2857 = vld [vmem:[#allocation6 + $0x2f0] sm:$0xff]
          %v2858 = vld [vmem:[#allocation6 + $0x2f8] sm:$0xff]
          %v2859 = vld [vmem:[#allocation6 + $0x300] sm:$0xff]
          %v2860 = vld [vmem:[#allocation6 + $0x308] sm:$0xff]
          %v2861 = vld [vmem:[#allocation6 + $0x310] sm:$0xff]
          %v2862 = vld [vmem:[#allocation6 + $0x318] sm:$0xff]
          %v2863 = vld [vmem:[#allocation6 + $0x320] sm:$0xff]
          %v2864 = vld [vmem:[#allocation6 + $0x328] sm:$0xff]
          %v2865 = vld [vmem:[#allocation6 + $0x330] sm:$0xff]
          %v2866 = vld [vmem:[#allocation6 + $0x338] sm:$0xff]
          %v2867 = vld [vmem:[#allocation6 + $0x340] sm:$0xff]
          %v2868 = vld [vmem:[#allocation6 + $0x348] sm:$0xff]
          %v2869 = vld [vmem:[#allocation6 + $0x350] sm:$0xff]
          %v2870 = vld [vmem:[#allocation6 + $0x358] sm:$0xff]
          %v2871 = vld [vmem:[#allocation6 + $0x360] sm:$0xff]
          %v2872 = vld [vmem:[#allocation6 + $0x368] sm:$0xff]
          %v2873 = vld [vmem:[#allocation6 + $0x370] sm:$0xff]
          %v2874 = vld [vmem:[#allocation6 + $0x378] sm:$0xff]
          %v2875 = vld [vmem:[#allocation6 + $0x380] sm:$0xff]
          %v2876 = vld [vmem:[#allocation6 + $0x388] sm:$0xff]
          %v2877 = vld [vmem:[#allocation6 + $0x390] sm:$0xff]
          %v2878 = vld [vmem:[#allocation6 + $0x398] sm:$0xff]
          %v2879 = vld [vmem:[#allocation6 + $0x3a0] sm:$0xff]
          %v2880 = vld [vmem:[#allocation6 + $0x3a8] sm:$0xff]
          %v2881 = vld [vmem:[#allocation6 + $0x3b0] sm:$0xff]
          %v2882 = vld [vmem:[#allocation6 + $0x3b8] sm:$0xff]
          %v2883 = vld [vmem:[#allocation6 + $0x3c0] sm:$0xff]
          %v2884 = vld [vmem:[#allocation6 + $0x3c8] sm:$0xff]
          %v2885 = vld [vmem:[#allocation6 + $0x3d0] sm:$0xff]
          %v2886 = vld [vmem:[#allocation6 + $0x3d8] sm:$0xff]
          %v2887 = vld [vmem:[#allocation6 + $0x3e0] sm:$0xff]
          %v2888 = vld [vmem:[#allocation6 + $0x3e8] sm:$0xff]
          %v2889 = vld [vmem:[#allocation6 + $0x3f0] sm:$0xff]
          %v2890 = vld [vmem:[#allocation6 + $0x3f8] sm:$0xff]
          %v2891 = vld [vmem:[#allocation6 + $0x400] sm:$0xff]
          %v2892 = vld [vmem:[#allocation6 + $0x408] sm:$0xff]
          %v2893 = vld [vmem:[#allocation6 + $0x410] sm:$0xff]
          %v2894 = vld [vmem:[#allocation6 + $0x418] sm:$0xff]
          %v2895 = vld [vmem:[#allocation6 + $0x420] sm:$0xff]
          %v2896 = vld [vmem:[#allocation6 + $0x428] sm:$0xff]
          %v2897 = vld [vmem:[#allocation6 + $0x430] sm:$0xff]
          %v2898 = vld [vmem:[#allocation6 + $0x438] sm:$0xff]
          %v2899 = vld [vmem:[#allocation6 + $0x440] sm:$0xff]
          %v2900 = vld [vmem:[#allocation6 + $0x448] sm:$0xff]
          %v2901 = vld [vmem:[#allocation6 + $0x450] sm:$0xff]
          %v2902 = vld [vmem:[#allocation6 + $0x458] sm:$0xff]
          %v2903 = vld [vmem:[#allocation6 + $0x460] sm:$0xff]
          %v2904 = vld [vmem:[#allocation6 + $0x468] sm:$0xff]
          %v2905 = vld [vmem:[#allocation6 + $0x470] sm:$0xff]
          %v2906 = vld [vmem:[#allocation6 + $0x478] sm:$0xff]
          %v2907 = vld [vmem:[#allocation6 + $0x480] sm:$0xff]
          %v2908 = vld [vmem:[#allocation6 + $0x488] sm:$0xff]
          %v2909 = vld [vmem:[#allocation6 + $0x490] sm:$0xff]
          %v2910 = vld [vmem:[#allocation6 + $0x498] sm:$0xff]
          %v2911 = vld [vmem:[#allocation6 + $0x4a0] sm:$0xff]
          %v2912 = vld [vmem:[#allocation6 + $0x4a8] sm:$0xff]
          %v2913 = vld [vmem:[#allocation6 + $0x4b0] sm:$0xff]
          %v2914 = vld [vmem:[#allocation6 + $0x4b8] sm:$0xff]
          %v2915 = vld [vmem:[#allocation6 + $0x4c0] sm:$0xff]
          %v2916 = vld [vmem:[#allocation6 + $0x4c8] sm:$0xff]
          %v2917 = vld [vmem:[#allocation6 + $0x4d0] sm:$0xff]
          %v2918 = vld [vmem:[#allocation6 + $0x4d8] sm:$0xff]
          %v2919 = vld [vmem:[#allocation6 + $0x4e0] sm:$0xff]
          %v2920 = vld [vmem:[#allocation6 + $0x4e8] sm:$0xff]
          %v2921 = vld [vmem:[#allocation6 + $0x4f0] sm:$0xff]
          %v2922 = vld [vmem:[#allocation6 + $0x4f8] sm:$0xff]
          %v2923 = vld [vmem:[#allocation6 + $0x500] sm:$0xff]
          %v2924 = vld [vmem:[#allocation6 + $0x508] sm:$0xff]
          %v2925 = vld [vmem:[#allocation6 + $0x510] sm:$0xff]
          %v2926 = vld [vmem:[#allocation6 + $0x518] sm:$0xff]
          %v2927 = vld [vmem:[#allocation6 + $0x520] sm:$0xff]
          %v2928 = vld [vmem:[#allocation6 + $0x528] sm:$0xff]
          %v2929 = vld [vmem:[#allocation6 + $0x530] sm:$0xff]
          %v2930 = vld [vmem:[#allocation6 + $0x538] sm:$0xff]
          %v2931 = vld [vmem:[#allocation6 + $0x540] sm:$0xff]
          %v2932 = vld [vmem:[#allocation6 + $0x548] sm:$0xff]
          %v2933 = vld [vmem:[#allocation6 + $0x550] sm:$0xff]
          %v2934 = vld [vmem:[#allocation6 + $0x558] sm:$0xff]
          %v2935 = vld [vmem:[#allocation6 + $0x560] sm:$0xff]
          %v2936 = vld [vmem:[#allocation6 + $0x568] sm:$0xff]
          %v2937 = vld [vmem:[#allocation6 + $0x570] sm:$0xff]
          %v2938 = vld [vmem:[#allocation6 + $0x578] sm:$0xff]
          %v2939 = vld [vmem:[#allocation6 + $0x580] sm:$0xff]
          %v2940 = vld [vmem:[#allocation6 + $0x588] sm:$0xff]
          %v2941 = vld [vmem:[#allocation6 + $0x590] sm:$0xff]
          %v2942 = vld [vmem:[#allocation6 + $0x598] sm:$0xff]
          %v2943 = vld [vmem:[#allocation6 + $0x5a0] sm:$0xff]
          %v2944 = vld [vmem:[#allocation6 + $0x5a8] sm:$0xff]
          %v2945 = vld [vmem:[#allocation6 + $0x5b0] sm:$0xff]
          %v2946 = vld [vmem:[#allocation6 + $0x5b8] sm:$0xff]
          %v2947 = vld [vmem:[#allocation6 + $0x5c0] sm:$0xff]
          %v2948 = vld [vmem:[#allocation6 + $0x5c8] sm:$0xff]
          %v2949 = vld [vmem:[#allocation6 + $0x5d0] sm:$0xff]
          %v2950 = vld [vmem:[#allocation6 + $0x5d8] sm:$0xff]
          %v2951 = vld [vmem:[#allocation6 + $0x5e0] sm:$0xff]
          %v2952 = vld [vmem:[#allocation6 + $0x5e8] sm:$0xff]
          %v2953 = vld [vmem:[#allocation6 + $0x5f0] sm:$0xff]
          %v2954 = vld [vmem:[#allocation6 + $0x5f8] sm:$0xff]
          %v3147 = vunpack.c.l.b16 %v2763
          %v3148 = vunpack.c.h.b16 %v2763
          %v3149 = vunpack.c.l.b16 %v2764
          %v3150 = vunpack.c.h.b16 %v2764
          %v3151 = vunpack.c.l.b16 %v2765
          %v3152 = vunpack.c.h.b16 %v2765
          %v3153 = vunpack.c.l.b16 %v2766
          %v3154 = vunpack.c.h.b16 %v2766
          %v3155 = vunpack.c.l.b16 %v2767
          %v3156 = vunpack.c.h.b16 %v2767
          %v3157 = vunpack.c.l.b16 %v2768
          %v3158 = vunpack.c.h.b16 %v2768
          %v3159 = vunpack.c.l.b16 %v2769
          %v3160 = vunpack.c.h.b16 %v2769
          %v3161 = vunpack.c.l.b16 %v2770
          %v3162 = vunpack.c.h.b16 %v2770
          %v3163 = vunpack.c.l.b16 %v2771
          %v3164 = vunpack.c.h.b16 %v2771
          %v3165 = vunpack.c.l.b16 %v2772
          %v3166 = vunpack.c.h.b16 %v2772
          %v3167 = vunpack.c.l.b16 %v2773
          %v3168 = vunpack.c.h.b16 %v2773
          %v3169 = vunpack.c.l.b16 %v2774
          %v3170 = vunpack.c.h.b16 %v2774
          %v3171 = vunpack.c.l.b16 %v2775
          %v3172 = vunpack.c.h.b16 %v2775
          %v3173 = vunpack.c.l.b16 %v2776
          %v3174 = vunpack.c.h.b16 %v2776
          %v3175 = vunpack.c.l.b16 %v2777
          %v3176 = vunpack.c.h.b16 %v2777
          %v3177 = vunpack.c.l.b16 %v2778
          %v3178 = vunpack.c.h.b16 %v2778
          %v3179 = vunpack.c.l.b16 %v2779
          %v3180 = vunpack.c.h.b16 %v2779
          %v3181 = vunpack.c.l.b16 %v2780
          %v3182 = vunpack.c.h.b16 %v2780
          %v3183 = vunpack.c.l.b16 %v2781
          %v3184 = vunpack.c.h.b16 %v2781
          %v3185 = vunpack.c.l.b16 %v2782
          %v3186 = vunpack.c.h.b16 %v2782
          %v3187 = vunpack.c.l.b16 %v2783
          %v3188 = vunpack.c.h.b16 %v2783
          %v3189 = vunpack.c.l.b16 %v2784
          %v3190 = vunpack.c.h.b16 %v2784
          %v3191 = vunpack.c.l.b16 %v2785
          %v3192 = vunpack.c.h.b16 %v2785
          %v3193 = vunpack.c.l.b16 %v2786
          %v3194 = vunpack.c.h.b16 %v2786
          %v3195 = vunpack.c.l.b16 %v2787
          %v3196 = vunpack.c.h.b16 %v2787
          %v3197 = vunpack.c.l.b16 %v2788
          %v3198 = vunpack.c.h.b16 %v2788
          %v3199 = vunpack.c.l.b16 %v2789
          %v3200 = vunpack.c.h.b16 %v2789
          %v3201 = vunpack.c.l.b16 %v2790
          %v3202 = vunpack.c.h.b16 %v2790
          %v3203 = vunpack.c.l.b16 %v2791
          %v3204 = vunpack.c.h.b16 %v2791
          %v3205 = vunpack.c.l.b16 %v2792
          %v3206 = vunpack.c.h.b16 %v2792
          %v3207 = vunpack.c.l.b16 %v2793
          %v3208 = vunpack.c.h.b16 %v2793
          %v3209 = vunpack.c.l.b16 %v2794
          %v3210 = vunpack.c.h.b16 %v2794
          %v3211 = vunpack.c.l.b16 %v2795
          %v3212 = vunpack.c.h.b16 %v2795
          %v3213 = vunpack.c.l.b16 %v2796
          %v3214 = vunpack.c.h.b16 %v2796
          %v3215 = vunpack.c.l.b16 %v2797
          %v3216 = vunpack.c.h.b16 %v2797
          %v3217 = vunpack.c.l.b16 %v2798
          %v3218 = vunpack.c.h.b16 %v2798
          %v3219 = vunpack.c.l.b16 %v2799
          %v3220 = vunpack.c.h.b16 %v2799
          %v3221 = vunpack.c.l.b16 %v2800
          %v3222 = vunpack.c.h.b16 %v2800
          %v3223 = vunpack.c.l.b16 %v2801
          %v3224 = vunpack.c.h.b16 %v2801
          %v3225 = vunpack.c.l.b16 %v2802
          %v3226 = vunpack.c.h.b16 %v2802
          %v3227 = vunpack.c.l.b16 %v2803
          %v3228 = vunpack.c.h.b16 %v2803
          %v3229 = vunpack.c.l.b16 %v2804
          %v3230 = vunpack.c.h.b16 %v2804
          %v3231 = vunpack.c.l.b16 %v2805
          %v3232 = vunpack.c.h.b16 %v2805
          %v3233 = vunpack.c.l.b16 %v2806
          %v3234 = vunpack.c.h.b16 %v2806
          %v3235 = vunpack.c.l.b16 %v2807
          %v3236 = vunpack.c.h.b16 %v2807
          %v3237 = vunpack.c.l.b16 %v2808
          %v3238 = vunpack.c.h.b16 %v2808
          %v3239 = vunpack.c.l.b16 %v2809
          %v3240 = vunpack.c.h.b16 %v2809
          %v3241 = vunpack.c.l.b16 %v2810
          %v3242 = vunpack.c.h.b16 %v2810
          %v3243 = vunpack.c.l.b16 %v2811
          %v3244 = vunpack.c.h.b16 %v2811
          %v3245 = vunpack.c.l.b16 %v2812
          %v3246 = vunpack.c.h.b16 %v2812
          %v3247 = vunpack.c.l.b16 %v2813
          %v3248 = vunpack.c.h.b16 %v2813
          %v3249 = vunpack.c.l.b16 %v2814
          %v3250 = vunpack.c.h.b16 %v2814
          %v3251 = vunpack.c.l.b16 %v2815
          %v3252 = vunpack.c.h.b16 %v2815
          %v3253 = vunpack.c.l.b16 %v2816
          %v3254 = vunpack.c.h.b16 %v2816
          %v3255 = vunpack.c.l.b16 %v2817
          %v3256 = vunpack.c.h.b16 %v2817
          %v3257 = vunpack.c.l.b16 %v2818
          %v3258 = vunpack.c.h.b16 %v2818
          %v3259 = vunpack.c.l.b16 %v2819
          %v3260 = vunpack.c.h.b16 %v2819
          %v3261 = vunpack.c.l.b16 %v2820
          %v3262 = vunpack.c.h.b16 %v2820
          %v3263 = vunpack.c.l.b16 %v2821
          %v3264 = vunpack.c.h.b16 %v2821
          %v3265 = vunpack.c.l.b16 %v2822
          %v3266 = vunpack.c.h.b16 %v2822
          %v3267 = vunpack.c.l.b16 %v2823
          %v3268 = vunpack.c.h.b16 %v2823
          %v3269 = vunpack.c.l.b16 %v2824
          %v3270 = vunpack.c.h.b16 %v2824
          %v3271 = vunpack.c.l.b16 %v2825
          %v3272 = vunpack.c.h.b16 %v2825
          %v3273 = vunpack.c.l.b16 %v2826
          %v3274 = vunpack.c.h.b16 %v2826
          %v3275 = vunpack.c.l.b16 %v2827
          %v3276 = vunpack.c.h.b16 %v2827
          %v3277 = vunpack.c.l.b16 %v2828
          %v3278 = vunpack.c.h.b16 %v2828
          %v3279 = vunpack.c.l.b16 %v2829
          %v3280 = vunpack.c.h.b16 %v2829
          %v3281 = vunpack.c.l.b16 %v2830
          %v3282 = vunpack.c.h.b16 %v2830
          %v3283 = vunpack.c.l.b16 %v2831
          %v3284 = vunpack.c.h.b16 %v2831
          %v3285 = vunpack.c.l.b16 %v2832
          %v3286 = vunpack.c.h.b16 %v2832
          %v3287 = vunpack.c.l.b16 %v2833
          %v3288 = vunpack.c.h.b16 %v2833
          %v3289 = vunpack.c.l.b16 %v2834
          %v3290 = vunpack.c.h.b16 %v2834
          %v3291 = vunpack.c.l.b16 %v2835
          %v3292 = vunpack.c.h.b16 %v2835
          %v3293 = vunpack.c.l.b16 %v2836
          %v3294 = vunpack.c.h.b16 %v2836
          %v3295 = vunpack.c.l.b16 %v2837
          %v3296 = vunpack.c.h.b16 %v2837
          %v3297 = vunpack.c.l.b16 %v2838
          %v3298 = vunpack.c.h.b16 %v2838
          %v3299 = vunpack.c.l.b16 %v2839
          %v3300 = vunpack.c.h.b16 %v2839
          %v3301 = vunpack.c.l.b16 %v2840
          %v3302 = vunpack.c.h.b16 %v2840
          %v3303 = vunpack.c.l.b16 %v2841
          %v3304 = vunpack.c.h.b16 %v2841
          %v3305 = vunpack.c.l.b16 %v2842
          %v3306 = vunpack.c.h.b16 %v2842
          %v3307 = vunpack.c.l.b16 %v2843
          %v3308 = vunpack.c.h.b16 %v2843
          %v3309 = vunpack.c.l.b16 %v2844
          %v3310 = vunpack.c.h.b16 %v2844
          %v3311 = vunpack.c.l.b16 %v2845
          %v3312 = vunpack.c.h.b16 %v2845
          %v3313 = vunpack.c.l.b16 %v2846
          %v3314 = vunpack.c.h.b16 %v2846
          %v3315 = vunpack.c.l.b16 %v2847
          %v3316 = vunpack.c.h.b16 %v2847
          %v3317 = vunpack.c.l.b16 %v2848
          %v3318 = vunpack.c.h.b16 %v2848
          %v3319 = vunpack.c.l.b16 %v2849
          %v3320 = vunpack.c.h.b16 %v2849
          %v3321 = vunpack.c.l.b16 %v2850
          %v3322 = vunpack.c.h.b16 %v2850
          %v3323 = vunpack.c.l.b16 %v2851
          %v3324 = vunpack.c.h.b16 %v2851
          %v3325 = vunpack.c.l.b16 %v2852
          %v3326 = vunpack.c.h.b16 %v2852
          %v3327 = vunpack.c.l.b16 %v2853
          %v3328 = vunpack.c.h.b16 %v2853
          %v3329 = vunpack.c.l.b16 %v2854
          %v3330 = vunpack.c.h.b16 %v2854
          %v3331 = vunpack.c.l.b16 %v2855
          %v3332 = vunpack.c.h.b16 %v2855
          %v3333 = vunpack.c.l.b16 %v2856
          %v3334 = vunpack.c.h.b16 %v2856
          %v3335 = vunpack.c.l.b16 %v2857
          %v3336 = vunpack.c.h.b16 %v2857
          %v3337 = vunpack.c.l.b16 %v2858
          %v3338 = vunpack.c.h.b16 %v2858
          %v3339 = vunpack.c.l.b16 %v2859
          %v3340 = vunpack.c.h.b16 %v2859
          %v3341 = vunpack.c.l.b16 %v2860
          %v3342 = vunpack.c.h.b16 %v2860
          %v3343 = vunpack.c.l.b16 %v2861
          %v3344 = vunpack.c.h.b16 %v2861
          %v3345 = vunpack.c.l.b16 %v2862
          %v3346 = vunpack.c.h.b16 %v2862
          %v3347 = vunpack.c.l.b16 %v2863
          %v3348 = vunpack.c.h.b16 %v2863
          %v3349 = vunpack.c.l.b16 %v2864
          %v3350 = vunpack.c.h.b16 %v2864
          %v3351 = vunpack.c.l.b16 %v2865
          %v3352 = vunpack.c.h.b16 %v2865
          %v3353 = vunpack.c.l.b16 %v2866
          %v3354 = vunpack.c.h.b16 %v2866
          %v3355 = vunpack.c.l.b16 %v2867
          %v3356 = vunpack.c.h.b16 %v2867
          %v3357 = vunpack.c.l.b16 %v2868
          %v3358 = vunpack.c.h.b16 %v2868
          %v3359 = vunpack.c.l.b16 %v2869
          %v3360 = vunpack.c.h.b16 %v2869
          %v3361 = vunpack.c.l.b16 %v2870
          %v3362 = vunpack.c.h.b16 %v2870
          %v3363 = vunpack.c.l.b16 %v2871
          %v3364 = vunpack.c.h.b16 %v2871
          %v3365 = vunpack.c.l.b16 %v2872
          %v3366 = vunpack.c.h.b16 %v2872
          %v3367 = vunpack.c.l.b16 %v2873
          %v3368 = vunpack.c.h.b16 %v2873
          %v3369 = vunpack.c.l.b16 %v2874
          %v3370 = vunpack.c.h.b16 %v2874
          %v3371 = vunpack.c.l.b16 %v2875
          %v3372 = vunpack.c.h.b16 %v2875
          %v3373 = vunpack.c.l.b16 %v2876
          %v3374 = vunpack.c.h.b16 %v2876
          %v3375 = vunpack.c.l.b16 %v2877
          %v3376 = vunpack.c.h.b16 %v2877
          %v3377 = vunpack.c.l.b16 %v2878
          %v3378 = vunpack.c.h.b16 %v2878
          %v3379 = vunpack.c.l.b16 %v2879
          %v3380 = vunpack.c.h.b16 %v2879
          %v3381 = vunpack.c.l.b16 %v2880
          %v3382 = vunpack.c.h.b16 %v2880
          %v3383 = vunpack.c.l.b16 %v2881
          %v3384 = vunpack.c.h.b16 %v2881
          %v3385 = vunpack.c.l.b16 %v2882
          %v3386 = vunpack.c.h.b16 %v2882
          %v3387 = vunpack.c.l.b16 %v2883
          %v3388 = vunpack.c.h.b16 %v2883
          %v3389 = vunpack.c.l.b16 %v2884
          %v3390 = vunpack.c.h.b16 %v2884
          %v3391 = vunpack.c.l.b16 %v2885
          %v3392 = vunpack.c.h.b16 %v2885
          %v3393 = vunpack.c.l.b16 %v2886
          %v3394 = vunpack.c.h.b16 %v2886
          %v3395 = vunpack.c.l.b16 %v2887
          %v3396 = vunpack.c.h.b16 %v2887
          %v3397 = vunpack.c.l.b16 %v2888
          %v3398 = vunpack.c.h.b16 %v2888
          %v3399 = vunpack.c.l.b16 %v2889
          %v3400 = vunpack.c.h.b16 %v2889
          %v3401 = vunpack.c.l.b16 %v2890
          %v3402 = vunpack.c.h.b16 %v2890
          %v3403 = vunpack.c.l.b16 %v2891
          %v3404 = vunpack.c.h.b16 %v2891
          %v3405 = vunpack.c.l.b16 %v2892
          %v3406 = vunpack.c.h.b16 %v2892
          %v3407 = vunpack.c.l.b16 %v2893
          %v3408 = vunpack.c.h.b16 %v2893
          %v3409 = vunpack.c.l.b16 %v2894
          %v3410 = vunpack.c.h.b16 %v2894
          %v3411 = vunpack.c.l.b16 %v2895
          %v3412 = vunpack.c.h.b16 %v2895
          %v3413 = vunpack.c.l.b16 %v2896
          %v3414 = vunpack.c.h.b16 %v2896
          %v3415 = vunpack.c.l.b16 %v2897
          %v3416 = vunpack.c.h.b16 %v2897
          %v3417 = vunpack.c.l.b16 %v2898
          %v3418 = vunpack.c.h.b16 %v2898
          %v3419 = vunpack.c.l.b16 %v2899
          %v3420 = vunpack.c.h.b16 %v2899
          %v3421 = vunpack.c.l.b16 %v2900
          %v3422 = vunpack.c.h.b16 %v2900
          %v3423 = vunpack.c.l.b16 %v2901
          %v3424 = vunpack.c.h.b16 %v2901
          %v3425 = vunpack.c.l.b16 %v2902
          %v3426 = vunpack.c.h.b16 %v2902
          %v3427 = vunpack.c.l.b16 %v2903
          %v3428 = vunpack.c.h.b16 %v2903
          %v3429 = vunpack.c.l.b16 %v2904
          %v3430 = vunpack.c.h.b16 %v2904
          %v3431 = vunpack.c.l.b16 %v2905
          %v3432 = vunpack.c.h.b16 %v2905
          %v3433 = vunpack.c.l.b16 %v2906
          %v3434 = vunpack.c.h.b16 %v2906
          %v3435 = vunpack.c.l.b16 %v2907
          %v3436 = vunpack.c.h.b16 %v2907
          %v3437 = vunpack.c.l.b16 %v2908
          %v3438 = vunpack.c.h.b16 %v2908
          %v3439 = vunpack.c.l.b16 %v2909
          %v3440 = vunpack.c.h.b16 %v2909
          %v3441 = vunpack.c.l.b16 %v2910
          %v3442 = vunpack.c.h.b16 %v2910
          %v3443 = vunpack.c.l.b16 %v2911
          %v3444 = vunpack.c.h.b16 %v2911
          %v3445 = vunpack.c.l.b16 %v2912
          %v3446 = vunpack.c.h.b16 %v2912
          %v3447 = vunpack.c.l.b16 %v2913
          %v3448 = vunpack.c.h.b16 %v2913
          %v3449 = vunpack.c.l.b16 %v2914
          %v3450 = vunpack.c.h.b16 %v2914
          %v3451 = vunpack.c.l.b16 %v2915
          %v3452 = vunpack.c.h.b16 %v2915
          %v3453 = vunpack.c.l.b16 %v2916
          %v3454 = vunpack.c.h.b16 %v2916
          %v3455 = vunpack.c.l.b16 %v2917
          %v3456 = vunpack.c.h.b16 %v2917
          %v3457 = vunpack.c.l.b16 %v2918
          %v3458 = vunpack.c.h.b16 %v2918
          %v3459 = vunpack.c.l.b16 %v2919
          %v3460 = vunpack.c.h.b16 %v2919
          %v3461 = vunpack.c.l.b16 %v2920
          %v3462 = vunpack.c.h.b16 %v2920
          %v3463 = vunpack.c.l.b16 %v2921
          %v3464 = vunpack.c.h.b16 %v2921
          %v3465 = vunpack.c.l.b16 %v2922
          %v3466 = vunpack.c.h.b16 %v2922
          %v3467 = vunpack.c.l.b16 %v2923
          %v3468 = vunpack.c.h.b16 %v2923
          %v3469 = vunpack.c.l.b16 %v2924
          %v3470 = vunpack.c.h.b16 %v2924
          %v3471 = vunpack.c.l.b16 %v2925
          %v3472 = vunpack.c.h.b16 %v2925
          %v3473 = vunpack.c.l.b16 %v2926
          %v3474 = vunpack.c.h.b16 %v2926
          %v3475 = vunpack.c.l.b16 %v2927
          %v3476 = vunpack.c.h.b16 %v2927
          %v3477 = vunpack.c.l.b16 %v2928
          %v3478 = vunpack.c.h.b16 %v2928
          %v3479 = vunpack.c.l.b16 %v2929
          %v3480 = vunpack.c.h.b16 %v2929
          %v3481 = vunpack.c.l.b16 %v2930
          %v3482 = vunpack.c.h.b16 %v2930
          %v3483 = vunpack.c.l.b16 %v2931
          %v3484 = vunpack.c.h.b16 %v2931
          %v3485 = vunpack.c.l.b16 %v2932
          %v3486 = vunpack.c.h.b16 %v2932
          %v3487 = vunpack.c.l.b16 %v2933
          %v3488 = vunpack.c.h.b16 %v2933
          %v3489 = vunpack.c.l.b16 %v2934
          %v3490 = vunpack.c.h.b16 %v2934
          %v3491 = vunpack.c.l.b16 %v2935
          %v3492 = vunpack.c.h.b16 %v2935
          %v3493 = vunpack.c.l.b16 %v2936
          %v3494 = vunpack.c.h.b16 %v2936
          %v3495 = vunpack.c.l.b16 %v2937
          %v3496 = vunpack.c.h.b16 %v2937
          %v3497 = vunpack.c.l.b16 %v2938
          %v3498 = vunpack.c.h.b16 %v2938
          %v3499 = vunpack.c.l.b16 %v2939
          %v3500 = vunpack.c.h.b16 %v2939
          %v3501 = vunpack.c.l.b16 %v2940
          %v3502 = vunpack.c.h.b16 %v2940
          %v3503 = vunpack.c.l.b16 %v2941
          %v3504 = vunpack.c.h.b16 %v2941
          %v3505 = vunpack.c.l.b16 %v2942
          %v3506 = vunpack.c.h.b16 %v2942
          %v3507 = vunpack.c.l.b16 %v2943
          %v3508 = vunpack.c.h.b16 %v2943
          %v3509 = vunpack.c.l.b16 %v2944
          %v3510 = vunpack.c.h.b16 %v2944
          %v3511 = vunpack.c.l.b16 %v2945
          %v3512 = vunpack.c.h.b16 %v2945
          %v3513 = vunpack.c.l.b16 %v2946
          %v3514 = vunpack.c.h.b16 %v2946
          %v3515 = vunpack.c.l.b16 %v2947
          %v3516 = vunpack.c.h.b16 %v2947
          %v3517 = vunpack.c.l.b16 %v2948
          %v3518 = vunpack.c.h.b16 %v2948
          %v3519 = vunpack.c.l.b16 %v2949
          %v3520 = vunpack.c.h.b16 %v2949
          %v3521 = vunpack.c.l.b16 %v2950
          %v3522 = vunpack.c.h.b16 %v2950
          %v3523 = vunpack.c.l.b16 %v2951
          %v3524 = vunpack.c.h.b16 %v2951
          %v3525 = vunpack.c.l.b16 %v2952
          %v3526 = vunpack.c.h.b16 %v2952
          %v3527 = vunpack.c.l.b16 %v2953
          %v3528 = vunpack.c.h.b16 %v2953
          %v3529 = vunpack.c.l.b16 %v2954
          %v3530 = vunpack.c.h.b16 %v2954
          %v3531 = vpack.c.b16 %v3149, %v3147
          %v3532 = vpack.c.b16 %v3150, %v3148
          %v3533 = vpack.c.b16 %v3153, %v3151
          %v3534 = vpack.c.b16 %v3154, %v3152
          %v3535 = vpack.c.b16 %v3157, %v3155
          %v3536 = vpack.c.b16 %v3158, %v3156
          %v3537 = vpack.c.b16 %v3161, %v3159
          %v3538 = vpack.c.b16 %v3162, %v3160
          %v3539 = vpack.c.b16 %v3165, %v3163
          %v3540 = vpack.c.b16 %v3166, %v3164
          %v3541 = vpack.c.b16 %v3169, %v3167
          %v3542 = vpack.c.b16 %v3170, %v3168
          %v3543 = vpack.c.b16 %v3173, %v3171
          %v3544 = vpack.c.b16 %v3174, %v3172
          %v3545 = vpack.c.b16 %v3177, %v3175
          %v3546 = vpack.c.b16 %v3178, %v3176
          %v3547 = vpack.c.b16 %v3181, %v3179
          %v3548 = vpack.c.b16 %v3182, %v3180
          %v3549 = vpack.c.b16 %v3185, %v3183
          %v3550 = vpack.c.b16 %v3186, %v3184
          %v3551 = vpack.c.b16 %v3189, %v3187
          %v3552 = vpack.c.b16 %v3190, %v3188
          %v3553 = vpack.c.b16 %v3193, %v3191
          %v3554 = vpack.c.b16 %v3194, %v3192
          %v3555 = vpack.c.b16 %v3197, %v3195
          %v3556 = vpack.c.b16 %v3198, %v3196
          %v3557 = vpack.c.b16 %v3201, %v3199
          %v3558 = vpack.c.b16 %v3202, %v3200
          %v3559 = vpack.c.b16 %v3205, %v3203
          %v3560 = vpack.c.b16 %v3206, %v3204
          %v3561 = vpack.c.b16 %v3209, %v3207
          %v3562 = vpack.c.b16 %v3210, %v3208
          %v3563 = vpack.c.b16 %v3213, %v3211
          %v3564 = vpack.c.b16 %v3214, %v3212
          %v3565 = vpack.c.b16 %v3217, %v3215
          %v3566 = vpack.c.b16 %v3218, %v3216
          %v3567 = vpack.c.b16 %v3221, %v3219
          %v3568 = vpack.c.b16 %v3222, %v3220
          %v3569 = vpack.c.b16 %v3225, %v3223
          %v3570 = vpack.c.b16 %v3226, %v3224
          %v3571 = vpack.c.b16 %v3229, %v3227
          %v3572 = vpack.c.b16 %v3230, %v3228
          %v3573 = vpack.c.b16 %v3233, %v3231
          %v3574 = vpack.c.b16 %v3234, %v3232
          %v3575 = vpack.c.b16 %v3237, %v3235
          %v3576 = vpack.c.b16 %v3238, %v3236
          %v3577 = vpack.c.b16 %v3241, %v3239
          %v3578 = vpack.c.b16 %v3242, %v3240
          %v3579 = vpack.c.b16 %v3245, %v3243
          %v3580 = vpack.c.b16 %v3246, %v3244
          %v3581 = vpack.c.b16 %v3249, %v3247
          %v3582 = vpack.c.b16 %v3250, %v3248
          %v3583 = vpack.c.b16 %v3253, %v3251
          %v3584 = vpack.c.b16 %v3254, %v3252
          %v3585 = vpack.c.b16 %v3257, %v3255
          %v3586 = vpack.c.b16 %v3258, %v3256
          %v3587 = vpack.c.b16 %v3261, %v3259
          %v3588 = vpack.c.b16 %v3262, %v3260
          %v3589 = vpack.c.b16 %v3265, %v3263
          %v3590 = vpack.c.b16 %v3266, %v3264
          %v3591 = vpack.c.b16 %v3269, %v3267
          %v3592 = vpack.c.b16 %v3270, %v3268
          %v3593 = vpack.c.b16 %v3273, %v3271
          %v3594 = vpack.c.b16 %v3274, %v3272
          %v3595 = vpack.c.b16 %v3277, %v3275
          %v3596 = vpack.c.b16 %v3278, %v3276
          %v3597 = vpack.c.b16 %v3281, %v3279
          %v3598 = vpack.c.b16 %v3282, %v3280
          %v3599 = vpack.c.b16 %v3285, %v3283
          %v3600 = vpack.c.b16 %v3286, %v3284
          %v3601 = vpack.c.b16 %v3289, %v3287
          %v3602 = vpack.c.b16 %v3290, %v3288
          %v3603 = vpack.c.b16 %v3293, %v3291
          %v3604 = vpack.c.b16 %v3294, %v3292
          %v3605 = vpack.c.b16 %v3297, %v3295
          %v3606 = vpack.c.b16 %v3298, %v3296
          %v3607 = vpack.c.b16 %v3301, %v3299
          %v3608 = vpack.c.b16 %v3302, %v3300
          %v3609 = vpack.c.b16 %v3305, %v3303
          %v3610 = vpack.c.b16 %v3306, %v3304
          %v3611 = vpack.c.b16 %v3309, %v3307
          %v3612 = vpack.c.b16 %v3310, %v3308
          %v3613 = vpack.c.b16 %v3313, %v3311
          %v3614 = vpack.c.b16 %v3314, %v3312
          %v3615 = vpack.c.b16 %v3317, %v3315
          %v3616 = vpack.c.b16 %v3318, %v3316
          %v3617 = vpack.c.b16 %v3321, %v3319
          %v3618 = vpack.c.b16 %v3322, %v3320
          %v3619 = vpack.c.b16 %v3325, %v3323
          %v3620 = vpack.c.b16 %v3326, %v3324
          %v3621 = vpack.c.b16 %v3329, %v3327
          %v3622 = vpack.c.b16 %v3330, %v3328
          %v3623 = vpack.c.b16 %v3333, %v3331
          %v3624 = vpack.c.b16 %v3334, %v3332
          %v3625 = vpack.c.b16 %v3337, %v3335
          %v3626 = vpack.c.b16 %v3338, %v3336
          %v3627 = vpack.c.b16 %v3341, %v3339
          %v3628 = vpack.c.b16 %v3342, %v3340
          %v3629 = vpack.c.b16 %v3345, %v3343
          %v3630 = vpack.c.b16 %v3346, %v3344
          %v3631 = vpack.c.b16 %v3349, %v3347
          %v3632 = vpack.c.b16 %v3350, %v3348
          %v3633 = vpack.c.b16 %v3353, %v3351
          %v3634 = vpack.c.b16 %v3354, %v3352
          %v3635 = vpack.c.b16 %v3357, %v3355
          %v3636 = vpack.c.b16 %v3358, %v3356
          %v3637 = vpack.c.b16 %v3361, %v3359
          %v3638 = vpack.c.b16 %v3362, %v3360
          %v3639 = vpack.c.b16 %v3365, %v3363
          %v3640 = vpack.c.b16 %v3366, %v3364
          %v3641 = vpack.c.b16 %v3369, %v3367
          %v3642 = vpack.c.b16 %v3370, %v3368
          %v3643 = vpack.c.b16 %v3373, %v3371
          %v3644 = vpack.c.b16 %v3374, %v3372
          %v3645 = vpack.c.b16 %v3377, %v3375
          %v3646 = vpack.c.b16 %v3378, %v3376
          %v3647 = vpack.c.b16 %v3381, %v3379
          %v3648 = vpack.c.b16 %v3382, %v3380
          %v3649 = vpack.c.b16 %v3385, %v3383
          %v3650 = vpack.c.b16 %v3386, %v3384
          %v3651 = vpack.c.b16 %v3389, %v3387
          %v3652 = vpack.c.b16 %v3390, %v3388
          %v3653 = vpack.c.b16 %v3393, %v3391
          %v3654 = vpack.c.b16 %v3394, %v3392
          %v3655 = vpack.c.b16 %v3397, %v3395
          %v3656 = vpack.c.b16 %v3398, %v3396
          %v3657 = vpack.c.b16 %v3401, %v3399
          %v3658 = vpack.c.b16 %v3402, %v3400
          %v3659 = vpack.c.b16 %v3405, %v3403
          %v3660 = vpack.c.b16 %v3406, %v3404
          %v3661 = vpack.c.b16 %v3409, %v3407
          %v3662 = vpack.c.b16 %v3410, %v3408
          %v3663 = vpack.c.b16 %v3413, %v3411
          %v3664 = vpack.c.b16 %v3414, %v3412
          %v3665 = vpack.c.b16 %v3417, %v3415
          %v3666 = vpack.c.b16 %v3418, %v3416
          %v3667 = vpack.c.b16 %v3421, %v3419
          %v3668 = vpack.c.b16 %v3422, %v3420
          %v3669 = vpack.c.b16 %v3425, %v3423
          %v3670 = vpack.c.b16 %v3426, %v3424
          %v3671 = vpack.c.b16 %v3429, %v3427
          %v3672 = vpack.c.b16 %v3430, %v3428
          %v3673 = vpack.c.b16 %v3433, %v3431
          %v3674 = vpack.c.b16 %v3434, %v3432
          %v3675 = vpack.c.b16 %v3437, %v3435
          %v3676 = vpack.c.b16 %v3438, %v3436
          %v3677 = vpack.c.b16 %v3441, %v3439
          %v3678 = vpack.c.b16 %v3442, %v3440
          %v3679 = vpack.c.b16 %v3445, %v3443
          %v3680 = vpack.c.b16 %v3446, %v3444
          %v3681 = vpack.c.b16 %v3449, %v3447
          %v3682 = vpack.c.b16 %v3450, %v3448
          %v3683 = vpack.c.b16 %v3453, %v3451
          %v3684 = vpack.c.b16 %v3454, %v3452
          %v3685 = vpack.c.b16 %v3457, %v3455
          %v3686 = vpack.c.b16 %v3458, %v3456
          %v3687 = vpack.c.b16 %v3461, %v3459
          %v3688 = vpack.c.b16 %v3462, %v3460
          %v3689 = vpack.c.b16 %v3465, %v3463
          %v3690 = vpack.c.b16 %v3466, %v3464
          %v3691 = vpack.c.b16 %v3469, %v3467
          %v3692 = vpack.c.b16 %v3470, %v3468
          %v3693 = vpack.c.b16 %v3473, %v3471
          %v3694 = vpack.c.b16 %v3474, %v3472
          %v3695 = vpack.c.b16 %v3477, %v3475
          %v3696 = vpack.c.b16 %v3478, %v3476
          %v3697 = vpack.c.b16 %v3481, %v3479
          %v3698 = vpack.c.b16 %v3482, %v3480
          %v3699 = vpack.c.b16 %v3485, %v3483
          %v3700 = vpack.c.b16 %v3486, %v3484
          %v3701 = vpack.c.b16 %v3489, %v3487
          %v3702 = vpack.c.b16 %v3490, %v3488
          %v3703 = vpack.c.b16 %v3493, %v3491
          %v3704 = vpack.c.b16 %v3494, %v3492
          %v3705 = vpack.c.b16 %v3497, %v3495
          %v3706 = vpack.c.b16 %v3498, %v3496
          %v3707 = vpack.c.b16 %v3501, %v3499
          %v3708 = vpack.c.b16 %v3502, %v3500
          %v3709 = vpack.c.b16 %v3505, %v3503
          %v3710 = vpack.c.b16 %v3506, %v3504
          %v3711 = vpack.c.b16 %v3509, %v3507
          %v3712 = vpack.c.b16 %v3510, %v3508
          %v3713 = vpack.c.b16 %v3513, %v3511
          %v3714 = vpack.c.b16 %v3514, %v3512
          %v3715 = vpack.c.b16 %v3517, %v3515
          %v3716 = vpack.c.b16 %v3518, %v3516
          %v3717 = vpack.c.b16 %v3521, %v3519
          %v3718 = vpack.c.b16 %v3522, %v3520
          %v3719 = vpack.c.b16 %v3525, %v3523
          %v3720 = vpack.c.b16 %v3526, %v3524
          %v3721 = vpack.c.b16 %v3529, %v3527
          %v3722 = vpack.c.b16 %v3530, %v3528
          %3915 = vmatprep.subr.bf16.mxu0 %v3532
          %3916 = vmatpush1.bf16.msra.mxu0 %v3531
          %3917 = vmatprep.subr.bf16.mxu0 %v3534
          %3918 = vmatpush1.bf16.msra.mxu0 %v3533
          %3919 = vmatprep.subr.bf16.mxu0 %v3536
          %3920 = vmatpush1.bf16.msra.mxu0 %v3535
          %3921 = vmatprep.subr.bf16.mxu0 %v3538
          %3922 = vmatpush1.bf16.msra.mxu0 %v3537
          %3923 = vmatprep.subr.bf16.mxu0 %v3540
          %3924 = vmatpush1.bf16.msra.mxu0 %v3539
          %3925 = vmatprep.subr.bf16.mxu0 %v3542
          %3926 = vmatpush1.bf16.msra.mxu0 %v3541
          %3927 = vmatprep.subr.bf16.mxu0 %v3544
          %3928 = vmatpush1.bf16.msra.mxu0 %v3543
          %3929 = vmatprep.subr.bf16.mxu0 %v3546
          %3930 = vmatpush1.bf16.msra.mxu0 %v3545
          %3931 = vmatprep.subr.bf16.mxu0 %v3548
          %3932 = vmatpush1.bf16.msra.mxu0 %v3547
          %3933 = vmatprep.subr.bf16.mxu0 %v3550
          %3934 = vmatpush1.bf16.msra.mxu0 %v3549
          %3935 = vmatprep.subr.bf16.mxu0 %v3552
          %3936 = vmatpush1.bf16.msra.mxu0 %v3551
          %3937 = vmatprep.subr.bf16.mxu0 %v3554
          %3938 = vmatpush1.bf16.msra.mxu0 %v3553
          %3939 = vmatprep.subr.bf16.mxu0 %v3556
          %3940 = vmatpush1.bf16.msra.mxu0 %v3555
          %3941 = vmatprep.subr.bf16.mxu0 %v3558
          %3942 = vmatpush1.bf16.msra.mxu0 %v3557
          %3943 = vmatprep.subr.bf16.mxu0 %v3560
          %3944 = vmatpush1.bf16.msra.mxu0 %v3559
          %3945 = vmatprep.subr.bf16.mxu0 %v3562
          %3946 = vmatpush1.bf16.msra.mxu0 %v3561
          %3947 = vmatprep.mubr.bf16.mxu0 %v2752
          %3948 = vmatmul.mubr.bf16.gmra.mrb[0].mxu0 %v2751
          %v3949 = vpop.f32.mrb[0].mxu0
          %v3950 = vadd.f32 0.0, %v3949
          %v3951 = vpop.f32.mrb[0].mxu0
          %v3952 = vadd.f32 0.0, %v3951
          %v3953 = vpop.f32.mrb[0].mxu0
          %v3954 = vpop.f32.mrb[0].mxu0
          %3955 = vdwg.mxu0
          %3956 = vmatprep.subr.bf16.mxu0 %v3564
          %3957 = vmatpush1.bf16.msra.mxu0 %v3563
          %3958 = vmatprep.subr.bf16.mxu0 %v3566
          %3959 = vmatpush1.bf16.msra.mxu0 %v3565
          %3960 = vmatprep.subr.bf16.mxu0 %v3568
          %3961 = vmatpush1.bf16.msra.mxu0 %v3567
          %3962 = vmatprep.subr.bf16.mxu0 %v3570
          %3963 = vmatpush1.bf16.msra.mxu0 %v3569
          %3964 = vmatprep.subr.bf16.mxu0 %v3572
          %3965 = vmatpush1.bf16.msra.mxu0 %v3571
          %3966 = vmatprep.subr.bf16.mxu0 %v3574
          %3967 = vmatpush1.bf16.msra.mxu0 %v3573
          %3968 = vmatprep.subr.bf16.mxu0 %v3576
          %3969 = vmatpush1.bf16.msra.mxu0 %v3575
          %3970 = vmatprep.subr.bf16.mxu0 %v3578
          %3971 = vmatpush1.bf16.msra.mxu0 %v3577
          %3972 = vmatprep.subr.bf16.mxu0 %v3580
          %3973 = vmatpush1.bf16.msra.mxu0 %v3579
          %3974 = vmatprep.subr.bf16.mxu0 %v3582
          %3975 = vmatpush1.bf16.msra.mxu0 %v3581
          %3976 = vmatprep.subr.bf16.mxu0 %v3584
          %3977 = vmatpush1.bf16.msra.mxu0 %v3583
          %3978 = vmatprep.subr.bf16.mxu0 %v3586
          %3979 = vmatpush1.bf16.msra.mxu0 %v3585
          %3980 = vmatprep.subr.bf16.mxu0 %v3588
          %3981 = vmatpush1.bf16.msra.mxu0 %v3587
          %3982 = vmatprep.subr.bf16.mxu0 %v3590
          %3983 = vmatpush1.bf16.msra.mxu0 %v3589
          %3984 = vmatprep.subr.bf16.mxu0 %v3592
          %3985 = vmatpush1.bf16.msra.mxu0 %v3591
          %3986 = vmatprep.subr.bf16.mxu0 %v3594
          %3987 = vmatpush1.bf16.msra.mxu0 %v3593
          %3988 = vmatprep.mubr.bf16.mxu0 %v2754
          %3989 = vmatmul.mubr.bf16.gmra.mrb[0].mxu0 %v2753
          %v3990 = vpop.f32.mrb[0].mxu0
          %v3991 = vadd.f32 %v3950, %v3990
          %v3992 = vpop.f32.mrb[0].mxu0
          %v3993 = vadd.f32 %v3952, %v3992
          %v3994 = vpop.f32.mrb[0].mxu0
          %v3995 = vpop.f32.mrb[0].mxu0
          %3996 = vdwg.mxu0
          %3997 = vmatprep.subr.bf16.mxu0 %v3596
          %3998 = vmatpush1.bf16.msra.mxu0 %v3595
          %3999 = vmatprep.subr.bf16.mxu0 %v3598
          %4000 = vmatpush1.bf16.msra.mxu0 %v3597
          %4001 = vmatprep.subr.bf16.mxu0 %v3600
          %4002 = vmatpush1.bf16.msra.mxu0 %v3599
          %4003 = vmatprep.subr.bf16.mxu0 %v3602
          %4004 = vmatpush1.bf16.msra.mxu0 %v3601
          %4005 = vmatprep.subr.bf16.mxu0 %v3604
          %4006 = vmatpush1.bf16.msra.mxu0 %v3603
          %4007 = vmatprep.subr.bf16.mxu0 %v3606
          %4008 = vmatpush1.bf16.msra.mxu0 %v3605
          %4009 = vmatprep.subr.bf16.mxu0 %v3608
          %4010 = vmatpush1.bf16.msra.mxu0 %v3607
          %4011 = vmatprep.subr.bf16.mxu0 %v3610
          %4012 = vmatpush1.bf16.msra.mxu0 %v3609
          %4013 = vmatprep.subr.bf16.mxu0 %v3612
          %4014 = vmatpush1.bf16.msra.mxu0 %v3611
          %4015 = vmatprep.subr.bf16.mxu0 %v3614
          %4016 = vmatpush1.bf16.msra.mxu0 %v3613
          %4017 = vmatprep.subr.bf16.mxu0 %v3616
          %4018 = vmatpush1.bf16.msra.mxu0 %v3615
          %4019 = vmatprep.subr.bf16.mxu0 %v3618
          %4020 = vmatpush1.bf16.msra.mxu0 %v3617
          %4021 = vmatprep.subr.bf16.mxu0 %v3620
          %4022 = vmatpush1.bf16.msra.mxu0 %v3619
          %4023 = vmatprep.subr.bf16.mxu0 %v3622
          %4024 = vmatpush1.bf16.msra.mxu0 %v3621
          %4025 = vmatprep.subr.bf16.mxu0 %v3624
          %4026 = vmatpush1.bf16.msra.mxu0 %v3623
          %4027 = vmatprep.subr.bf16.mxu0 %v3626
          %4028 = vmatpush1.bf16.msra.mxu0 %v3625
          %4029 = vmatprep.mubr.bf16.mxu0 %v2756
          %4030 = vmatmul.mubr.bf16.gmra.mrb[0].mxu0 %v2755
          %v4031 = vpop.f32.mrb[0].mxu0
          %v4032 = vadd.f32 %v3991, %v4031
          %v4033 = vpop.f32.mrb[0].mxu0
          %v4034 = vadd.f32 %v3993, %v4033
          %v4035 = vpop.f32.mrb[0].mxu0
          %v4036 = vpop.f32.mrb[0].mxu0
          %4037 = vdwg.mxu0
          %4038 = vmatprep.subr.bf16.mxu0 %v3628
          %4039 = vmatpush1.bf16.msra.mxu0 %v3627
          %4040 = vmatprep.subr.bf16.mxu0 %v3630
          %4041 = vmatpush1.bf16.msra.mxu0 %v3629
          %4042 = vmatprep.subr.bf16.mxu0 %v3632
          %4043 = vmatpush1.bf16.msra.mxu0 %v3631
          %4044 = vmatprep.subr.bf16.mxu0 %v3634
          %4045 = vmatpush1.bf16.msra.mxu0 %v3633
          %4046 = vmatprep.subr.bf16.mxu0 %v3636
          %4047 = vmatpush1.bf16.msra.mxu0 %v3635
          %4048 = vmatprep.subr.bf16.mxu0 %v3638
          %4049 = vmatpush1.bf16.msra.mxu0 %v3637
          %4050 = vmatprep.subr.bf16.mxu0 %v3640
          %4051 = vmatpush1.bf16.msra.mxu0 %v3639
          %4052 = vmatprep.subr.bf16.mxu0 %v3642
          %4053 = vmatpush1.bf16.msra.mxu0 %v3641
          %4054 = vmatprep.subr.bf16.mxu0 %v3644
          %4055 = vmatpush1.bf16.msra.mxu0 %v3643
          %4056 = vmatprep.subr.bf16.mxu0 %v3646
          %4057 = vmatpush1.bf16.msra.mxu0 %v3645
          %4058 = vmatprep.subr.bf16.mxu0 %v3648
          %4059 = vmatpush1.bf16.msra.mxu0 %v3647
          %4060 = vmatprep.subr.bf16.mxu0 %v3650
          %4061 = vmatpush1.bf16.msra.mxu0 %v3649
          %4062 = vmatprep.subr.bf16.mxu0 %v3652
          %4063 = vmatpush1.bf16.msra.mxu0 %v3651
          %4064 = vmatprep.subr.bf16.mxu0 %v3654
          %4065 = vmatpush1.bf16.msra.mxu0 %v3653
          %4066 = vmatprep.subr.bf16.mxu0 %v3656
          %4067 = vmatpush1.bf16.msra.mxu0 %v3655
          %4068 = vmatprep.subr.bf16.mxu0 %v3658
          %4069 = vmatpush1.bf16.msra.mxu0 %v3657
          %4070 = vmatprep.mubr.bf16.mxu0 %v2758
          %4071 = vmatmul.mubr.bf16.gmra.mrb[0].mxu0 %v2757
          %v4072 = vpop.f32.mrb[0].mxu0
          %v4073 = vadd.f32 %v4032, %v4072
          %v4074 = vpop.f32.mrb[0].mxu0
          %v4075 = vadd.f32 %v4034, %v4074
          %v4076 = vpop.f32.mrb[0].mxu0
          %v4077 = vpop.f32.mrb[0].mxu0
          %4078 = vdwg.mxu0
          %4079 = vmatprep.subr.bf16.mxu0 %v3660
          %4080 = vmatpush1.bf16.msra.mxu0 %v3659
          %4081 = vmatprep.subr.bf16.mxu0 %v3662
          %4082 = vmatpush1.bf16.msra.mxu0 %v3661
          %4083 = vmatprep.subr.bf16.mxu0 %v3664
          %4084 = vmatpush1.bf16.msra.mxu0 %v3663
          %4085 = vmatprep.subr.bf16.mxu0 %v3666
          %4086 = vmatpush1.bf16.msra.mxu0 %v3665
          %4087 = vmatprep.subr.bf16.mxu0 %v3668
          %4088 = vmatpush1.bf16.msra.mxu0 %v3667
          %4089 = vmatprep.subr.bf16.mxu0 %v3670
          %4090 = vmatpush1.bf16.msra.mxu0 %v3669
          %4091 = vmatprep.subr.bf16.mxu0 %v3672
          %4092 = vmatpush1.bf16.msra.mxu0 %v3671
          %4093 = vmatprep.subr.bf16.mxu0 %v3674
          %4094 = vmatpush1.bf16.msra.mxu0 %v3673
          %4095 = vmatprep.subr.bf16.mxu0 %v3676
          %4096 = vmatpush1.bf16.msra.mxu0 %v3675
          %4097 = vmatprep.subr.bf16.mxu0 %v3678
          %4098 = vmatpush1.bf16.msra.mxu0 %v3677
          %4099 = vmatprep.subr.bf16.mxu0 %v3680
          %4100 = vmatpush1.bf16.msra.mxu0 %v3679
          %4101 = vmatprep.subr.bf16.mxu0 %v3682
          %4102 = vmatpush1.bf16.msra.mxu0 %v3681
          %4103 = vmatprep.subr.bf16.mxu0 %v3684
          %4104 = vmatpush1.bf16.msra.mxu0 %v3683
          %4105 = vmatprep.subr.bf16.mxu0 %v3686
          %4106 = vmatpush1.bf16.msra.mxu0 %v3685
          %4107 = vmatprep.subr.bf16.mxu0 %v3688
          %4108 = vmatpush1.bf16.msra.mxu0 %v3687
          %4109 = vmatprep.subr.bf16.mxu0 %v3690
          %4110 = vmatpush1.bf16.msra.mxu0 %v3689
          %4111 = vmatprep.mubr.bf16.mxu0 %v2760
          %4112 = vmatmul.mubr.bf16.gmra.mrb[0].mxu0 %v2759
          %v4113 = vpop.f32.mrb[0].mxu0
          %v4114 = vadd.f32 %v4073, %v4113
          %v4115 = vpop.f32.mrb[0].mxu0
          %v4116 = vadd.f32 %v4075, %v4115
          %v4117 = vpop.f32.mrb[0].mxu0
          %v4118 = vpop.f32.mrb[0].mxu0
          %4119 = vdwg.mxu0
          %4120 = vmatprep.subr.bf16.mxu0 %v3692
          %4121 = vmatpush1.bf16.msra.mxu0 %v3691
          %4122 = vmatprep.subr.bf16.mxu0 %v3694
          %4123 = vmatpush1.bf16.msra.mxu0 %v3693
          %4124 = vmatprep.subr.bf16.mxu0 %v3696
          %4125 = vmatpush1.bf16.msra.mxu0 %v3695
          %4126 = vmatprep.subr.bf16.mxu0 %v3698
          %4127 = vmatpush1.bf16.msra.mxu0 %v3697
          %4128 = vmatprep.subr.bf16.mxu0 %v3700
          %4129 = vmatpush1.bf16.msra.mxu0 %v3699
          %4130 = vmatprep.subr.bf16.mxu0 %v3702
          %4131 = vmatpush1.bf16.msra.mxu0 %v3701
          %4132 = vmatprep.subr.bf16.mxu0 %v3704
          %4133 = vmatpush1.bf16.msra.mxu0 %v3703
          %4134 = vmatprep.subr.bf16.mxu0 %v3706
          %4135 = vmatpush1.bf16.msra.mxu0 %v3705
          %4136 = vmatprep.subr.bf16.mxu0 %v3708
          %4137 = vmatpush1.bf16.msra.mxu0 %v3707
          %4138 = vmatprep.subr.bf16.mxu0 %v3710
          %4139 = vmatpush1.bf16.msra.mxu0 %v3709
          %4140 = vmatprep.subr.bf16.mxu0 %v3712
          %4141 = vmatpush1.bf16.msra.mxu0 %v3711
          %4142 = vmatprep.subr.bf16.mxu0 %v3714
          %4143 = vmatpush1.bf16.msra.mxu0 %v3713
          %4144 = vmatprep.subr.bf16.mxu0 %v3716
          %4145 = vmatpush1.bf16.msra.mxu0 %v3715
          %4146 = vmatprep.subr.bf16.mxu0 %v3718
          %4147 = vmatpush1.bf16.msra.mxu0 %v3717
          %4148 = vmatprep.subr.bf16.mxu0 %v3720
          %4149 = vmatpush1.bf16.msra.mxu0 %v3719
          %4150 = vmatprep.subr.bf16.mxu0 %v3722
          %4151 = vmatpush1.bf16.msra.mxu0 %v3721
          %4152 = vmatprep.mubr.bf16.mxu0 %v2762
          %4153 = vmatmul.mubr.bf16.gmra.mrb[0].mxu0 %v2761
          %v4154 = vpop.f32.mrb[0].mxu0
          %v4155 = vadd.f32 %v4114, %v4154
          %v4156 = vpop.f32.mrb[0].mxu0
          %v4157 = vadd.f32 %v4116, %v4156
          %v4158 = vpop.f32.mrb[0].mxu0
          %v4159 = vpop.f32.mrb[0].mxu0
          %4160 = vdwg.mxu0
          %v4161 = vld [vmem:[%s4] sm:$0x3]
          %v4163 = vlaneseq
          %v4164 = vshrl.u32 %v4163, 7
          %v4165 = vsub.s32 0, %v4164
          %v4166 = vrot.slane %v4161, %v4165
          %v4167 = vlaneseq
          %v4168 = vshrl.u32 %v4167, 7
          %v4169 = vsub.s32 1, %v4168
          %v4170 = vrot.slane %v4161, %v4169
          %v4173 = vmul.f32 %v4155, %v4166
          %v4174 = vmul.f32 %v4157, %v4170
          %v4175 = vld [vmem:[%s5] sm:$0x3]
          %v4177 = vlaneseq
          %v4178 = vshrl.u32 %v4177, 7
          %v4179 = vsub.s32 0, %v4178
          %v4180 = vrot.slane %v4175, %v4179
          %v4181 = vlaneseq
          %v4182 = vshrl.u32 %v4181, 7
          %v4183 = vsub.s32 1, %v4182
          %v4184 = vrot.slane %v4175, %v4183
          %v4187 = vadd.f32 %v4173, %v4180
          %v4188 = vadd.f32 %v4174, %v4184
          %v4189 = vmax.f32 %v4187, 0.0
          %v4190 = vmax.f32 %v4188, 0.0
          %v4191 = vpack.c.bf16 %v4189, %v4189
          %v4192 = vpack.c.bf16 %v4190, %v4190
          %v4193 = vld [vmem:[%s6] sm:$0xf]
          %v4194 = vld [vmem:[%s6 + $0x4] sm:$0xf]
          %v4195 = vld [vmem:[%s6 + $0x8] sm:$0xf]
          %v4196 = vld [vmem:[%s6 + $0xc] sm:$0xf]
          %v4197 = vld [vmem:[%s6 + $0x10] sm:$0xf]
          %v4198 = vld [vmem:[%s6 + $0x14] sm:$0xf]
          %v4199 = vld [vmem:[%s6 + $0x18] sm:$0xf]
          %v4200 = vld [vmem:[%s6 + $0x1c] sm:$0xf]
          %v4201 = vld [vmem:[%s6 + $0x20] sm:$0xf]
          %v4202 = vld [vmem:[%s6 + $0x24] sm:$0xf]
          %v4203 = vld [vmem:[%s6 + $0x28] sm:$0xf]
          %v4204 = vld [vmem:[%s6 + $0x2c] sm:$0xf]
          %v4205 = vld [vmem:[%s6 + $0x30] sm:$0xf]
          %v4206 = vld [vmem:[%s6 + $0x34] sm:$0xf]
          %v4207 = vld [vmem:[%s6 + $0x38] sm:$0xf]
          %v4208 = vld [vmem:[%s6 + $0x3c] sm:$0xf]
          %v4209 = vld [vmem:[%s6 + $0x40] sm:$0xf]
          %v4210 = vld [vmem:[%s6 + $0x44] sm:$0xf]
          %v4211 = vld [vmem:[%s6 + $0x48] sm:$0xf]
          %v4212 = vld [vmem:[%s6 + $0x4c] sm:$0xf]
          %v4213 = vld [vmem:[%s6 + $0x50] sm:$0xf]
          %v4214 = vld [vmem:[%s6 + $0x54] sm:$0xf]
          %v4215 = vld [vmem:[%s6 + $0x58] sm:$0xf]
          %v4216 = vld [vmem:[%s6 + $0x5c] sm:$0xf]
          %v4217 = vld [vmem:[%s6 + $0x60] sm:$0xf]
          %v4218 = vld [vmem:[%s6 + $0x64] sm:$0xf]
          %v4219 = vld [vmem:[%s6 + $0x68] sm:$0xf]
          %v4220 = vld [vmem:[%s6 + $0x6c] sm:$0xf]
          %v4221 = vld [vmem:[%s6 + $0x70] sm:$0xf]
          %v4222 = vld [vmem:[%s6 + $0x74] sm:$0xf]
          %v4223 = vld [vmem:[%s6 + $0x78] sm:$0xf]
          %v4224 = vld [vmem:[%s6 + $0x7c] sm:$0xf]
          %v4257 = vunpack.c.l.b16 %v4193
          %v4258 = vunpack.c.l.b16 %v4194
          %v4259 = vunpack.c.l.b16 %v4195
          %v4260 = vunpack.c.l.b16 %v4196
          %v4261 = vunpack.c.l.b16 %v4197
          %v4262 = vunpack.c.l.b16 %v4198
          %v4263 = vunpack.c.l.b16 %v4199
          %v4264 = vunpack.c.l.b16 %v4200
          %v4265 = vunpack.c.l.b16 %v4201
          %v4266 = vunpack.c.l.b16 %v4202
          %v4267 = vunpack.c.l.b16 %v4203
          %v4268 = vunpack.c.l.b16 %v4204
          %v4269 = vunpack.c.l.b16 %v4205
          %v4270 = vunpack.c.l.b16 %v4206
          %v4271 = vunpack.c.l.b16 %v4207
          %v4272 = vunpack.c.l.b16 %v4208
          %v4273 = vunpack.c.l.b16 %v4209
          %v4274 = vunpack.c.l.b16 %v4210
          %v4275 = vunpack.c.l.b16 %v4211
          %v4276 = vunpack.c.l.b16 %v4212
          %v4277 = vunpack.c.l.b16 %v4213
          %v4278 = vunpack.c.l.b16 %v4214
          %v4279 = vunpack.c.l.b16 %v4215
          %v4280 = vunpack.c.l.b16 %v4216
          %v4281 = vunpack.c.l.b16 %v4217
          %v4282 = vunpack.c.l.b16 %v4218
          %v4283 = vunpack.c.l.b16 %v4219
          %v4284 = vunpack.c.l.b16 %v4220
          %v4285 = vunpack.c.l.b16 %v4221
          %v4286 = vunpack.c.l.b16 %v4222
          %v4287 = vunpack.c.l.b16 %v4223
          %v4288 = vunpack.c.l.b16 %v4224
          %v4289 = vpack.c.b16 %v4258, %v4257
          %v4290 = vpack.c.b16 %v4260, %v4259
          %v4291 = vpack.c.b16 %v4262, %v4261
          %v4292 = vpack.c.b16 %v4264, %v4263
          %v4293 = vpack.c.b16 %v4266, %v4265
          %v4294 = vpack.c.b16 %v4268, %v4267
          %v4295 = vpack.c.b16 %v4270, %v4269
          %v4296 = vpack.c.b16 %v4272, %v4271
          %v4297 = vpack.c.b16 %v4274, %v4273
          %v4298 = vpack.c.b16 %v4276, %v4275
          %v4299 = vpack.c.b16 %v4278, %v4277
          %v4300 = vpack.c.b16 %v4280, %v4279
          %v4301 = vpack.c.b16 %v4282, %v4281
          %v4302 = vpack.c.b16 %v4284, %v4283
          %v4303 = vpack.c.b16 %v4286, %v4285
          %v4304 = vpack.c.b16 %v4288, %v4287
          %4321 = vmatprep.subr.bf16.mxu0 0
          %4322 = vmatpush1.bf16.msra.mxu0 %v4289
          %4323 = vmatprep.subr.bf16.mxu0 0
          %4324 = vmatpush1.bf16.msra.mxu0 %v4290
          %4325 = vmatprep.subr.bf16.mxu0 0
          %4326 = vmatpush1.bf16.msra.mxu0 %v4291
          %4327 = vmatprep.subr.bf16.mxu0 0
          %4328 = vmatpush1.bf16.msra.mxu0 %v4292
          %4329 = vmatprep.subr.bf16.mxu0 0
          %4330 = vmatpush1.bf16.msra.mxu0 %v4293
          %4331 = vmatprep.subr.bf16.mxu0 0
          %4332 = vmatpush1.bf16.msra.mxu0 %v4294
          %4333 = vmatprep.subr.bf16.mxu0 0
          %4334 = vmatpush1.bf16.msra.mxu0 %v4295
          %4335 = vmatprep.subr.bf16.mxu0 0
          %4336 = vmatpush1.bf16.msra.mxu0 %v4296
          %4337 = vmatprep.subr.bf16.mxu0 0
          %4338 = vmatpush1.bf16.msra.mxu0 %v4297
          %4339 = vmatprep.subr.bf16.mxu0 0
          %4340 = vmatpush1.bf16.msra.mxu0 %v4298
          %4341 = vmatprep.subr.bf16.mxu0 0
          %4342 = vmatpush1.bf16.msra.mxu0 %v4299
          %4343 = vmatprep.subr.bf16.mxu0 0
          %4344 = vmatpush1.bf16.msra.mxu0 %v4300
          %4345 = vmatprep.subr.bf16.mxu0 0
          %4346 = vmatpush1.bf16.msra.mxu0 %v4301
          %4347 = vmatprep.subr.bf16.mxu0 0
          %4348 = vmatpush1.bf16.msra.mxu0 %v4302
          %4349 = vmatprep.subr.bf16.mxu0 0
          %4350 = vmatpush1.bf16.msra.mxu0 %v4303
          %4351 = vmatprep.subr.bf16.mxu0 0
          %4352 = vmatpush1.bf16.msra.mxu0 %v4304
          %4353 = vmatprep.mubr.bf16.mxu0 %v4192
          %4354 = vmatmul.mubr.bf16.gmra.mrb[0].mxu0 %v4191
          %v4355 = vpop.f32.mrb[0].mxu0
          %v4356 = vadd.f32 0.0, %v4355
          %v4357 = vpop.f32.mrb[0].mxu0
          %v4358 = vpop.f32.mrb[0].mxu0
          %v4359 = vpop.f32.mrb[0].mxu0
          %4360 = vdwg.mxu0
          %v4361 = vld [vmem:[%s7] sm:$0x1]
          %v4362 = vmul.f32 %v4356, %v4361
          %v4363 = vld [vmem:[%s8] sm:$0x1]
          %v4364 = vadd.f32 %v4362, %v4363
          %v4365 = vmax.f32 %v4364, 0.0
          %v4366 = vpack.c.bf16 %v4365, %v4365
          %v4367 = vld [vmem:[#allocation8] sm:$0xf]
          %v4368 = vld [vmem:[#allocation8 + $0x4] sm:$0xf]
          %v4369 = vld [vmem:[#allocation8 + $0x8] sm:$0xf]
          %v4370 = vld [vmem:[#allocation8 + $0xc] sm:$0xf]
          %v4371 = vld [vmem:[#allocation8 + $0x10] sm:$0xf]
          %v4372 = vld [vmem:[#allocation8 + $0x14] sm:$0xf]
          %v4373 = vld [vmem:[#allocation8 + $0x18] sm:$0xf]
          %v4374 = vld [vmem:[#allocation8 + $0x1c] sm:$0xf]
          %v4375 = vld [vmem:[#allocation8 + $0x20] sm:$0xf]
          %v4376 = vld [vmem:[#allocation8 + $0x24] sm:$0xf]
          %v4377 = vld [vmem:[#allocation8 + $0x28] sm:$0xf]
          %v4378 = vld [vmem:[#allocation8 + $0x2c] sm:$0xf]
          %v4379 = vld [vmem:[#allocation8 + $0x30] sm:$0xf]
          %v4380 = vld [vmem:[#allocation8 + $0x34] sm:$0xf]
          %v4381 = vld [vmem:[#allocation8 + $0x38] sm:$0xf]
          %v4382 = vld [vmem:[#allocation8 + $0x3c] sm:$0xf]
          %v4399 = vunpack.c.l.b16 %v4367
          %v4400 = vunpack.c.l.b16 %v4368
          %v4401 = vunpack.c.l.b16 %v4369
          %v4402 = vunpack.c.l.b16 %v4370
          %v4403 = vunpack.c.l.b16 %v4371
          %v4404 = vunpack.c.l.b16 %v4372
          %v4405 = vunpack.c.l.b16 %v4373
          %v4406 = vunpack.c.l.b16 %v4374
          %v4407 = vunpack.c.l.b16 %v4375
          %v4408 = vunpack.c.l.b16 %v4376
          %v4409 = vunpack.c.l.b16 %v4377
          %v4410 = vunpack.c.l.b16 %v4378
          %v4411 = vunpack.c.l.b16 %v4379
          %v4412 = vunpack.c.l.b16 %v4380
          %v4413 = vunpack.c.l.b16 %v4381
          %v4414 = vunpack.c.l.b16 %v4382
          %v4415 = vpack.c.b16 %v4400, %v4399
          %v4416 = vpack.c.b16 %v4402, %v4401
          %v4417 = vpack.c.b16 %v4404, %v4403
          %v4418 = vpack.c.b16 %v4406, %v4405
          %v4419 = vpack.c.b16 %v4408, %v4407
          %v4420 = vpack.c.b16 %v4410, %v4409
          %v4421 = vpack.c.b16 %v4412, %v4411
          %v4422 = vpack.c.b16 %v4414, %v4413
          %4431 = vmatprep.subr.bf16.mxu0 0
          %4432 = vmatpush1.bf16.msra.mxu0 %v4415
          %4433 = vmatprep.subr.bf16.mxu0 0
          %4434 = vmatpush1.bf16.msra.mxu0 %v4416
          %4435 = vmatprep.subr.bf16.mxu0 0
          %4436 = vmatpush1.bf16.msra.mxu0 %v4417
          %4437 = vmatprep.subr.bf16.mxu0 0
          %4438 = vmatpush1.bf16.msra.mxu0 %v4418
          %4439 = vmatprep.subr.bf16.mxu0 0
          %4440 = vmatpush1.bf16.msra.mxu0 %v4419
          %4441 = vmatprep.subr.bf16.mxu0 0
          %4442 = vmatpush1.bf16.msra.mxu0 %v4420
          %4443 = vmatprep.subr.bf16.mxu0 0
          %4444 = vmatpush1.bf16.msra.mxu0 %v4421
          %4445 = vmatprep.subr.bf16.mxu0 0
          %4446 = vmatpush1.bf16.msra.mxu0 %v4422
          %4447 = vmatprep.subr.bf16.mxu0 0
          %4448 = vmatpush1.bf16.msra.mxu0 0
          %4449 = vmatprep.subr.bf16.mxu0 0
          %4450 = vmatpush1.bf16.msra.mxu0 0
          %4451 = vmatprep.subr.bf16.mxu0 0
          %4452 = vmatpush1.bf16.msra.mxu0 0
          %4453 = vmatprep.subr.bf16.mxu0 0
          %4454 = vmatpush1.bf16.msra.mxu0 0
          %4455 = vmatprep.subr.bf16.mxu0 0
          %4456 = vmatpush1.bf16.msra.mxu0 0
          %4457 = vmatprep.subr.bf16.mxu0 0
          %4458 = vmatpush1.bf16.msra.mxu0 0
          %4459 = vmatprep.subr.bf16.mxu0 0
          %4460 = vmatpush1.bf16.msra.mxu0 0
          %4461 = vmatprep.subr.bf16.mxu0 0
          %4462 = vmatpush1.bf16.msra.mxu0 0
          %4463 = vmatprep.mubr.bf16.mxu0 0
          %4464 = vmatmul.mubr.bf16.gmra.mrb[0].mxu0 %v4366
          %v4465 = vpop.f32.mrb[0].mxu0
          %v4466 = vadd.f32 0.0, %v4465
          %v4467 = vpop.f32.mrb[0].mxu0
          %v4468 = vpop.f32.mrb[0].mxu0
          %v4469 = vpop.f32.mrb[0].mxu0
          %4470 = vdwg.mxu0
          %4471 = vst [vmem:[%s416] sm:$0x1] %v4466
        $region80: #{tpu_custom_call.1} parent=59 // pred_fallthru
          _
        %s4472 = sand.u32 %s263, 1
        %s4473 = scalar_lea.sflag [#allocation5], %s4472
        %s4474 = sand.u32 %s263, 1
        %s4475 = scalar_lea.vmem [#allocation9], %s4474
        // Predicated region
        $region81: #{tpu_custom_call.1} parent=59 // pred_check
          %p4476 = pneg %p273
        $region82: #{tpu_custom_call.1} parent=59 // pred_check_branch
          %4478 = sbr.rel (%p4476) target = $region84
        $region83: #{tpu_custom_call.1} parent=59 // pred_region
          %s4480 = ssub.s32 16, 16
          %4481 = vsyncadd %s4473, %s4480
          %s4482 = smul.addr %s30, 16
          %s4483 = scalar_lea.hbm %s10, %s4482
          %s4485 = sshll.u32 %s4475, 4
          %s4486 = int_to_ptr.vmem [resolvable:$true] %s4485
          %4488 = dma.vmem_to_hbm [thread:$0]  %s4486, 16, %s4483, %s4473
        $region84: #{tpu_custom_call.1} parent=59 // pred_fallthru
          _
      $region60: #{tpu_custom_call.1} parent=5 // pred_fallthru
        _
      %p4489 = scmp.le.s32.totalorder 2, %s21
      // Predicated region
      $region85: #{tpu_custom_call.1} parent=5 // pred_check
        %p4490 = pneg %p4489
      $region86: #{tpu_custom_call.1} parent=5 // pred_check_branch
        %4492 = sbr.rel (%p4490) target = $region88
      $region87: #{tpu_custom_call.1} parent=5 // pred_region
        %s4493 = ssub.s32 %s21, 2
        // Predicated region
        $region89: #{tpu_custom_call.1} parent=87 // pred_check
          %p4494 = pneg %p279
        $region90: #{tpu_custom_call.1} parent=87 // pred_check_branch
          %4496 = sbr.rel (%p4494) target = $region92
        $region91: #{tpu_custom_call.1} parent=87 // pred_region
          %s4497 = sand.u32 %s264, 1
          %s4498 = scalar_lea.sflag [#allocation5], %s4497
          %s4499 = sand.u32 %s264, 1
          %s4500 = scalar_lea.vmem [#allocation9], %s4499
          %4501 = dma.done %s4498, 16
        $region92: #{tpu_custom_call.1} parent=87 // pred_fallthru
          _
      $region88: #{tpu_custom_call.1} parent=5 // pred_fallthru
        _
    $region6: #{tpu_custom_call.1} parent=1 // loop_footer
      %s25 = sadd.s32 1, %s21
    $region7: #{tpu_custom_call.1} parent=1 // loop_footer_branch
      %20 = sbr.rel target = $region3
    $region8: #{tpu_custom_call.1} parent=1 // loop_exit
      _
    %4502 = vsyncpa [#allocation4], 1
    %s4503 = scalar_lea.sflag [#allocation4], 1
    %4504 = vsyncpa %s4503, 1
    %4505 = vsyncpa [#allocation7], 1
    %4506 = vsyncpa [#allocation5], 1
    %s4507 = scalar_lea.sflag [#allocation5], 1
    %4508 = vsyncpa %s4507, 1

</llo_original>
